<compile_context>
chip_gen: v7x
topology: tpu7x:2x2x1
jax: 0.10.0
libtpu: 0.0.40
codegen_flags: <defaults>
</compile_context>

<pallas_src>
import functools
import math

import jax
import jax.numpy as jnp
from jax import lax
from jax.experimental import pallas as pl
from jax.experimental.pallas import tpu as pltpu


# ------------------------------ kernel helpers -------------------------------

def _multi_head_attention(q, k, v, neg_mask, *, num_heads, d_k, d_v):
    """q: (Bb,Tq,H*d_k) f32 (1/sqrt(d_k) already folded in), k: (Bb,Tk,H*d_k),
    v: (Bb,Tk,H*d_v), neg_mask: (Bb,Tq,Tk) bool (True = mask out).
    Returns merged heads (Bb, Tq, H*d_v) fp32."""
    heads = []
    for h in range(num_heads):                      # static unrolled head loop
        qh = q[:, :, h * d_k:(h + 1) * d_k].astype(jnp.bfloat16)
        kh = k[:, :, h * d_k:(h + 1) * d_k].astype(jnp.bfloat16)
        vh = v[:, :, h * d_v:(h + 1) * d_v].astype(jnp.bfloat16)
        # q @ k^T with batch dim = batch block (no explicit transpose relayout).
        s = jnp.einsum("bqd,bkd->bqk", qh, kh,
                       preferred_element_type=jnp.float32)
        s = jnp.where(neg_mask, -1e9, s)
        s = s - jnp.max(s, axis=-1, keepdims=True)
        p = jnp.exp(s)
        p = p * pl.reciprocal(jnp.sum(p, axis=-1, keepdims=True), approx=True)
        heads.append(jnp.einsum("bqk,bkd->bqd", p.astype(jnp.bfloat16), vh,
                                preferred_element_type=jnp.float32))
    return jnp.concatenate(heads, axis=-1)


def _layer_norm(y, g, b):
    mu = jnp.mean(y, axis=-1, keepdims=True)
    var = jnp.mean((y - mu) ** 2, axis=-1, keepdims=True)
    return (y - mu) * lax.rsqrt(var + 1e-5) * g + b


# -------------------------------- fused kernel -------------------------------

def decoder_layer_kernel(x_ref, mem_ref, tmask_ref, smask_ref,
                         wqkv_ref, bqkv_ref, sa_wo_ref,
                         ca_wq_ref, ca_wkv_ref, ca_bkv_ref, ca_wo_ref,
                         ff_w1_ref, ff_b1_ref, ff_w2_ref, vec_ref,
                         o_ref, *, num_heads, v_out):
    bb, tq, e = x_ref.shape
    tm = mem_ref.shape[1]
    d_k = e // num_heads
    d_v = v_out // num_heads
    bf16 = jnp.bfloat16

    # Packed E-sized vectors: one (10, E) block instead of ten (1, E) inputs.
    vecs = vec_ref[...]
    sa_bo, ln1_g, ln1_b = vecs[0:1], vecs[1:2], vecs[2:3]
    ca_bq, ca_bo, ln2_g, ln2_b = vecs[3:4], vecs[4:5], vecs[5:6], vecs[6:7]
    ff_b2, ln3_g, ln3_b = vecs[7:8], vecs[8:9], vecs[9:10]

    x = x_ref[...].reshape(bb * tq, e)               # (Bb*Tq, E) fp32 rows

    # ---- sub-layer 1: masked self-attention + residual + LayerNorm1 --------
    qkv = jnp.dot(x.astype(bf16), wqkv_ref[...],
                  preferred_element_type=jnp.float32) + bqkv_ref[...]
    q = qkv[:, 0:e].reshape(bb, tq, e)               # scale folded into Wq/bq
    k = qkv[:, e:2 * e].reshape(bb, tq, e)
    v = qkv[:, 2 * e:3 * e].reshape(bb, tq, e)
    neg_t = tmask_ref[...].astype(jnp.float32) < 0.5         # True where mask==0
    attn = _multi_head_attention(q, k, v, neg_t, num_heads=num_heads,
                                 d_k=d_k, d_v=d_k).reshape(bb * tq, e)
    sa = jnp.dot(attn.astype(bf16), sa_wo_ref[...],
                 preferred_element_type=jnp.float32) + sa_bo
    n1 = _layer_norm(x + sa, ln1_g, ln1_b)                    # dropout1 = id

    # ---- sub-layer 2: cross-attention over memory + residual + LayerNorm2 --
    mem = mem_ref[...].reshape(bb * tm, mem_ref.shape[2])
    q2 = (jnp.dot(n1.astype(bf16), ca_wq_ref[...],
                  preferred_element_type=jnp.float32) + ca_bq
          ).reshape(bb, tq, e)
    kv = jnp.dot(mem.astype(bf16), ca_wkv_ref[...],
                 preferred_element_type=jnp.float32) + ca_bkv_ref[...]
    k2 = kv[:, 0:e].reshape(bb, tm, e)
    v2 = kv[:, e:e + v_out].reshape(bb, tm, v_out)
    neg_s = smask_ref[...].astype(jnp.float32) < 0.5
    attn2 = _multi_head_attention(q2, k2, v2, neg_s, num_heads=num_heads,
                                  d_k=d_k, d_v=d_v).reshape(bb * tq, v_out)
    ca = jnp.dot(attn2.astype(bf16), ca_wo_ref[...],
                 preferred_element_type=jnp.float32) + ca_bo
    n2 = _layer_norm(n1 + ca, ln2_g, ln2_b)                   # dropout2 = id

    # ---- sub-layer 3: FFN + residual + LayerNorm3 ---------------------------
    h1 = jnp.dot(n2.astype(bf16), ff_w1_ref[...],
                 preferred_element_type=jnp.float32) + ff_b1_ref[...]
    h1 = jnp.maximum(h1, 0.0)
    ff = jnp.dot(h1.astype(bf16), ff_w2_ref[...],
                 preferred_element_type=jnp.float32) + ff_b2
    n3 = _layer_norm(n2 + ff, ln3_g, ln3_b)                   # dropout3 = id

    o_ref[...] = n3.reshape(bb, tq, e)


# --------------------------------- wrapper ------------------------------------

def _batch_block(batch, tq, max_rows=512):
    """Largest divisor of `batch` whose flattened row count Bb*Tq stays
    VMEM-friendly. At the test shapes this is the whole batch (grid of 1)."""
    bb = batch
    while bb > 1 and bb * tq > max_rows:
        nxt = bb - 1
        while batch % nxt:
            nxt -= 1
        bb = nxt
    return bb


def decoder_layer_forward(fused, cfg, x, memory, source_mask, target_mask):
    B, Tq, E = x.shape
    Tm, V_IN = memory.shape[1], memory.shape[2]
    V_OUT = cfg["v_out_dim"]
    H = cfg["num_heads"]
    FF = fused["ff_w1"].shape[1]
    bb = _batch_block(B, Tq)

    kern = functools.partial(decoder_layer_kernel, num_heads=H, v_out=V_OUT)
    const = lambda i: (0, 0)
    batched = lambda i: (i, 0, 0)

    return pl.pallas_call(
        kern,
        out_shape=jax.ShapeDtypeStruct((B, Tq, E), jnp.float32),
        grid=(B // bb,),
        in_specs=[
            pl.BlockSpec((bb, Tq, E), batched),          # x
            pl.BlockSpec((bb, Tm, V_IN), batched),       # memory
            pl.BlockSpec((bb, Tq, Tq), batched),         # target mask (bf16)
            pl.BlockSpec((bb, Tq, Tm), batched),         # source mask (bf16)
            pl.BlockSpec((E, 3 * E), const),             # fused self-attn Wqkv
            pl.BlockSpec((1, 3 * E), const),             # fused self-attn bqkv
            pl.BlockSpec((E, E), const),                 # self-attn out proj
            pl.BlockSpec((E, E), const),                 # cross-attn Wq
            pl.BlockSpec((V_IN, E + V_OUT), const),      # fused cross Wkv
            pl.BlockSpec((1, E + V_OUT), const),         # fused cross bkv
            pl.BlockSpec((V_OUT, E), const),             # cross-attn out proj
            pl.BlockSpec((E, FF), const),                # FFN W1
            pl.BlockSpec((1, FF), const),                # FFN b1
            pl.BlockSpec((FF, E), const),                # FFN W2
            pl.BlockSpec((10, E), const),                # packed biases / LN
        ],
        out_specs=pl.BlockSpec((bb, Tq, E), batched),
        compiler_params=pltpu.CompilerParams(
            dimension_semantics=("parallel",)),
    )(x, memory,
      target_mask.astype(jnp.bfloat16), source_mask.astype(jnp.bfloat16),
      fused["wqkv"], fused["bqkv"], fused["sa_wo"],
      fused["ca_wq"], fused["ca_wkv"], fused["ca_bkv"], fused["ca_wo"],
      fused["ff_w1"], fused["ff_b1"], fused["ff_w2"], fused["vecs"])


# ----------------------- parameter fusion / preparation ----------------------

def prepare_fused_params(params, cfg):
    """Concatenate QKV / KV weights, fold 1/sqrt(d_k) into Wq/bq, cast weights
    to bf16 (MXU inputs), pack all E-sized vectors into one (10, E) block."""
    E = params["sa_wq"].shape[0]
    V_OUT = cfg["v_out_dim"]
    scale = 1.0 / math.sqrt(E // cfg["num_heads"])
    bf16 = jnp.bfloat16
    vecs = jnp.stack([
        params["sa_bo"], params["ln1_g"], params["ln1_b"],
        params["ca_bq"] * scale, params["ca_bo"],
        params["ln2_g"], params["ln2_b"],
        params["ff_b2"], params["ln3_g"], params["ln3_b"],
    ], axis=0).astype(jnp.float32)
    return {
        "wqkv": jnp.concatenate([params["sa_wq"] * scale, params["sa_wk"],
                                 params["sa_wv"]], axis=1).astype(bf16),
        "bqkv": jnp.concatenate([params["sa_bq"] * scale, params["sa_bk"],
                                 params["sa_bv"]]).reshape(1, 3 * E),
        "sa_wo": params["sa_wo"].astype(bf16),
        "ca_wq": (params["ca_wq"] * scale).astype(bf16),
        "ca_wkv": jnp.concatenate([params["ca_wk"], params["ca_wv"]],
                                  axis=1).astype(bf16),
        "ca_bkv": jnp.concatenate([params["ca_bk"],
                                   params["ca_bv"]]).reshape(1, E + V_OUT),
        "ca_wo": params["ca_wo"].astype(bf16),
        "ff_w1": params["ff_w1"].astype(bf16),
        "ff_b1": params["ff_b1"].reshape(1, -1),
        "ff_w2": params["ff_w2"].astype(bf16),
        "vecs": vecs,
    }


# ----------------------------- pure-JAX reference ----------------------------

def decoder_layer_reference(params, cfg, x, memory, source_mask, target_mask):
    H = cfg["num_heads"]

    def lin(t, w, b):
        return t @ w + b

    def ln(t, g, b):
        mu = t.mean(-1, keepdims=True)
        var = ((t - mu) ** 2).mean(-1, keepdims=True)
        return (t - mu) / jnp.sqrt(var + 1e-5) * g + b

    def mha(q, k, v, mask):
        B, Tq, _ = q.shape
        Tk = k.shape[1]
        qh = q.reshape(B, Tq, H, -1).transpose(0, 2, 1, 3)
        kh = k.reshape(B, Tk, H, -1).transpose(0, 2, 1, 3)
        vh = v.reshape(B, Tk, H, -1).transpose(0, 2, 1, 3)
        s = jnp.einsum("bhqd,bhkd->bhqk", qh / jnp.sqrt(kh.shape[-1]), kh)
        s = jnp.where(mask[:, None] == 0, -1e9, s)
        p = jax.nn.softmax(s, axis=-1)
        o = jnp.einsum("bhqk,bhkd->bhqd", p, vh)
        return o.transpose(0, 2, 1, 3).reshape(B, Tq, -1)

    sa = mha(lin(x, params["sa_wq"], params["sa_bq"]),
             lin(x, params["sa_wk"], params["sa_bk"]),
             lin(x, params["sa_wv"], params["sa_bv"]), target_mask)
    sa = lin(sa, params["sa_wo"], params["sa_bo"])
    n1 = ln(x + sa, params["ln1_g"], params["ln1_b"])

    ca = mha(lin(n1, params["ca_wq"], params["ca_bq"]),
             lin(memory, params["ca_wk"], params["ca_bk"]),
             lin(memory, params["ca_wv"], params["ca_bv"]), source_mask)
    ca = lin(ca, params["ca_wo"], params["ca_bo"])
    n2 = ln(n1 + ca, params["ln2_g"], params["ln2_b"])

    ff = lin(jnp.maximum(lin(n2, params["ff_w1"], params["ff_b1"]), 0.0),
             params["ff_w2"], params["ff_b2"])
    return ln(n2 + ff, params["ln3_g"], params["ln3_b"])


# --------------------------------- main --------------------------------------

def init_params(key, E, H, ff_dim, v_in, v_out):
    names_shapes = [
        ("sa_wq", (E, E)), ("sa_wk", (E, E)), ("sa_wv", (E, E)), ("sa_wo", (E, E)),
        ("ca_wq", (E, E)), ("ca_wk", (v_in, E)), ("ca_wv", (v_in, v_out)),
        ("ca_wo", (v_out, E)),
        ("ff_w1", (E, ff_dim)), ("ff_w2", (ff_dim, E)),
    ]
    params = {}
    keys = jax.random.split(key, len(names_shapes) + 20)
    ki = 0
    for name, shape in names_shapes:
        params[name] = (jax.random.normal(keys[ki], shape, jnp.float32)
                        * (1.0 / math.sqrt(shape[0])))
        ki += 1
    for name, dim in [("sa_bq", E), ("sa_bk", E), ("sa_bv", E), ("sa_bo", E),
                      ("ca_bq", E), ("ca_bk", E), ("ca_bv", v_out), ("ca_bo", E),
                      ("ff_b1", ff_dim), ("ff_b2", E)]:
        params[name] = jax.random.normal(keys[ki], (dim,), jnp.float32) * 0.02
        ki += 1
    for n in ("ln1", "ln2", "ln3"):
        params[n + "_g"] = jnp.ones((E,), jnp.float32)
        params[n + "_b"] = jnp.zeros((E,), jnp.float32)
    return params


if __name__ == "__main__":
    # Small shapes consistent with the module: embedding=32, heads=4,
    # ff_dim=64, v_in_dim=16, v_out_dim=32, batch=2, target seq=8, source seq=8.
    B, Tq, Tm = 2, 8, 8
    E, H, FF, V_IN, V_OUT = 32, 4, 64, 16, 32
    cfg = {"num_heads": H, "v_out_dim": V_OUT}

    key = jax.random.PRNGKey(0)
    k_p, k_x, k_m, k_sm = jax.random.split(key, 4)
    params = init_params(k_p, E, H, FF, V_IN, V_OUT)
    fused = prepare_fused_params(params, cfg)

    x = jax.random.normal(k_x, (B, Tq, E), jnp.float32)
    memory = jax.random.normal(k_m, (B, Tm, V_IN), jnp.float32)
    # target mask: causal (B,Tq,Tq); source mask: random keep/drop (B,Tq,Tm)
    target_mask = jnp.broadcast_to(
        jnp.tril(jnp.ones((Tq, Tq), jnp.float32)), (B, Tq, Tq))
    source_mask = (jax.random.uniform(k_sm, (B, Tq, Tm)) > 0.2).astype(jnp.float32)

    fwd = jax.jit(lambda p, a, m, sm, tm: decoder_layer_forward(p, cfg, a, m, sm, tm))
    out = jax.block_until_ready(fwd(fused, x, memory, source_mask, target_mask))

    ref = decoder_layer_reference(params, cfg, x, memory, source_mask, target_mask)
    assert out.shape == (B, Tq, E)
    # bf16 MXU inputs (fp32 accumulation) + approx reciprocal vs. fully-fp32
    # reference: tolerance at the ~1e-2 quantization level.
    assert bool(jnp.allclose(out, ref, atol=5e-2, rtol=5e-2)), (
        "Pallas output does not match reference")

    print("KERNEL_OK")
</pallas_src>

<mosaic_0001>
module attributes {stable_mosaic.version = 11 : i64} {
  func.func @decoder_layer_kernel(%arg0: i32, %arg1: memref<2x8x32xf32, #tpu.memory_space<vmem>>, %arg2: memref<2x8x16xf32, #tpu.memory_space<vmem>>, %arg3: memref<2x8x8xbf16, #tpu.memory_space<vmem>>, %arg4: memref<2x8x8xbf16, #tpu.memory_space<vmem>>, %arg5: memref<32x96xbf16, #tpu.memory_space<vmem>>, %arg6: memref<1x96xf32, #tpu.memory_space<vmem>>, %arg7: memref<32x32xbf16, #tpu.memory_space<vmem>>, %arg8: memref<32x32xbf16, #tpu.memory_space<vmem>>, %arg9: memref<16x64xbf16, #tpu.memory_space<vmem>>, %arg10: memref<1x64xf32, #tpu.memory_space<vmem>>, %arg11: memref<32x32xbf16, #tpu.memory_space<vmem>>, %arg12: memref<32x64xbf16, #tpu.memory_space<vmem>>, %arg13: memref<1x64xf32, #tpu.memory_space<vmem>>, %arg14: memref<64x32xbf16, #tpu.memory_space<vmem>>, %arg15: memref<10x32xf32, #tpu.memory_space<vmem>>, %arg16: memref<2x8x32xf32, #tpu.memory_space<vmem>>) attributes {dimension_semantics = [#tpu.dimension_semantics<parallel>], iteration_bounds = array<i64: 1>, scalar_prefetch = 0 : i64, scratch_operands = 0 : i64, tpu.core_type = #tpu.core_type<tc>, window_params = [{transform_indices = @transform_0, window_bounds = array<i64: 2, 8, 32>}, {transform_indices = @transform_1, window_bounds = array<i64: 2, 8, 16>}, {transform_indices = @transform_2, window_bounds = array<i64: 2, 8, 8>}, {transform_indices = @transform_3, window_bounds = array<i64: 2, 8, 8>}, {pipeline_mode = #tpu.pipeline_mode<synchronous>, transform_indices = @transform_4, window_bounds = array<i64: 32, 96>}, {pipeline_mode = #tpu.pipeline_mode<synchronous>, transform_indices = @transform_5, window_bounds = array<i64: 1, 96>}, {pipeline_mode = #tpu.pipeline_mode<synchronous>, transform_indices = @transform_6, window_bounds = array<i64: 32, 32>}, {pipeline_mode = #tpu.pipeline_mode<synchronous>, transform_indices = @transform_7, window_bounds = array<i64: 32, 32>}, {pipeline_mode = #tpu.pipeline_mode<synchronous>, transform_indices = @transform_8, window_bounds = array<i64: 16, 64>}, {pipeline_mode = #tpu.pipeline_mode<synchronous>, transform_indices = @transform_9, window_bounds = array<i64: 1, 64>}, {pipeline_mode = #tpu.pipeline_mode<synchronous>, transform_indices = @transform_10, window_bounds = array<i64: 32, 32>}, {pipeline_mode = #tpu.pipeline_mode<synchronous>, transform_indices = @transform_11, window_bounds = array<i64: 32, 64>}, {pipeline_mode = #tpu.pipeline_mode<synchronous>, transform_indices = @transform_12, window_bounds = array<i64: 1, 64>}, {pipeline_mode = #tpu.pipeline_mode<synchronous>, transform_indices = @transform_13, window_bounds = array<i64: 64, 32>}, {pipeline_mode = #tpu.pipeline_mode<synchronous>, transform_indices = @transform_14, window_bounds = array<i64: 10, 32>}, {transform_indices = @transform_15, window_bounds = array<i64: 2, 8, 32>}]} {
    %c0 = arith.constant 0 : index
    %c0_0 = arith.constant 0 : index
    %0 = vector.load %arg15[%c0, %c0_0] : memref<10x32xf32, #tpu.memory_space<vmem>>, vector<10x32xf32>
    %1 = vector.extract_strided_slice %0 {offsets = [0, 0], sizes = [1, 32], strides = [1, 1]} : vector<10x32xf32> to vector<1x32xf32>
    %2 = vector.extract_strided_slice %0 {offsets = [1, 0], sizes = [1, 32], strides = [1, 1]} : vector<10x32xf32> to vector<1x32xf32>
    %3 = vector.extract_strided_slice %0 {offsets = [2, 0], sizes = [1, 32], strides = [1, 1]} : vector<10x32xf32> to vector<1x32xf32>
    %4 = vector.extract_strided_slice %0 {offsets = [3, 0], sizes = [1, 32], strides = [1, 1]} : vector<10x32xf32> to vector<1x32xf32>
    %5 = vector.extract_strided_slice %0 {offsets = [4, 0], sizes = [1, 32], strides = [1, 1]} : vector<10x32xf32> to vector<1x32xf32>
    %6 = vector.extract_strided_slice %0 {offsets = [5, 0], sizes = [1, 32], strides = [1, 1]} : vector<10x32xf32> to vector<1x32xf32>
    %7 = vector.extract_strided_slice %0 {offsets = [6, 0], sizes = [1, 32], strides = [1, 1]} : vector<10x32xf32> to vector<1x32xf32>
    %8 = vector.extract_strided_slice %0 {offsets = [7, 0], sizes = [1, 32], strides = [1, 1]} : vector<10x32xf32> to vector<1x32xf32>
    %9 = vector.extract_strided_slice %0 {offsets = [8, 0], sizes = [1, 32], strides = [1, 1]} : vector<10x32xf32> to vector<1x32xf32>
    %10 = vector.extract_strided_slice %0 {offsets = [9, 0], sizes = [1, 32], strides = [1, 1]} : vector<10x32xf32> to vector<1x32xf32>
    %c0_1 = arith.constant 0 : index
    %c0_2 = arith.constant 0 : index
    %c0_3 = arith.constant 0 : index
    %11 = vector.load %arg1[%c0_1, %c0_2, %c0_3] : memref<2x8x32xf32, #tpu.memory_space<vmem>>, vector<2x8x32xf32>
    %12 = vector.shape_cast %11 : vector<2x8x32xf32> to vector<16x32xf32>
    %13 = arith.truncf %12 : vector<16x32xf32> to vector<16x32xbf16>
    %c0_4 = arith.constant 0 : index
    %c0_5 = arith.constant 0 : index
    %14 = vector.load %arg5[%c0_4, %c0_5] : memref<32x96xbf16, #tpu.memory_space<vmem>>, vector<32x96xbf16>
    %cst = arith.constant dense<0.000000e+00> : vector<16x96xf32>
    %15 = tpu.matmul %13, %14, %cst {dimension_numbers = #tpu.dot_dimension_numbers<[1], [0], [0], [1], [0, 0, 1, 1], [], []>} : vector<16x32xbf16>, vector<32x96xbf16>, vector<16x96xf32> -> vector<16x96xf32>
    %c0_6 = arith.constant 0 : index
    %c0_7 = arith.constant 0 : index
    %16 = vector.load %arg6[%c0_6, %c0_7] : memref<1x96xf32, #tpu.memory_space<vmem>>, vector<1x96xf32>
    %17 = vector.broadcast %16 : vector<1x96xf32> to vector<16x96xf32>
    %18 = arith.addf %15, %17 : vector<16x96xf32>
    %19 = vector.extract_strided_slice %18 {offsets = [0, 0], sizes = [16, 32], strides = [1, 1]} : vector<16x96xf32> to vector<16x32xf32>
    %20 = vector.shape_cast %19 : vector<16x32xf32> to vector<2x8x32xf32>
    %21 = vector.extract_strided_slice %18 {offsets = [0, 32], sizes = [16, 32], strides = [1, 1]} : vector<16x96xf32> to vector<16x32xf32>
    %22 = vector.shape_cast %21 : vector<16x32xf32> to vector<2x8x32xf32>
    %23 = vector.extract_strided_slice %18 {offsets = [0, 64], sizes = [16, 32], strides = [1, 1]} : vector<16x96xf32> to vector<16x32xf32>
    %24 = vector.shape_cast %23 : vector<16x32xf32> to vector<2x8x32xf32>
    %c0_8 = arith.constant 0 : index
    %c0_9 = arith.constant 0 : index
    %c0_10 = arith.constant 0 : index
    %25 = vector.load %arg3[%c0_8, %c0_9, %c0_10] : memref<2x8x8xbf16, #tpu.memory_space<vmem>>, vector<2x8x8xbf16>
    %26 = arith.extf %25 : vector<2x8x8xbf16> to vector<2x8x8xf32>
    %cst_11 = arith.constant 5.000000e-01 : f32
    %27 = vector.broadcast %cst_11 : f32 to vector<2x8x8xf32>
    %28 = arith.cmpf olt, %26, %27 : vector<2x8x8xf32>
    %29 = vector.extract_strided_slice %20 {offsets = [0, 0, 0], sizes = [2, 8, 8], strides = [1, 1, 1]} : vector<2x8x32xf32> to vector<2x8x8xf32>
    %30 = arith.truncf %29 : vector<2x8x8xf32> to vector<2x8x8xbf16>
    %31 = vector.extract_strided_slice %22 {offsets = [0, 0, 0], sizes = [2, 8, 8], strides = [1, 1, 1]} : vector<2x8x32xf32> to vector<2x8x8xf32>
    %32 = arith.truncf %31 : vector<2x8x8xf32> to vector<2x8x8xbf16>
    %33 = vector.extract_strided_slice %24 {offsets = [0, 0, 0], sizes = [2, 8, 8], strides = [1, 1, 1]} : vector<2x8x32xf32> to vector<2x8x8xf32>
    %34 = arith.truncf %33 : vector<2x8x8xf32> to vector<2x8x8xbf16>
    "tpu.trace_start"() <{level = 10 : i32, message = "bqd,bkd->bqk"}> : () -> ()
    %cst_12 = arith.constant dense<0.000000e+00> : vector<2x8x8xf32>
    %35 = tpu.matmul %30, %32, %cst_12 {dimension_numbers = #tpu.dot_dimension_numbers<[2], [2], [1], [1], [0, 0, 0, 1, 1, 1], [0], [0]>} : vector<2x8x8xbf16>, vector<2x8x8xbf16>, vector<2x8x8xf32> -> vector<2x8x8xf32>
    %cst_13 = arith.constant -1.000000e+09 : f32
    "tpu.trace_stop"() : () -> ()
    %36 = vector.broadcast %cst_13 : f32 to vector<2x8x8xf32>
    %37 = arith.select %28, %36, %35 : vector<2x8x8xi1>, vector<2x8x8xf32>
    %cst_14 = arith.constant dense<0xFF800000> : vector<2x8xf32>
    %38 = vector.multi_reduction <maximumf>, %37, %cst_14 [2] : vector<2x8x8xf32> to vector<2x8xf32>
    %39 = vector.shape_cast %38 : vector<2x8xf32> to vector<2x8x1xf32>
    %40 = vector.broadcast %39 : vector<2x8x1xf32> to vector<2x8x8xf32>
    %41 = arith.subf %37, %40 : vector<2x8x8xf32>
    %42 = math.exp %41 : vector<2x8x8xf32>
    %cst_15 = arith.constant dense<0.000000e+00> : vector<2x8xf32>
    %43 = vector.multi_reduction <add>, %42, %cst_15 [2] : vector<2x8x8xf32> to vector<2x8xf32>
    %44 = vector.shape_cast %43 : vector<2x8xf32> to vector<2x8x1xf32>
    %45 = tpu.reciprocal %44 {approx = true} : vector<2x8x1xf32> -> vector<2x8x1xf32>
    %46 = vector.broadcast %45 : vector<2x8x1xf32> to vector<2x8x8xf32>
    %47 = arith.mulf %42, %46 : vector<2x8x8xf32>
    %48 = arith.truncf %47 : vector<2x8x8xf32> to vector<2x8x8xbf16>
    "tpu.trace_start"() <{level = 10 : i32, message = "bqk,bkd->bqd"}> : () -> ()
    %cst_16 = arith.constant dense<0.000000e+00> : vector<2x8x8xf32>
    %49 = tpu.matmul %48, %34, %cst_16 {dimension_numbers = #tpu.dot_dimension_numbers<[2], [1], [1], [2], [0, 0, 0, 1, 1, 2], [0], [0]>} : vector<2x8x8xbf16>, vector<2x8x8xbf16>, vector<2x8x8xf32> -> vector<2x8x8xf32>
    "tpu.trace_stop"() : () -> ()
    %50 = vector.extract_strided_slice %20 {offsets = [0, 0, 8], sizes = [2, 8, 8], strides = [1, 1, 1]} : vector<2x8x32xf32> to vector<2x8x8xf32>
    %51 = arith.truncf %50 : vector<2x8x8xf32> to vector<2x8x8xbf16>
    %52 = vector.extract_strided_slice %22 {offsets = [0, 0, 8], sizes = [2, 8, 8], strides = [1, 1, 1]} : vector<2x8x32xf32> to vector<2x8x8xf32>
    %53 = arith.truncf %52 : vector<2x8x8xf32> to vector<2x8x8xbf16>
    %54 = vector.extract_strided_slice %24 {offsets = [0, 0, 8], sizes = [2, 8, 8], strides = [1, 1, 1]} : vector<2x8x32xf32> to vector<2x8x8xf32>
    %55 = arith.truncf %54 : vector<2x8x8xf32> to vector<2x8x8xbf16>
    "tpu.trace_start"() <{level = 10 : i32, message = "bqd,bkd->bqk"}> : () -> ()
    %cst_17 = arith.constant dense<0.000000e+00> : vector<2x8x8xf32>
    %56 = tpu.matmul %51, %53, %cst_17 {dimension_numbers = #tpu.dot_dimension_numbers<[2], [2], [1], [1], [0, 0, 0, 1, 1, 1], [0], [0]>} : vector<2x8x8xbf16>, vector<2x8x8xbf16>, vector<2x8x8xf32> -> vector<2x8x8xf32>
    %cst_18 = arith.constant -1.000000e+09 : f32
    "tpu.trace_stop"() : () -> ()
    %57 = vector.broadcast %cst_18 : f32 to vector<2x8x8xf32>
    %58 = arith.select %28, %57, %56 : vector<2x8x8xi1>, vector<2x8x8xf32>
    %cst_19 = arith.constant dense<0xFF800000> : vector<2x8xf32>
    %59 = vector.multi_reduction <maximumf>, %58, %cst_19 [2] : vector<2x8x8xf32> to vector<2x8xf32>
    %60 = vector.shape_cast %59 : vector<2x8xf32> to vector<2x8x1xf32>
    %61 = vector.broadcast %60 : vector<2x8x1xf32> to vector<2x8x8xf32>
    %62 = arith.subf %58, %61 : vector<2x8x8xf32>
    %63 = math.exp %62 : vector<2x8x8xf32>
    %cst_20 = arith.constant dense<0.000000e+00> : vector<2x8xf32>
    %64 = vector.multi_reduction <add>, %63, %cst_20 [2] : vector<2x8x8xf32> to vector<2x8xf32>
    %65 = vector.shape_cast %64 : vector<2x8xf32> to vector<2x8x1xf32>
    %66 = tpu.reciprocal %65 {approx = true} : vector<2x8x1xf32> -> vector<2x8x1xf32>
    %67 = vector.broadcast %66 : vector<2x8x1xf32> to vector<2x8x8xf32>
    %68 = arith.mulf %63, %67 : vector<2x8x8xf32>
    %69 = arith.truncf %68 : vector<2x8x8xf32> to vector<2x8x8xbf16>
    "tpu.trace_start"() <{level = 10 : i32, message = "bqk,bkd->bqd"}> : () -> ()
    %cst_21 = arith.constant dense<0.000000e+00> : vector<2x8x8xf32>
    %70 = tpu.matmul %69, %55, %cst_21 {dimension_numbers = #tpu.dot_dimension_numbers<[2], [1], [1], [2], [0, 0, 0, 1, 1, 2], [0], [0]>} : vector<2x8x8xbf16>, vector<2x8x8xbf16>, vector<2x8x8xf32> -> vector<2x8x8xf32>
    "tpu.trace_stop"() : () -> ()
    %71 = vector.extract_strided_slice %20 {offsets = [0, 0, 16], sizes = [2, 8, 8], strides = [1, 1, 1]} : vector<2x8x32xf32> to vector<2x8x8xf32>
    %72 = arith.truncf %71 : vector<2x8x8xf32> to vector<2x8x8xbf16>
    %73 = vector.extract_strided_slice %22 {offsets = [0, 0, 16], sizes = [2, 8, 8], strides = [1, 1, 1]} : vector<2x8x32xf32> to vector<2x8x8xf32>
    %74 = arith.truncf %73 : vector<2x8x8xf32> to vector<2x8x8xbf16>
    %75 = vector.extract_strided_slice %24 {offsets = [0, 0, 16], sizes = [2, 8, 8], strides = [1, 1, 1]} : vector<2x8x32xf32> to vector<2x8x8xf32>
    %76 = arith.truncf %75 : vector<2x8x8xf32> to vector<2x8x8xbf16>
    "tpu.trace_start"() <{level = 10 : i32, message = "bqd,bkd->bqk"}> : () -> ()
    %cst_22 = arith.constant dense<0.000000e+00> : vector<2x8x8xf32>
    %77 = tpu.matmul %72, %74, %cst_22 {dimension_numbers = #tpu.dot_dimension_numbers<[2], [2], [1], [1], [0, 0, 0, 1, 1, 1], [0], [0]>} : vector<2x8x8xbf16>, vector<2x8x8xbf16>, vector<2x8x8xf32> -> vector<2x8x8xf32>
    %cst_23 = arith.constant -1.000000e+09 : f32
    "tpu.trace_stop"() : () -> ()
    %78 = vector.broadcast %cst_23 : f32 to vector<2x8x8xf32>
    %79 = arith.select %28, %78, %77 : vector<2x8x8xi1>, vector<2x8x8xf32>
    %cst_24 = arith.constant dense<0xFF800000> : vector<2x8xf32>
    %80 = vector.multi_reduction <maximumf>, %79, %cst_24 [2] : vector<2x8x8xf32> to vector<2x8xf32>
    %81 = vector.shape_cast %80 : vector<2x8xf32> to vector<2x8x1xf32>
    %82 = vector.broadcast %81 : vector<2x8x1xf32> to vector<2x8x8xf32>
    %83 = arith.subf %79, %82 : vector<2x8x8xf32>
    %84 = math.exp %83 : vector<2x8x8xf32>
    %cst_25 = arith.constant dense<0.000000e+00> : vector<2x8xf32>
    %85 = vector.multi_reduction <add>, %84, %cst_25 [2] : vector<2x8x8xf32> to vector<2x8xf32>
    %86 = vector.shape_cast %85 : vector<2x8xf32> to vector<2x8x1xf32>
    %87 = tpu.reciprocal %86 {approx = true} : vector<2x8x1xf32> -> vector<2x8x1xf32>
    %88 = vector.broadcast %87 : vector<2x8x1xf32> to vector<2x8x8xf32>
    %89 = arith.mulf %84, %88 : vector<2x8x8xf32>
    %90 = arith.truncf %89 : vector<2x8x8xf32> to vector<2x8x8xbf16>
    "tpu.trace_start"() <{level = 10 : i32, message = "bqk,bkd->bqd"}> : () -> ()
    %cst_26 = arith.constant dense<0.000000e+00> : vector<2x8x8xf32>
    %91 = tpu.matmul %90, %76, %cst_26 {dimension_numbers = #tpu.dot_dimension_numbers<[2], [1], [1], [2], [0, 0, 0, 1, 1, 2], [0], [0]>} : vector<2x8x8xbf16>, vector<2x8x8xbf16>, vector<2x8x8xf32> -> vector<2x8x8xf32>
    "tpu.trace_stop"() : () -> ()
    %92 = vector.extract_strided_slice %20 {offsets = [0, 0, 24], sizes = [2, 8, 8], strides = [1, 1, 1]} : vector<2x8x32xf32> to vector<2x8x8xf32>
    %93 = arith.truncf %92 : vector<2x8x8xf32> to vector<2x8x8xbf16>
    %94 = vector.extract_strided_slice %22 {offsets = [0, 0, 24], sizes = [2, 8, 8], strides = [1, 1, 1]} : vector<2x8x32xf32> to vector<2x8x8xf32>
    %95 = arith.truncf %94 : vector<2x8x8xf32> to vector<2x8x8xbf16>
    %96 = vector.extract_strided_slice %24 {offsets = [0, 0, 24], sizes = [2, 8, 8], strides = [1, 1, 1]} : vector<2x8x32xf32> to vector<2x8x8xf32>
    %97 = arith.truncf %96 : vector<2x8x8xf32> to vector<2x8x8xbf16>
    "tpu.trace_start"() <{level = 10 : i32, message = "bqd,bkd->bqk"}> : () -> ()
    %cst_27 = arith.constant dense<0.000000e+00> : vector<2x8x8xf32>
    %98 = tpu.matmul %93, %95, %cst_27 {dimension_numbers = #tpu.dot_dimension_numbers<[2], [2], [1], [1], [0, 0, 0, 1, 1, 1], [0], [0]>} : vector<2x8x8xbf16>, vector<2x8x8xbf16>, vector<2x8x8xf32> -> vector<2x8x8xf32>
    %cst_28 = arith.constant -1.000000e+09 : f32
    "tpu.trace_stop"() : () -> ()
    %99 = vector.broadcast %cst_28 : f32 to vector<2x8x8xf32>
    %100 = arith.select %28, %99, %98 : vector<2x8x8xi1>, vector<2x8x8xf32>
    %cst_29 = arith.constant dense<0xFF800000> : vector<2x8xf32>
    %101 = vector.multi_reduction <maximumf>, %100, %cst_29 [2] : vector<2x8x8xf32> to vector<2x8xf32>
    %102 = vector.shape_cast %101 : vector<2x8xf32> to vector<2x8x1xf32>
    %103 = vector.broadcast %102 : vector<2x8x1xf32> to vector<2x8x8xf32>
    %104 = arith.subf %100, %103 : vector<2x8x8xf32>
    %105 = math.exp %104 : vector<2x8x8xf32>
    %cst_30 = arith.constant dense<0.000000e+00> : vector<2x8xf32>
    %106 = vector.multi_reduction <add>, %105, %cst_30 [2] : vector<2x8x8xf32> to vector<2x8xf32>
    %107 = vector.shape_cast %106 : vector<2x8xf32> to vector<2x8x1xf32>
    %108 = tpu.reciprocal %107 {approx = true} : vector<2x8x1xf32> -> vector<2x8x1xf32>
    %109 = vector.broadcast %108 : vector<2x8x1xf32> to vector<2x8x8xf32>
    %110 = arith.mulf %105, %109 : vector<2x8x8xf32>
    %111 = arith.truncf %110 : vector<2x8x8xf32> to vector<2x8x8xbf16>
    "tpu.trace_start"() <{level = 10 : i32, message = "bqk,bkd->bqd"}> : () -> ()
    %cst_31 = arith.constant dense<0.000000e+00> : vector<2x8x8xf32>
    %112 = tpu.matmul %111, %97, %cst_31 {dimension_numbers = #tpu.dot_dimension_numbers<[2], [1], [1], [2], [0, 0, 0, 1, 1, 2], [0], [0]>} : vector<2x8x8xbf16>, vector<2x8x8xbf16>, vector<2x8x8xf32> -> vector<2x8x8xf32>
    "tpu.trace_stop"() : () -> ()
    %113 = tpu.concatenate %49, %70, %91, %112 in 2 : vector<2x8x8xf32>, vector<2x8x8xf32>, vector<2x8x8xf32>, vector<2x8x8xf32> -> vector<2x8x32xf32>
    %114 = vector.shape_cast %113 : vector<2x8x32xf32> to vector<16x32xf32>
    %115 = arith.truncf %114 : vector<16x32xf32> to vector<16x32xbf16>
    %c0_32 = arith.constant 0 : index
    %c0_33 = arith.constant 0 : index
    %116 = vector.load %arg7[%c0_32, %c0_33] : memref<32x32xbf16, #tpu.memory_space<vmem>>, vector<32x32xbf16>
    %cst_34 = arith.constant dense<0.000000e+00> : vector<16x32xf32>
    %117 = tpu.matmul %115, %116, %cst_34 {dimension_numbers = #tpu.dot_dimension_numbers<[1], [0], [0], [1], [0, 0, 1, 1], [], []>} : vector<16x32xbf16>, vector<32x32xbf16>, vector<16x32xf32> -> vector<16x32xf32>
    %118 = vector.broadcast %1 : vector<1x32xf32> to vector<16x32xf32>
    %119 = arith.addf %117, %118 : vector<16x32xf32>
    %120 = arith.addf %12, %119 : vector<16x32xf32>
    %cst_35 = arith.constant dense<0.000000e+00> : vector<16xf32>
    %121 = vector.multi_reduction <add>, %120, %cst_35 [1] : vector<16x32xf32> to vector<16xf32>
    %122 = vector.shape_cast %121 : vector<16xf32> to vector<16x1xf32>
    %cst_36 = arith.constant 3.200000e+01 : f32
    %123 = vector.broadcast %cst_36 : f32 to vector<16x1xf32>
    %124 = arith.divf %122, %123 : vector<16x1xf32>
    %125 = vector.broadcast %124 : vector<16x1xf32> to vector<16x32xf32>
    %126 = arith.subf %120, %125 : vector<16x32xf32>
    %127 = arith.mulf %126, %126 : vector<16x32xf32>
    %cst_37 = arith.constant dense<0.000000e+00> : vector<16xf32>
    %128 = vector.multi_reduction <add>, %127, %cst_37 [1] : vector<16x32xf32> to vector<16xf32>
    %129 = vector.shape_cast %128 : vector<16xf32> to vector<16x1xf32>
    %cst_38 = arith.constant 3.200000e+01 : f32
    %130 = vector.broadcast %cst_38 : f32 to vector<16x1xf32>
    %131 = arith.divf %129, %130 : vector<16x1xf32>
    %132 = vector.broadcast %124 : vector<16x1xf32> to vector<16x32xf32>
    %133 = arith.subf %120, %132 : vector<16x32xf32>
    %cst_39 = arith.constant 9.99999974E-6 : f32
    %134 = vector.broadcast %cst_39 : f32 to vector<16x1xf32>
    %135 = arith.addf %131, %134 : vector<16x1xf32>
    %136 = math.rsqrt %135 : vector<16x1xf32>
    %137 = vector.broadcast %136 : vector<16x1xf32> to vector<16x32xf32>
    %138 = arith.mulf %133, %137 : vector<16x32xf32>
    %139 = vector.broadcast %2 : vector<1x32xf32> to vector<16x32xf32>
    %140 = arith.mulf %138, %139 : vector<16x32xf32>
    %141 = vector.broadcast %3 : vector<1x32xf32> to vector<16x32xf32>
    %142 = arith.addf %140, %141 : vector<16x32xf32>
    %c0_40 = arith.constant 0 : index
    %c0_41 = arith.constant 0 : index
    %c0_42 = arith.constant 0 : index
    %143 = vector.load %arg2[%c0_40, %c0_41, %c0_42] : memref<2x8x16xf32, #tpu.memory_space<vmem>>, vector<2x8x16xf32>
    %144 = vector.shape_cast %143 : vector<2x8x16xf32> to vector<16x16xf32>
    %145 = arith.truncf %142 : vector<16x32xf32> to vector<16x32xbf16>
    %c0_43 = arith.constant 0 : index
    %c0_44 = arith.constant 0 : index
    %146 = vector.load %arg8[%c0_43, %c0_44] : memref<32x32xbf16, #tpu.memory_space<vmem>>, vector<32x32xbf16>
    %cst_45 = arith.constant dense<0.000000e+00> : vector<16x32xf32>
    %147 = tpu.matmul %145, %146, %cst_45 {dimension_numbers = #tpu.dot_dimension_numbers<[1], [0], [0], [1], [0, 0, 1, 1], [], []>} : vector<16x32xbf16>, vector<32x32xbf16>, vector<16x32xf32> -> vector<16x32xf32>
    %148 = vector.broadcast %4 : vector<1x32xf32> to vector<16x32xf32>
    %149 = arith.addf %147, %148 : vector<16x32xf32>
    %150 = vector.shape_cast %149 : vector<16x32xf32> to vector<2x8x32xf32>
    %151 = arith.truncf %144 : vector<16x16xf32> to vector<16x16xbf16>
    %c0_46 = arith.constant 0 : index
    %c0_47 = arith.constant 0 : index
    %152 = vector.load %arg9[%c0_46, %c0_47] : memref<16x64xbf16, #tpu.memory_space<vmem>>, vector<16x64xbf16>
    %cst_48 = arith.constant dense<0.000000e+00> : vector<16x64xf32>
    %153 = tpu.matmul %151, %152, %cst_48 {dimension_numbers = #tpu.dot_dimension_numbers<[1], [0], [0], [1], [0, 0, 1, 1], [], []>} : vector<16x16xbf16>, vector<16x64xbf16>, vector<16x64xf32> -> vector<16x64xf32>
    %c0_49 = arith.constant 0 : index
    %c0_50 = arith.constant 0 : index
    %154 = vector.load %arg10[%c0_49, %c0_50] : memref<1x64xf32, #tpu.memory_space<vmem>>, vector<1x64xf32>
    %155 = vector.broadcast %154 : vector<1x64xf32> to vector<16x64xf32>
    %156 = arith.addf %153, %155 : vector<16x64xf32>
    %157 = vector.extract_strided_slice %156 {offsets = [0, 0], sizes = [16, 32], strides = [1, 1]} : vector<16x64xf32> to vector<16x32xf32>
    %158 = vector.shape_cast %157 : vector<16x32xf32> to vector<2x8x32xf32>
    %159 = vector.extract_strided_slice %156 {offsets = [0, 32], sizes = [16, 32], strides = [1, 1]} : vector<16x64xf32> to vector<16x32xf32>
    %160 = vector.shape_cast %159 : vector<16x32xf32> to vector<2x8x32xf32>
    %c0_51 = arith.constant 0 : index
    %c0_52 = arith.constant 0 : index
    %c0_53 = arith.constant 0 : index
    %161 = vector.load %arg4[%c0_51, %c0_52, %c0_53] : memref<2x8x8xbf16, #tpu.memory_space<vmem>>, vector<2x8x8xbf16>
    %162 = arith.extf %161 : vector<2x8x8xbf16> to vector<2x8x8xf32>
    %cst_54 = arith.constant 5.000000e-01 : f32
    %163 = vector.broadcast %cst_54 : f32 to vector<2x8x8xf32>
    %164 = arith.cmpf olt, %162, %163 : vector<2x8x8xf32>
    %165 = vector.extract_strided_slice %150 {offsets = [0, 0, 0], sizes = [2, 8, 8], strides = [1, 1, 1]} : vector<2x8x32xf32> to vector<2x8x8xf32>
    %166 = arith.truncf %165 : vector<2x8x8xf32> to vector<2x8x8xbf16>
    %167 = vector.extract_strided_slice %158 {offsets = [0, 0, 0], sizes = [2, 8, 8], strides = [1, 1, 1]} : vector<2x8x32xf32> to vector<2x8x8xf32>
    %168 = arith.truncf %167 : vector<2x8x8xf32> to vector<2x8x8xbf16>
    %169 = vector.extract_strided_slice %160 {offsets = [0, 0, 0], sizes = [2, 8, 8], strides = [1, 1, 1]} : vector<2x8x32xf32> to vector<2x8x8xf32>
    %170 = arith.truncf %169 : vector<2x8x8xf32> to vector<2x8x8xbf16>
    "tpu.trace_start"() <{level = 10 : i32, message = "bqd,bkd->bqk"}> : () -> ()
    %cst_55 = arith.constant dense<0.000000e+00> : vector<2x8x8xf32>
    %171 = tpu.matmul %166, %168, %cst_55 {dimension_numbers = #tpu.dot_dimension_numbers<[2], [2], [1], [1], [0, 0, 0, 1, 1, 1], [0], [0]>} : vector<2x8x8xbf16>, vector<2x8x8xbf16>, vector<2x8x8xf32> -> vector<2x8x8xf32>
    %cst_56 = arith.constant -1.000000e+09 : f32
    "tpu.trace_stop"() : () -> ()
    %172 = vector.broadcast %cst_56 : f32 to vector<2x8x8xf32>
    %173 = arith.select %164, %172, %171 : vector<2x8x8xi1>, vector<2x8x8xf32>
    %cst_57 = arith.constant dense<0xFF800000> : vector<2x8xf32>
    %174 = vector.multi_reduction <maximumf>, %173, %cst_57 [2] : vector<2x8x8xf32> to vector<2x8xf32>
    %175 = vector.shape_cast %174 : vector<2x8xf32> to vector<2x8x1xf32>
    %176 = vector.broadcast %175 : vector<2x8x1xf32> to vector<2x8x8xf32>
    %177 = arith.subf %173, %176 : vector<2x8x8xf32>
    %178 = math.exp %177 : vector<2x8x8xf32>
    %cst_58 = arith.constant dense<0.000000e+00> : vector<2x8xf32>
    %179 = vector.multi_reduction <add>, %178, %cst_58 [2] : vector<2x8x8xf32> to vector<2x8xf32>
    %180 = vector.shape_cast %179 : vector<2x8xf32> to vector<2x8x1xf32>
    %181 = tpu.reciprocal %180 {approx = true} : vector<2x8x1xf32> -> vector<2x8x1xf32>
    %182 = vector.broadcast %181 : vector<2x8x1xf32> to vector<2x8x8xf32>
    %183 = arith.mulf %178, %182 : vector<2x8x8xf32>
    %184 = arith.truncf %183 : vector<2x8x8xf32> to vector<2x8x8xbf16>
    "tpu.trace_start"() <{level = 10 : i32, message = "bqk,bkd->bqd"}> : () -> ()
    %cst_59 = arith.constant dense<0.000000e+00> : vector<2x8x8xf32>
    %185 = tpu.matmul %184, %170, %cst_59 {dimension_numbers = #tpu.dot_dimension_numbers<[2], [1], [1], [2], [0, 0, 0, 1, 1, 2], [0], [0]>} : vector<2x8x8xbf16>, vector<2x8x8xbf16>, vector<2x8x8xf32> -> vector<2x8x8xf32>
    "tpu.trace_stop"() : () -> ()
    %186 = vector.extract_strided_slice %150 {offsets = [0, 0, 8], sizes = [2, 8, 8], strides = [1, 1, 1]} : vector<2x8x32xf32> to vector<2x8x8xf32>
    %187 = arith.truncf %186 : vector<2x8x8xf32> to vector<2x8x8xbf16>
    %188 = vector.extract_strided_slice %158 {offsets = [0, 0, 8], sizes = [2, 8, 8], strides = [1, 1, 1]} : vector<2x8x32xf32> to vector<2x8x8xf32>
    %189 = arith.truncf %188 : vector<2x8x8xf32> to vector<2x8x8xbf16>
    %190 = vector.extract_strided_slice %160 {offsets = [0, 0, 8], sizes = [2, 8, 8], strides = [1, 1, 1]} : vector<2x8x32xf32> to vector<2x8x8xf32>
    %191 = arith.truncf %190 : vector<2x8x8xf32> to vector<2x8x8xbf16>
    "tpu.trace_start"() <{level = 10 : i32, message = "bqd,bkd->bqk"}> : () -> ()
    %cst_60 = arith.constant dense<0.000000e+00> : vector<2x8x8xf32>
    %192 = tpu.matmul %187, %189, %cst_60 {dimension_numbers = #tpu.dot_dimension_numbers<[2], [2], [1], [1], [0, 0, 0, 1, 1, 1], [0], [0]>} : vector<2x8x8xbf16>, vector<2x8x8xbf16>, vector<2x8x8xf32> -> vector<2x8x8xf32>
    %cst_61 = arith.constant -1.000000e+09 : f32
    "tpu.trace_stop"() : () -> ()
    %193 = vector.broadcast %cst_61 : f32 to vector<2x8x8xf32>
    %194 = arith.select %164, %193, %192 : vector<2x8x8xi1>, vector<2x8x8xf32>
    %cst_62 = arith.constant dense<0xFF800000> : vector<2x8xf32>
    %195 = vector.multi_reduction <maximumf>, %194, %cst_62 [2] : vector<2x8x8xf32> to vector<2x8xf32>
    %196 = vector.shape_cast %195 : vector<2x8xf32> to vector<2x8x1xf32>
    %197 = vector.broadcast %196 : vector<2x8x1xf32> to vector<2x8x8xf32>
    %198 = arith.subf %194, %197 : vector<2x8x8xf32>
    %199 = math.exp %198 : vector<2x8x8xf32>
    %cst_63 = arith.constant dense<0.000000e+00> : vector<2x8xf32>
    %200 = vector.multi_reduction <add>, %199, %cst_63 [2] : vector<2x8x8xf32> to vector<2x8xf32>
    %201 = vector.shape_cast %200 : vector<2x8xf32> to vector<2x8x1xf32>
    %202 = tpu.reciprocal %201 {approx = true} : vector<2x8x1xf32> -> vector<2x8x1xf32>
    %203 = vector.broadcast %202 : vector<2x8x1xf32> to vector<2x8x8xf32>
    %204 = arith.mulf %199, %203 : vector<2x8x8xf32>
    %205 = arith.truncf %204 : vector<2x8x8xf32> to vector<2x8x8xbf16>
    "tpu.trace_start"() <{level = 10 : i32, message = "bqk,bkd->bqd"}> : () -> ()
    %cst_64 = arith.constant dense<0.000000e+00> : vector<2x8x8xf32>
    %206 = tpu.matmul %205, %191, %cst_64 {dimension_numbers = #tpu.dot_dimension_numbers<[2], [1], [1], [2], [0, 0, 0, 1, 1, 2], [0], [0]>} : vector<2x8x8xbf16>, vector<2x8x8xbf16>, vector<2x8x8xf32> -> vector<2x8x8xf32>
    "tpu.trace_stop"() : () -> ()
    %207 = vector.extract_strided_slice %150 {offsets = [0, 0, 16], sizes = [2, 8, 8], strides = [1, 1, 1]} : vector<2x8x32xf32> to vector<2x8x8xf32>
    %208 = arith.truncf %207 : vector<2x8x8xf32> to vector<2x8x8xbf16>
    %209 = vector.extract_strided_slice %158 {offsets = [0, 0, 16], sizes = [2, 8, 8], strides = [1, 1, 1]} : vector<2x8x32xf32> to vector<2x8x8xf32>
    %210 = arith.truncf %209 : vector<2x8x8xf32> to vector<2x8x8xbf16>
    %211 = vector.extract_strided_slice %160 {offsets = [0, 0, 16], sizes = [2, 8, 8], strides = [1, 1, 1]} : vector<2x8x32xf32> to vector<2x8x8xf32>
    %212 = arith.truncf %211 : vector<2x8x8xf32> to vector<2x8x8xbf16>
    "tpu.trace_start"() <{level = 10 : i32, message = "bqd,bkd->bqk"}> : () -> ()
    %cst_65 = arith.constant dense<0.000000e+00> : vector<2x8x8xf32>
    %213 = tpu.matmul %208, %210, %cst_65 {dimension_numbers = #tpu.dot_dimension_numbers<[2], [2], [1], [1], [0, 0, 0, 1, 1, 1], [0], [0]>} : vector<2x8x8xbf16>, vector<2x8x8xbf16>, vector<2x8x8xf32> -> vector<2x8x8xf32>
    %cst_66 = arith.constant -1.000000e+09 : f32
    "tpu.trace_stop"() : () -> ()
    %214 = vector.broadcast %cst_66 : f32 to vector<2x8x8xf32>
    %215 = arith.select %164, %214, %213 : vector<2x8x8xi1>, vector<2x8x8xf32>
    %cst_67 = arith.constant dense<0xFF800000> : vector<2x8xf32>
    %216 = vector.multi_reduction <maximumf>, %215, %cst_67 [2] : vector<2x8x8xf32> to vector<2x8xf32>
    %217 = vector.shape_cast %216 : vector<2x8xf32> to vector<2x8x1xf32>
    %218 = vector.broadcast %217 : vector<2x8x1xf32> to vector<2x8x8xf32>
    %219 = arith.subf %215, %218 : vector<2x8x8xf32>
    %220 = math.exp %219 : vector<2x8x8xf32>
    %cst_68 = arith.constant dense<0.000000e+00> : vector<2x8xf32>
    %221 = vector.multi_reduction <add>, %220, %cst_68 [2] : vector<2x8x8xf32> to vector<2x8xf32>
    %222 = vector.shape_cast %221 : vector<2x8xf32> to vector<2x8x1xf32>
    %223 = tpu.reciprocal %222 {approx = true} : vector<2x8x1xf32> -> vector<2x8x1xf32>
    %224 = vector.broadcast %223 : vector<2x8x1xf32> to vector<2x8x8xf32>
    %225 = arith.mulf %220, %224 : vector<2x8x8xf32>
    %226 = arith.truncf %225 : vector<2x8x8xf32> to vector<2x8x8xbf16>
    "tpu.trace_start"() <{level = 10 : i32, message = "bqk,bkd->bqd"}> : () -> ()
    %cst_69 = arith.constant dense<0.000000e+00> : vector<2x8x8xf32>
    %227 = tpu.matmul %226, %212, %cst_69 {dimension_numbers = #tpu.dot_dimension_numbers<[2], [1], [1], [2], [0, 0, 0, 1, 1, 2], [0], [0]>} : vector<2x8x8xbf16>, vector<2x8x8xbf16>, vector<2x8x8xf32> -> vector<2x8x8xf32>
    "tpu.trace_stop"() : () -> ()
    %228 = vector.extract_strided_slice %150 {offsets = [0, 0, 24], sizes = [2, 8, 8], strides = [1, 1, 1]} : vector<2x8x32xf32> to vector<2x8x8xf32>
    %229 = arith.truncf %228 : vector<2x8x8xf32> to vector<2x8x8xbf16>
    %230 = vector.extract_strided_slice %158 {offsets = [0, 0, 24], sizes = [2, 8, 8], strides = [1, 1, 1]} : vector<2x8x32xf32> to vector<2x8x8xf32>
    %231 = arith.truncf %230 : vector<2x8x8xf32> to vector<2x8x8xbf16>
    %232 = vector.extract_strided_slice %160 {offsets = [0, 0, 24], sizes = [2, 8, 8], strides = [1, 1, 1]} : vector<2x8x32xf32> to vector<2x8x8xf32>
    %233 = arith.truncf %232 : vector<2x8x8xf32> to vector<2x8x8xbf16>
    "tpu.trace_start"() <{level = 10 : i32, message = "bqd,bkd->bqk"}> : () -> ()
    %cst_70 = arith.constant dense<0.000000e+00> : vector<2x8x8xf32>
    %234 = tpu.matmul %229, %231, %cst_70 {dimension_numbers = #tpu.dot_dimension_numbers<[2], [2], [1], [1], [0, 0, 0, 1, 1, 1], [0], [0]>} : vector<2x8x8xbf16>, vector<2x8x8xbf16>, vector<2x8x8xf32> -> vector<2x8x8xf32>
    %cst_71 = arith.constant -1.000000e+09 : f32
    "tpu.trace_stop"() : () -> ()
    %235 = vector.broadcast %cst_71 : f32 to vector<2x8x8xf32>
    %236 = arith.select %164, %235, %234 : vector<2x8x8xi1>, vector<2x8x8xf32>
    %cst_72 = arith.constant dense<0xFF800000> : vector<2x8xf32>
    %237 = vector.multi_reduction <maximumf>, %236, %cst_72 [2] : vector<2x8x8xf32> to vector<2x8xf32>
    %238 = vector.shape_cast %237 : vector<2x8xf32> to vector<2x8x1xf32>
    %239 = vector.broadcast %238 : vector<2x8x1xf32> to vector<2x8x8xf32>
    %240 = arith.subf %236, %239 : vector<2x8x8xf32>
    %241 = math.exp %240 : vector<2x8x8xf32>
    %cst_73 = arith.constant dense<0.000000e+00> : vector<2x8xf32>
    %242 = vector.multi_reduction <add>, %241, %cst_73 [2] : vector<2x8x8xf32> to vector<2x8xf32>
    %243 = vector.shape_cast %242 : vector<2x8xf32> to vector<2x8x1xf32>
    %244 = tpu.reciprocal %243 {approx = true} : vector<2x8x1xf32> -> vector<2x8x1xf32>
    %245 = vector.broadcast %244 : vector<2x8x1xf32> to vector<2x8x8xf32>
    %246 = arith.mulf %241, %245 : vector<2x8x8xf32>
    %247 = arith.truncf %246 : vector<2x8x8xf32> to vector<2x8x8xbf16>
    "tpu.trace_start"() <{level = 10 : i32, message = "bqk,bkd->bqd"}> : () -> ()
    %cst_74 = arith.constant dense<0.000000e+00> : vector<2x8x8xf32>
    %248 = tpu.matmul %247, %233, %cst_74 {dimension_numbers = #tpu.dot_dimension_numbers<[2], [1], [1], [2], [0, 0, 0, 1, 1, 2], [0], [0]>} : vector<2x8x8xbf16>, vector<2x8x8xbf16>, vector<2x8x8xf32> -> vector<2x8x8xf32>
    "tpu.trace_stop"() : () -> ()
    %249 = tpu.concatenate %185, %206, %227, %248 in 2 : vector<2x8x8xf32>, vector<2x8x8xf32>, vector<2x8x8xf32>, vector<2x8x8xf32> -> vector<2x8x32xf32>
    %250 = vector.shape_cast %249 : vector<2x8x32xf32> to vector<16x32xf32>
    %251 = arith.truncf %250 : vector<16x32xf32> to vector<16x32xbf16>
    %c0_75 = arith.constant 0 : index
    %c0_76 = arith.constant 0 : index
    %252 = vector.load %arg11[%c0_75, %c0_76] : memref<32x32xbf16, #tpu.memory_space<vmem>>, vector<32x32xbf16>
    %cst_77 = arith.constant dense<0.000000e+00> : vector<16x32xf32>
    %253 = tpu.matmul %251, %252, %cst_77 {dimension_numbers = #tpu.dot_dimension_numbers<[1], [0], [0], [1], [0, 0, 1, 1], [], []>} : vector<16x32xbf16>, vector<32x32xbf16>, vector<16x32xf32> -> vector<16x32xf32>
    %254 = vector.broadcast %5 : vector<1x32xf32> to vector<16x32xf32>
    %255 = arith.addf %253, %254 : vector<16x32xf32>
    %256 = arith.addf %142, %255 : vector<16x32xf32>
    %cst_78 = arith.constant dense<0.000000e+00> : vector<16xf32>
    %257 = vector.multi_reduction <add>, %256, %cst_78 [1] : vector<16x32xf32> to vector<16xf32>
    %258 = vector.shape_cast %257 : vector<16xf32> to vector<16x1xf32>
    %cst_79 = arith.constant 3.200000e+01 : f32
    %259 = vector.broadcast %cst_79 : f32 to vector<16x1xf32>
    %260 = arith.divf %258, %259 : vector<16x1xf32>
    %261 = vector.broadcast %260 : vector<16x1xf32> to vector<16x32xf32>
    %262 = arith.subf %256, %261 : vector<16x32xf32>
    %263 = arith.mulf %262, %262 : vector<16x32xf32>
    %cst_80 = arith.constant dense<0.000000e+00> : vector<16xf32>
    %264 = vector.multi_reduction <add>, %263, %cst_80 [1] : vector<16x32xf32> to vector<16xf32>
    %265 = vector.shape_cast %264 : vector<16xf32> to vector<16x1xf32>
    %cst_81 = arith.constant 3.200000e+01 : f32
    %266 = vector.broadcast %cst_81 : f32 to vector<16x1xf32>
    %267 = arith.divf %265, %266 : vector<16x1xf32>
    %268 = vector.broadcast %260 : vector<16x1xf32> to vector<16x32xf32>
    %269 = arith.subf %256, %268 : vector<16x32xf32>
    %cst_82 = arith.constant 9.99999974E-6 : f32
    %270 = vector.broadcast %cst_82 : f32 to vector<16x1xf32>
    %271 = arith.addf %267, %270 : vector<16x1xf32>
    %272 = math.rsqrt %271 : vector<16x1xf32>
    %273 = vector.broadcast %272 : vector<16x1xf32> to vector<16x32xf32>
    %274 = arith.mulf %269, %273 : vector<16x32xf32>
    %275 = vector.broadcast %6 : vector<1x32xf32> to vector<16x32xf32>
    %276 = arith.mulf %274, %275 : vector<16x32xf32>
    %277 = vector.broadcast %7 : vector<1x32xf32> to vector<16x32xf32>
    %278 = arith.addf %276, %277 : vector<16x32xf32>
    %279 = arith.truncf %278 : vector<16x32xf32> to vector<16x32xbf16>
    %c0_83 = arith.constant 0 : index
    %c0_84 = arith.constant 0 : index
    %280 = vector.load %arg12[%c0_83, %c0_84] : memref<32x64xbf16, #tpu.memory_space<vmem>>, vector<32x64xbf16>
    %cst_85 = arith.constant dense<0.000000e+00> : vector<16x64xf32>
    %281 = tpu.matmul %279, %280, %cst_85 {dimension_numbers = #tpu.dot_dimension_numbers<[1], [0], [0], [1], [0, 0, 1, 1], [], []>} : vector<16x32xbf16>, vector<32x64xbf16>, vector<16x64xf32> -> vector<16x64xf32>
    %c0_86 = arith.constant 0 : index
    %c0_87 = arith.constant 0 : index
    %282 = vector.load %arg13[%c0_86, %c0_87] : memref<1x64xf32, #tpu.memory_space<vmem>>, vector<1x64xf32>
    %283 = vector.broadcast %282 : vector<1x64xf32> to vector<16x64xf32>
    %284 = arith.addf %281, %283 : vector<16x64xf32>
    %cst_88 = arith.constant 0.000000e+00 : f32
    %285 = vector.broadcast %cst_88 : f32 to vector<16x64xf32>
    %286 = arith.maximumf %284, %285 : vector<16x64xf32>
    %287 = arith.truncf %286 : vector<16x64xf32> to vector<16x64xbf16>
    %c0_89 = arith.constant 0 : index
    %c0_90 = arith.constant 0 : index
    %288 = vector.load %arg14[%c0_89, %c0_90] : memref<64x32xbf16, #tpu.memory_space<vmem>>, vector<64x32xbf16>
    %cst_91 = arith.constant dense<0.000000e+00> : vector<16x32xf32>
    %289 = tpu.matmul %287, %288, %cst_91 {dimension_numbers = #tpu.dot_dimension_numbers<[1], [0], [0], [1], [0, 0, 1, 1], [], []>} : vector<16x64xbf16>, vector<64x32xbf16>, vector<16x32xf32> -> vector<16x32xf32>
    %290 = vector.broadcast %8 : vector<1x32xf32> to vector<16x32xf32>
    %291 = arith.addf %289, %290 : vector<16x32xf32>
    %292 = arith.addf %278, %291 : vector<16x32xf32>
    %cst_92 = arith.constant dense<0.000000e+00> : vector<16xf32>
    %293 = vector.multi_reduction <add>, %292, %cst_92 [1] : vector<16x32xf32> to vector<16xf32>
    %294 = vector.shape_cast %293 : vector<16xf32> to vector<16x1xf32>
    %cst_93 = arith.constant 3.200000e+01 : f32
    %295 = vector.broadcast %cst_93 : f32 to vector<16x1xf32>
    %296 = arith.divf %294, %295 : vector<16x1xf32>
    %297 = vector.broadcast %296 : vector<16x1xf32> to vector<16x32xf32>
    %298 = arith.subf %292, %297 : vector<16x32xf32>
    %299 = arith.mulf %298, %298 : vector<16x32xf32>
    %cst_94 = arith.constant dense<0.000000e+00> : vector<16xf32>
    %300 = vector.multi_reduction <add>, %299, %cst_94 [1] : vector<16x32xf32> to vector<16xf32>
    %301 = vector.shape_cast %300 : vector<16xf32> to vector<16x1xf32>
    %cst_95 = arith.constant 3.200000e+01 : f32
    %302 = vector.broadcast %cst_95 : f32 to vector<16x1xf32>
    %303 = arith.divf %301, %302 : vector<16x1xf32>
    %304 = vector.broadcast %296 : vector<16x1xf32> to vector<16x32xf32>
    %305 = arith.subf %292, %304 : vector<16x32xf32>
    %cst_96 = arith.constant 9.99999974E-6 : f32
    %306 = vector.broadcast %cst_96 : f32 to vector<16x1xf32>
    %307 = arith.addf %303, %306 : vector<16x1xf32>
    %308 = math.rsqrt %307 : vector<16x1xf32>
    %309 = vector.broadcast %308 : vector<16x1xf32> to vector<16x32xf32>
    %310 = arith.mulf %305, %309 : vector<16x32xf32>
    %311 = vector.broadcast %9 : vector<1x32xf32> to vector<16x32xf32>
    %312 = arith.mulf %310, %311 : vector<16x32xf32>
    %313 = vector.broadcast %10 : vector<1x32xf32> to vector<16x32xf32>
    %314 = arith.addf %312, %313 : vector<16x32xf32>
    %315 = vector.shape_cast %314 : vector<16x32xf32> to vector<2x8x32xf32>
    %c0_97 = arith.constant 0 : index
    %c0_98 = arith.constant 0 : index
    %c0_99 = arith.constant 0 : index
    %316 = vector.load %arg16[%c0_97, %c0_98, %c0_99] : memref<2x8x32xf32, #tpu.memory_space<vmem>>, vector<2x8x32xf32>
    tpu.vector_store %arg16[%c0_97, %c0_98, %c0_99], %315 {strides = array<i32>} : memref<2x8x32xf32, #tpu.memory_space<vmem>>, vector<2x8x32xf32>,
    return
  }
  func.func @transform_0(%arg0: i32) -> (i32, i32, i32) {
    %c0_i32 = arith.constant 0 : i32
    %c0_i32_0 = arith.constant 0 : i32
    %c0_i32_1 = arith.constant 0 : i32
    return %arg0, %c0_i32, %c0_i32_0 : i32, i32, i32
  }
  func.func @transform_1(%arg0: i32) -> (i32, i32, i32) {
    %c0_i32 = arith.constant 0 : i32
    %c0_i32_0 = arith.constant 0 : i32
    %c0_i32_1 = arith.constant 0 : i32
    return %arg0, %c0_i32, %c0_i32_0 : i32, i32, i32
  }
  func.func @transform_2(%arg0: i32) -> (i32, i32, i32) {
    %c0_i32 = arith.constant 0 : i32
    %c0_i32_0 = arith.constant 0 : i32
    %c0_i32_1 = arith.constant 0 : i32
    return %arg0, %c0_i32, %c0_i32_0 : i32, i32, i32
  }
  func.func @transform_3(%arg0: i32) -> (i32, i32, i32) {
    %c0_i32 = arith.constant 0 : i32
    %c0_i32_0 = arith.constant 0 : i32
    %c0_i32_1 = arith.constant 0 : i32
    return %arg0, %c0_i32, %c0_i32_0 : i32, i32, i32
  }
  func.func @transform_4(%arg0: i32) -> (i32, i32) {
    %c0_i32 = arith.constant 0 : i32
    %c0_i32_0 = arith.constant 0 : i32
    %c0_i32_1 = arith.constant 0 : i32
    return %c0_i32, %c0_i32_0 : i32, i32
  }
  func.func @transform_5(%arg0: i32) -> (i32, i32) {
    %c0_i32 = arith.constant 0 : i32
    %c0_i32_0 = arith.constant 0 : i32
    %c0_i32_1 = arith.constant 0 : i32
    return %c0_i32, %c0_i32_0 : i32, i32
  }
  func.func @transform_6(%arg0: i32) -> (i32, i32) {
    %c0_i32 = arith.constant 0 : i32
    %c0_i32_0 = arith.constant 0 : i32
    %c0_i32_1 = arith.constant 0 : i32
    return %c0_i32, %c0_i32_0 : i32, i32
  }
  func.func @transform_7(%arg0: i32) -> (i32, i32) {
    %c0_i32 = arith.constant 0 : i32
    %c0_i32_0 = arith.constant 0 : i32
    %c0_i32_1 = arith.constant 0 : i32
    return %c0_i32, %c0_i32_0 : i32, i32
  }
  func.func @transform_8(%arg0: i32) -> (i32, i32) {
    %c0_i32 = arith.constant 0 : i32
    %c0_i32_0 = arith.constant 0 : i32
    %c0_i32_1 = arith.constant 0 : i32
    return %c0_i32, %c0_i32_0 : i32, i32
  }
  func.func @transform_9(%arg0: i32) -> (i32, i32) {
    %c0_i32 = arith.constant 0 : i32
    %c0_i32_0 = arith.constant 0 : i32
    %c0_i32_1 = arith.constant 0 : i32
    return %c0_i32, %c0_i32_0 : i32, i32
  }
  func.func @transform_10(%arg0: i32) -> (i32, i32) {
    %c0_i32 = arith.constant 0 : i32
    %c0_i32_0 = arith.constant 0 : i32
    %c0_i32_1 = arith.constant 0 : i32
    return %c0_i32, %c0_i32_0 : i32, i32
  }
  func.func @transform_11(%arg0: i32) -> (i32, i32) {
    %c0_i32 = arith.constant 0 : i32
    %c0_i32_0 = arith.constant 0 : i32
    %c0_i32_1 = arith.constant 0 : i32
    return %c0_i32, %c0_i32_0 : i32, i32
  }
  func.func @transform_12(%arg0: i32) -> (i32, i32) {
    %c0_i32 = arith.constant 0 : i32
    %c0_i32_0 = arith.constant 0 : i32
    %c0_i32_1 = arith.constant 0 : i32
    return %c0_i32, %c0_i32_0 : i32, i32
  }
  func.func @transform_13(%arg0: i32) -> (i32, i32) {
    %c0_i32 = arith.constant 0 : i32
    %c0_i32_0 = arith.constant 0 : i32
    %c0_i32_1 = arith.constant 0 : i32
    return %c0_i32, %c0_i32_0 : i32, i32
  }
  func.func @transform_14(%arg0: i32) -> (i32, i32) {
    %c0_i32 = arith.constant 0 : i32
    %c0_i32_0 = arith.constant 0 : i32
    %c0_i32_1 = arith.constant 0 : i32
    return %c0_i32, %c0_i32_0 : i32, i32
  }
  func.func @transform_15(%arg0: i32) -> (i32, i32, i32) {
    %c0_i32 = arith.constant 0 : i32
    %c0_i32_0 = arith.constant 0 : i32
    %c0_i32_1 = arith.constant 0 : i32
    return %arg0, %c0_i32, %c0_i32_0 : i32, i32, i32
  }
}

</mosaic_0001>

<llo_original>
// kernel: _lambda_.1
$region0: #{_lambda_.1}
  #allocation0 [shape = 'u32[]', space=smem, size = 0x4, offset = 0x4, fixed_abs, tag = 'smem constant byte address 0x4 - core index']
  #allocation1 [shape = 'u32[144,128]{1,0:T(1,128)}', space=vmem, size = 0x12000, scoped, tag = 'internal scratch']
  %s0 = inlined_call_operand.vmem [shape: f32[2,8,32], index: 0, kind: input, shape index: {}]
  %s1 = inlined_call_operand.vmem [shape: f32[2,8,16], index: 1, kind: input, shape index: {}]
  %s2 = inlined_call_operand.vmem [shape: bf16[2,8,8], index: 2, kind: input, shape index: {}]
  %s3 = inlined_call_operand.vmem [shape: bf16[2,8,8], index: 3, kind: input, shape index: {}]
  %s4 = inlined_call_operand.vmem [shape: bf16[32,96], index: 4, kind: input, shape index: {}]
  %s5 = inlined_call_operand.hbm [shape: f32[1,96], index: 5, kind: input, shape index: {}]
  %s6 = inlined_call_operand.vmem [shape: bf16[32,32], index: 6, kind: input, shape index: {}]
  %s7 = inlined_call_operand.vmem [shape: bf16[32,32], index: 7, kind: input, shape index: {}]
  %s8 = inlined_call_operand.hbm [shape: bf16[16,64], index: 8, kind: input, shape index: {}]
  %s9 = inlined_call_operand.vmem [shape: f32[1,64], index: 9, kind: input, shape index: {}]
  %s10 = inlined_call_operand.hbm [shape: bf16[32,32], index: 10, kind: input, shape index: {}]
  %s11 = inlined_call_operand.vmem [shape: bf16[32,64], index: 11, kind: input, shape index: {}]
  %s12 = inlined_call_operand.hbm [shape: f32[1,64], index: 12, kind: input, shape index: {}]
  %s13 = inlined_call_operand.vmem [shape: bf16[64,32], index: 13, kind: input, shape index: {}]
  %s14 = inlined_call_operand.vmem [shape: f32[10,32], index: 14, kind: input, shape index: {}]
  %s15 = inlined_call_operand.hbm [shape: f32[2,8,32], index: 15, kind: output, shape index: {}]
  %s16 = sld [smem:[#allocation0]]
  $region86: #{_lambda_.1} parent=0
    _
  %s18 = ssub.s32 1, %s16
  %s19 = scalar_select 0, %s18, %s16
  $region1: #{_lambda_.1} parent=0
    #allocation2 [shape = 'u8[512]{0}', space=vmem, size = 0x400, scoped, tag = 'input window, operand 5, single buffered']
    #allocation3 [shape = 's32[1]{0}', space=sflag, size = 0x4, scoped, tag = 'scoped memory for _lambda_.1']
    #allocation4 [shape = 's32[1]{0}', space=sflag, size = 0x4, scoped, tag = 'scoped memory for _lambda_.1']
    #allocation5 [shape = 'u8[4096]{0}', space=vmem, size = 0x1000, scoped, tag = 'input window, operand 8, single buffered']
    #allocation6 [shape = 's32[1]{0}', space=sflag, size = 0x4, scoped, tag = 'scoped memory for _lambda_.1']
    #allocation7 [shape = 'u8[8192]{0}', space=vmem, size = 0x2000, scoped, tag = 'input window, operand 10, single buffered']
    #allocation8 [shape = 'u8[512]{0}', space=vmem, size = 0x400, scoped, tag = 'input window, operand 12, single buffered']
    #allocation9 [shape = 's32[1]{0}', space=sflag, size = 0x4, scoped, tag = 'scoped memory for _lambda_.1']
    #allocation10 [shape = 'u8[8192]{0}', space=vmem, size = 0x2000, scoped, tag = 'output window, operand 0, single buffered']
    %20 = vsyncpa [#allocation3], 0
    %21 = vsyncpa [#allocation6], 0
    %22 = vsyncpa [#allocation9], 0
    %23 = vsyncpa [#allocation4], 0
    // Predicated region
    $region2: #{_lambda_.1} parent=1 // pred_check
      _
    $region3: #{_lambda_.1} parent=1 // pred_check_branch
      %25 = sbr.rel (0) target = $region5
    $region4: #{_lambda_.1} parent=1 // pred_region
      _
    $region5: #{_lambda_.1} parent=1 // pred_fallthru
      _
    // Predicated region
    $region6: #{_lambda_.1} parent=1 // pred_check
      _
    $region7: #{_lambda_.1} parent=1 // pred_check_branch
      %27 = sbr.rel (0) target = $region9
    $region8: #{_lambda_.1} parent=1 // pred_region
      _
    $region9: #{_lambda_.1} parent=1 // pred_fallthru
      _
    // Predicated region
    $region10: #{_lambda_.1} parent=1 // pred_check
      _
    $region11: #{_lambda_.1} parent=1 // pred_check_branch
      %29 = sbr.rel (0) target = $region13
    $region12: #{_lambda_.1} parent=1 // pred_region
      _
    $region13: #{_lambda_.1} parent=1 // pred_fallthru
      _
    // Predicated region
    $region14: #{_lambda_.1} parent=1 // pred_check
      _
    $region15: #{_lambda_.1} parent=1 // pred_check_branch
      %31 = sbr.rel (0) target = $region17
    $region16: #{_lambda_.1} parent=1 // pred_region
      _
    $region17: #{_lambda_.1} parent=1 // pred_fallthru
      _
    // Predicated region
    $region18: #{_lambda_.1} parent=1 // pred_check
      _
    $region19: #{_lambda_.1} parent=1 // pred_check_branch
      %33 = sbr.rel (0) target = $region21
    $region20: #{_lambda_.1} parent=1 // pred_region
      _
    $region21: #{_lambda_.1} parent=1 // pred_fallthru
      _
    // Predicated region
    $region22: #{_lambda_.1} parent=1 // pred_check
      _
    $region23: #{_lambda_.1} parent=1 // pred_check_branch
      %35 = sbr.rel (0) target = $region25
    $region24: #{_lambda_.1} parent=1 // pred_region
      %s37 = ssub.s32 16, 16
      %38 = vsyncadd [#allocation3], %s37
      %s40 = sshll.u32 [#allocation2], 4
      %s41 = int_to_ptr.vmem [resolvable:$true] %s40
      %43 = dma.hbm_to_vmem [thread:$0]  %s5, 16, %s41, [#allocation3]
    $region25: #{_lambda_.1} parent=1 // pred_fallthru
      _
    // Predicated region
    $region26: #{_lambda_.1} parent=1 // pred_check
      _
    $region27: #{_lambda_.1} parent=1 // pred_check_branch
      %45 = sbr.rel (0) target = $region29
    $region28: #{_lambda_.1} parent=1 // pred_region
      _
    $region29: #{_lambda_.1} parent=1 // pred_fallthru
      _
    // Predicated region
    $region30: #{_lambda_.1} parent=1 // pred_check
      _
    $region31: #{_lambda_.1} parent=1 // pred_check_branch
      %47 = sbr.rel (0) target = $region33
    $region32: #{_lambda_.1} parent=1 // pred_region
      _
    $region33: #{_lambda_.1} parent=1 // pred_fallthru
      _
    // Predicated region
    $region34: #{_lambda_.1} parent=1 // pred_check
      _
    $region35: #{_lambda_.1} parent=1 // pred_check_branch
      %49 = sbr.rel (0) target = $region37
    $region36: #{_lambda_.1} parent=1 // pred_region
      %s51 = ssub.s32 128, 128
      %52 = vsyncadd [#allocation6], %s51
      %s53 = sshll.u32 [#allocation5], 4
      %s54 = int_to_ptr.vmem [resolvable:$true] %s53
      %59 = dma.hbm_to_vmem [thread:$0]  %s8, 128, %s54, [#allocation6], 64, 64, 4
    $region37: #{_lambda_.1} parent=1 // pred_fallthru
      _
    // Predicated region
    $region38: #{_lambda_.1} parent=1 // pred_check
      _
    $region39: #{_lambda_.1} parent=1 // pred_check_branch
      %61 = sbr.rel (0) target = $region41
    $region40: #{_lambda_.1} parent=1 // pred_region
      _
    $region41: #{_lambda_.1} parent=1 // pred_fallthru
      _
    // Predicated region
    $region42: #{_lambda_.1} parent=1 // pred_check
      _
    $region43: #{_lambda_.1} parent=1 // pred_check_branch
      %63 = sbr.rel (0) target = $region45
    $region44: #{_lambda_.1} parent=1 // pred_region
      %s65 = ssub.s32 256, 256
      %66 = vsyncadd [#allocation6], %s65
      %s67 = sshll.u32 [#allocation7], 4
      %s68 = int_to_ptr.vmem [resolvable:$true] %s67
      %73 = dma.hbm_to_vmem [thread:$0]  %s10, 256, %s68, [#allocation6], 64, 64, 4
    $region45: #{_lambda_.1} parent=1 // pred_fallthru
      _
    // Predicated region
    $region46: #{_lambda_.1} parent=1 // pred_check
      _
    $region47: #{_lambda_.1} parent=1 // pred_check_branch
      %75 = sbr.rel (0) target = $region49
    $region48: #{_lambda_.1} parent=1 // pred_region
      _
    $region49: #{_lambda_.1} parent=1 // pred_fallthru
      _
    // Predicated region
    $region50: #{_lambda_.1} parent=1 // pred_check
      _
    $region51: #{_lambda_.1} parent=1 // pred_check_branch
      %77 = sbr.rel (0) target = $region53
    $region52: #{_lambda_.1} parent=1 // pred_region
      %s79 = ssub.s32 16, 16
      %80 = vsyncadd [#allocation9], %s79
      %s82 = sshll.u32 [#allocation8], 4
      %s83 = int_to_ptr.vmem [resolvable:$true] %s82
      %85 = dma.hbm_to_vmem [thread:$0]  %s12, 16, %s83, [#allocation9]
    $region53: #{_lambda_.1} parent=1 // pred_fallthru
      _
    // Predicated region
    $region54: #{_lambda_.1} parent=1 // pred_check
      _
    $region55: #{_lambda_.1} parent=1 // pred_check_branch
      %87 = sbr.rel (0) target = $region57
    $region56: #{_lambda_.1} parent=1 // pred_region
      _
    $region57: #{_lambda_.1} parent=1 // pred_fallthru
      _
    // Predicated region
    $region58: #{_lambda_.1} parent=1 // pred_check
      _
    $region59: #{_lambda_.1} parent=1 // pred_check_branch
      %89 = sbr.rel (0) target = $region61
    $region60: #{_lambda_.1} parent=1 // pred_region
      _
    $region61: #{_lambda_.1} parent=1 // pred_fallthru
      _
    // Predicated region
    $region62: #{_lambda_.1} parent=1 // pred_check
      _
    $region63: #{_lambda_.1} parent=1 // pred_check_branch
      %91 = sbr.rel (0) target = $region65
    $region64: #{_lambda_.1} parent=1 // pred_region
      %92 = dma.done [#allocation3], 16
    $region65: #{_lambda_.1} parent=1 // pred_fallthru
      _
    // Predicated region
    $region66: #{_lambda_.1} parent=1 // pred_check
      _
    $region67: #{_lambda_.1} parent=1 // pred_check_branch
      %94 = sbr.rel (0) target = $region69
    $region68: #{_lambda_.1} parent=1 // pred_region
      %95 = dma.done [#allocation6], 128
    $region69: #{_lambda_.1} parent=1 // pred_fallthru
      _
    // Predicated region
    $region70: #{_lambda_.1} parent=1 // pred_check
      _
    $region71: #{_lambda_.1} parent=1 // pred_check_branch
      %97 = sbr.rel (0) target = $region73
    $region72: #{_lambda_.1} parent=1 // pred_region
      %98 = dma.done [#allocation6], 256
    $region73: #{_lambda_.1} parent=1 // pred_fallthru
      _
    // Predicated region
    $region74: #{_lambda_.1} parent=1 // pred_check
      _
    $region75: #{_lambda_.1} parent=1 // pred_check_branch
      %100 = sbr.rel (0) target = $region77
    $region76: #{_lambda_.1} parent=1 // pred_region
      %101 = dma.done [#allocation9], 16
    $region77: #{_lambda_.1} parent=1 // pred_fallthru
      _
    %v103 = vld [vmem:[%s14] sm:$0xff]
    %v104 = vld [vmem:[%s14 + $0x8] sm:$0x3]
    %v105 = vld [vmem:[%s0] sm:$0xff]
    %v106 = vld [vmem:[%s0 + $0x8] sm:$0xff]
    %v107 = vpack.c.bf16 %v106, %v105
    %v108 = vld [vmem:[%s4] sm:$0xf]
    %v109 = vld [vmem:[%s4 + $0x4] sm:$0xf]
    %v110 = vld [vmem:[%s4 + $0x8] sm:$0xf]
    %v111 = vld [vmem:[%s4 + $0xc] sm:$0xf]
    %v112 = vld [vmem:[#allocation2] sm:$0x1]
    %v114 = vlaneseq
    %v115 = vshrl.u32 %v114, 7
    %v116 = vsub.s32 0, %v115
    %v117 = vrot.slane %v112, %v116
    %v123 = vunpack.c.l.b16 %v108
    %v124 = vunpack.c.l.b16 %v109
    %v125 = vunpack.c.l.b16 %v110
    %v126 = vunpack.c.l.b16 %v111
    %v127 = vpack.c.b16 %v124, %v123
    %v128 = vpack.c.b16 %v126, %v125
    %vm131 = vcmask 261120
    %v133 = vsel %vm131, %v107, 0
    %135 = vmatprep.subr.bf16.mxu0 0
    %136 = vmatpush1.bf16.msra.mxu0 %v127
    %137 = vmatprep.subr.bf16.mxu0 0
    %138 = vmatpush1.bf16.msra.mxu0 %v128
    %139 = vmatprep.subr.bf16.mxu0 0
    %140 = vmatpush1.bf16.msra.mxu0 0
    %141 = vmatprep.subr.bf16.mxu0 0
    %142 = vmatpush1.bf16.msra.mxu0 0
    %143 = vmatprep.subr.bf16.mxu0 0
    %144 = vmatpush1.bf16.msra.mxu0 0
    %145 = vmatprep.subr.bf16.mxu0 0
    %146 = vmatpush1.bf16.msra.mxu0 0
    %147 = vmatprep.subr.bf16.mxu0 0
    %148 = vmatpush1.bf16.msra.mxu0 0
    %149 = vmatprep.subr.bf16.mxu0 0
    %150 = vmatpush1.bf16.msra.mxu0 0
    %151 = vmatprep.subr.bf16.mxu0 0
    %152 = vmatpush1.bf16.msra.mxu0 0
    %153 = vmatprep.subr.bf16.mxu0 0
    %154 = vmatpush1.bf16.msra.mxu0 0
    %155 = vmatprep.subr.bf16.mxu0 0
    %156 = vmatpush1.bf16.msra.mxu0 0
    %157 = vmatprep.subr.bf16.mxu0 0
    %158 = vmatpush1.bf16.msra.mxu0 0
    %159 = vmatprep.subr.bf16.mxu0 0
    %160 = vmatpush1.bf16.msra.mxu0 0
    %161 = vmatprep.subr.bf16.mxu0 0
    %162 = vmatpush1.bf16.msra.mxu0 0
    %163 = vmatprep.subr.bf16.mxu0 0
    %164 = vmatpush1.bf16.msra.mxu0 0
    %165 = vmatprep.subr.bf16.mxu0 0
    %166 = vmatpush1.bf16.msra.mxu0 0
    %167 = vmatprep.mubr.bf16.mxu0 0
    %168 = vmatmul.mubr.bf16.gmra.mrb[0].mxu0 %v133
    %v169 = vpop.f32.mrb[0].mxu0
    %v170 = vadd.f32 %v117, %v169
    %v171 = vpop.f32.mrb[0].mxu0
    %v172 = vpop.f32.mrb[0].mxu0
    %v173 = vadd.f32 %v117, %v172
    %v174 = vpop.f32.mrb[0].mxu0
    %175 = vdwg.mxu0
    %v176 = vld [vmem:[%s2] sm:$0xf]
    %v177 = vld [vmem:[%s2 + $0x4] sm:$0xf]
    %v178 = vunpack.c.l.bf16 %v176
    %v179 = vunpack.c.l.bf16 %v177
    %vm180 = vcmp.lt.f32.partialorder %v178, 0.5
    %vm181 = vcmp.lt.f32.partialorder %v179, 0.5
    %v182 = vpack.c.bf16 %v170, %v170
    %v183 = vpack.c.bf16 %v173, %v173
    %185 = vrot.lane.b32.xlu0 %v182, 96
    %v186 = vpop.permute.xlu0 %185
    %vm187 = vcmask 64512
    %v189 = vsel %vm187, %v182, 0
    %v192 = vsel %vm187, %v186, 0
    %194 = vmatprep.subr.bf16.mxu0 0
    %195 = vmatpush1.bf16.xpose.msra.mxu0 %v192
    %196 = vmatprep.subr.bf16.mxu0 0
    %197 = vmatpush1.bf16.xpose.msra.mxu0 0
    %198 = vmatprep.subr.bf16.mxu0 0
    %199 = vmatpush1.bf16.xpose.msra.mxu0 0
    %200 = vmatprep.subr.bf16.mxu0 0
    %201 = vmatpush1.bf16.xpose.msra.mxu0 0
    %202 = vmatprep.subr.bf16.mxu0 0
    %203 = vmatpush1.bf16.xpose.msra.mxu0 0
    %204 = vmatprep.subr.bf16.mxu0 0
    %205 = vmatpush1.bf16.xpose.msra.mxu0 0
    %206 = vmatprep.subr.bf16.mxu0 0
    %207 = vmatpush1.bf16.xpose.msra.mxu0 0
    %208 = vmatprep.subr.bf16.mxu0 0
    %209 = vmatpush1.bf16.xpose.msra.mxu0 0
    %210 = vmatprep.subr.bf16.mxu0 0
    %211 = vmatpush1.bf16.xpose.msra.mxu0 0
    %212 = vmatprep.subr.bf16.mxu0 0
    %213 = vmatpush1.bf16.xpose.msra.mxu0 0
    %214 = vmatprep.subr.bf16.mxu0 0
    %215 = vmatpush1.bf16.xpose.msra.mxu0 0
    %216 = vmatprep.subr.bf16.mxu0 0
    %217 = vmatpush1.bf16.xpose.msra.mxu0 0
    %218 = vmatprep.subr.bf16.mxu0 0
    %219 = vmatpush1.bf16.xpose.msra.mxu0 0
    %220 = vmatprep.subr.bf16.mxu0 0
    %221 = vmatpush1.bf16.xpose.msra.mxu0 0
    %222 = vmatprep.subr.bf16.mxu0 0
    %223 = vmatpush1.bf16.xpose.msra.mxu0 0
    %224 = vmatprep.subr.bf16.mxu0 0
    %225 = vmatpush1.bf16.xpose.msra.mxu0 0
    %226 = vmatprep.mubr.bf16.mxu0 0
    %227 = vmatmul.mubr.bf16.gmra.mrb[0].mxu0 %v189
    %v228 = vpop.f32.mrb[0].mxu0
    %v229 = vadd.f32 0.0, %v228
    %v230 = vpop.f32.mrb[0].mxu0
    %v231 = vpop.f32.mrb[0].mxu0
    %v232 = vpop.f32.mrb[0].mxu0
    %233 = vdwg.mxu0
    %235 = vrot.lane.b32.xlu0 %v183, 96
    %v236 = vpop.permute.xlu0 %235
    %v238 = vsel %vm187, %v183, 0
    %v241 = vsel %vm187, %v236, 0
    %243 = vmatprep.subr.bf16.mxu0 0
    %244 = vmatpush1.bf16.xpose.msra.mxu0 %v241
    %245 = vmatprep.subr.bf16.mxu0 0
    %246 = vmatpush1.bf16.xpose.msra.mxu0 0
    %247 = vmatprep.subr.bf16.mxu0 0
    %248 = vmatpush1.bf16.xpose.msra.mxu0 0
    %249 = vmatprep.subr.bf16.mxu0 0
    %250 = vmatpush1.bf16.xpose.msra.mxu0 0
    %251 = vmatprep.subr.bf16.mxu0 0
    %252 = vmatpush1.bf16.xpose.msra.mxu0 0
    %253 = vmatprep.subr.bf16.mxu0 0
    %254 = vmatpush1.bf16.xpose.msra.mxu0 0
    %255 = vmatprep.subr.bf16.mxu0 0
    %256 = vmatpush1.bf16.xpose.msra.mxu0 0
    %257 = vmatprep.subr.bf16.mxu0 0
    %258 = vmatpush1.bf16.xpose.msra.mxu0 0
    %259 = vmatprep.subr.bf16.mxu0 0
    %260 = vmatpush1.bf16.xpose.msra.mxu0 0
    %261 = vmatprep.subr.bf16.mxu0 0
    %262 = vmatpush1.bf16.xpose.msra.mxu0 0
    %263 = vmatprep.subr.bf16.mxu0 0
    %264 = vmatpush1.bf16.xpose.msra.mxu0 0
    %265 = vmatprep.subr.bf16.mxu0 0
    %266 = vmatpush1.bf16.xpose.msra.mxu0 0
    %267 = vmatprep.subr.bf16.mxu0 0
    %268 = vmatpush1.bf16.xpose.msra.mxu0 0
    %269 = vmatprep.subr.bf16.mxu0 0
    %270 = vmatpush1.bf16.xpose.msra.mxu0 0
    %271 = vmatprep.subr.bf16.mxu0 0
    %272 = vmatpush1.bf16.xpose.msra.mxu0 0
    %273 = vmatprep.subr.bf16.mxu0 0
    %274 = vmatpush1.bf16.xpose.msra.mxu0 0
    %275 = vmatprep.mubr.bf16.mxu0 0
    %276 = vmatmul.mubr.bf16.gmra.mrb[0].mxu0 %v238
    %v277 = vpop.f32.mrb[0].mxu0
    %v278 = vadd.f32 0.0, %v277
    %v279 = vpop.f32.mrb[0].mxu0
    %v280 = vpop.f32.mrb[0].mxu0
    %v281 = vpop.f32.mrb[0].mxu0
    %282 = vdwg.mxu0
    %v283 = vsel %vm180, -1e+09, %v229
    %v284 = vsel %vm181, -1e+09, %v278
    %v285 = vsel %vm187, %v283, -inf
    %286 = vmax.xlane.f32.xlu0 %v285
    %v287 = vpop.xlane.xlu0 %286
    %v288 = vsel %vm187, %v284, -inf
    %289 = vmax.xlane.f32.xlu0 %v288
    %v290 = vpop.xlane.xlu0 %289
    %v291 = vsub.f32 %v283, %v287
    %v292 = vsub.f32 %v284, %v290
    %v293 = vmul.f32 %v291, 1.442695
    %v294 = vpow.pop %v293
    %v295 = vmul.f32 %v292, 1.442695
    %v296 = vpow.pop %v295
    %v297 = vsel %vm187, %v294, 0.0
    %298 = vadd.xlane.f32.xlu0 %v297
    %v299 = vpop.xlane.xlu0 %298
    %v300 = vsel %vm187, %v296, 0.0
    %301 = vadd.xlane.f32.xlu0 %v300
    %v302 = vpop.xlane.xlu0 %301
    %v303 = vrcp.pop %v299
    %v304 = vrcp.pop %v302
    %v305 = vmul.f32 %v294, %v303
    %v306 = vmul.f32 %v296, %v304
    %v307 = vpack.c.bf16 %v305, %v305
    %v308 = vpack.c.bf16 %v306, %v306
    %309 = vrot.lane.b32.xlu0 %v182, 64
    %v310 = vpop.permute.xlu0 %309
    %v312 = vsel %vm187, %v307, 0
    %vm314 = vcmask 1043456
    %v316 = vsel %vm314, %v310, 0
    %318 = vmatprep.subr.bf16.mxu0 0
    %319 = vmatpush1.bf16.msra.mxu0 %v316
    %320 = vmatprep.subr.bf16.mxu0 0
    %321 = vmatpush1.bf16.msra.mxu0 0
    %322 = vmatprep.subr.bf16.mxu0 0
    %323 = vmatpush1.bf16.msra.mxu0 0
    %324 = vmatprep.subr.bf16.mxu0 0
    %325 = vmatpush1.bf16.msra.mxu0 0
    %326 = vmatprep.subr.bf16.mxu0 0
    %327 = vmatpush1.bf16.msra.mxu0 0
    %328 = vmatprep.subr.bf16.mxu0 0
    %329 = vmatpush1.bf16.msra.mxu0 0
    %330 = vmatprep.subr.bf16.mxu0 0
    %331 = vmatpush1.bf16.msra.mxu0 0
    %332 = vmatprep.subr.bf16.mxu0 0
    %333 = vmatpush1.bf16.msra.mxu0 0
    %334 = vmatprep.subr.bf16.mxu0 0
    %335 = vmatpush1.bf16.msra.mxu0 0
    %336 = vmatprep.subr.bf16.mxu0 0
    %337 = vmatpush1.bf16.msra.mxu0 0
    %338 = vmatprep.subr.bf16.mxu0 0
    %339 = vmatpush1.bf16.msra.mxu0 0
    %340 = vmatprep.subr.bf16.mxu0 0
    %341 = vmatpush1.bf16.msra.mxu0 0
    %342 = vmatprep.subr.bf16.mxu0 0
    %343 = vmatpush1.bf16.msra.mxu0 0
    %344 = vmatprep.subr.bf16.mxu0 0
    %345 = vmatpush1.bf16.msra.mxu0 0
    %346 = vmatprep.subr.bf16.mxu0 0
    %347 = vmatpush1.bf16.msra.mxu0 0
    %348 = vmatprep.subr.bf16.mxu0 0
    %349 = vmatpush1.bf16.msra.mxu0 0
    %350 = vmatprep.mubr.bf16.mxu0 0
    %351 = vmatmul.mubr.bf16.gmra.mrb[0].mxu0 %v312
    %v352 = vpop.f32.mrb[0].mxu0
    %v353 = vadd.f32 0.0, %v352
    %v354 = vpop.f32.mrb[0].mxu0
    %v355 = vpop.f32.mrb[0].mxu0
    %v356 = vpop.f32.mrb[0].mxu0
    %357 = vdwg.mxu0
    %358 = vrot.lane.b32.xlu0 %v183, 64
    %v359 = vpop.permute.xlu0 %358
    %v361 = vsel %vm187, %v308, 0
    %v364 = vsel %vm314, %v359, 0
    %366 = vmatprep.subr.bf16.mxu0 0
    %367 = vmatpush1.bf16.msra.mxu0 %v364
    %368 = vmatprep.subr.bf16.mxu0 0
    %369 = vmatpush1.bf16.msra.mxu0 0
    %370 = vmatprep.subr.bf16.mxu0 0
    %371 = vmatpush1.bf16.msra.mxu0 0
    %372 = vmatprep.subr.bf16.mxu0 0
    %373 = vmatpush1.bf16.msra.mxu0 0
    %374 = vmatprep.subr.bf16.mxu0 0
    %375 = vmatpush1.bf16.msra.mxu0 0
    %376 = vmatprep.subr.bf16.mxu0 0
    %377 = vmatpush1.bf16.msra.mxu0 0
    %378 = vmatprep.subr.bf16.mxu0 0
    %379 = vmatpush1.bf16.msra.mxu0 0
    %380 = vmatprep.subr.bf16.mxu0 0
    %381 = vmatpush1.bf16.msra.mxu0 0
    %382 = vmatprep.subr.bf16.mxu0 0
    %383 = vmatpush1.bf16.msra.mxu0 0
    %384 = vmatprep.subr.bf16.mxu0 0
    %385 = vmatpush1.bf16.msra.mxu0 0
    %386 = vmatprep.subr.bf16.mxu0 0
    %387 = vmatpush1.bf16.msra.mxu0 0
    %388 = vmatprep.subr.bf16.mxu0 0
    %389 = vmatpush1.bf16.msra.mxu0 0
    %390 = vmatprep.subr.bf16.mxu0 0
    %391 = vmatpush1.bf16.msra.mxu0 0
    %392 = vmatprep.subr.bf16.mxu0 0
    %393 = vmatpush1.bf16.msra.mxu0 0
    %394 = vmatprep.subr.bf16.mxu0 0
    %395 = vmatpush1.bf16.msra.mxu0 0
    %396 = vmatprep.subr.bf16.mxu0 0
    %397 = vmatpush1.bf16.msra.mxu0 0
    %398 = vmatprep.mubr.bf16.mxu0 0
    %399 = vmatmul.mubr.bf16.gmra.mrb[0].mxu0 %v361
    %v400 = vpop.f32.mrb[0].mxu0
    %v401 = vadd.f32 0.0, %v400
    %v402 = vpop.f32.mrb[0].mxu0
    %v403 = vpop.f32.mrb[0].mxu0
    %v404 = vpop.f32.mrb[0].mxu0
    %405 = vdwg.mxu0
    %406 = vrot.lane.b32.xlu0 %v182, 120
    %v407 = vpop.permute.xlu0 %406
    %408 = vrot.lane.b32.xlu0 %v182, 88
    %v409 = vpop.permute.xlu0 %408
    %v411 = vsel %vm187, %v407, 0
    %v414 = vsel %vm187, %v409, 0
    %416 = vmatprep.subr.bf16.mxu0 0
    %417 = vmatpush1.bf16.xpose.msra.mxu0 %v414
    %418 = vmatprep.subr.bf16.mxu0 0
    %419 = vmatpush1.bf16.xpose.msra.mxu0 0
    %420 = vmatprep.subr.bf16.mxu0 0
    %421 = vmatpush1.bf16.xpose.msra.mxu0 0
    %422 = vmatprep.subr.bf16.mxu0 0
    %423 = vmatpush1.bf16.xpose.msra.mxu0 0
    %424 = vmatprep.subr.bf16.mxu0 0
    %425 = vmatpush1.bf16.xpose.msra.mxu0 0
    %426 = vmatprep.subr.bf16.mxu0 0
    %427 = vmatpush1.bf16.xpose.msra.mxu0 0
    %428 = vmatprep.subr.bf16.mxu0 0
    %429 = vmatpush1.bf16.xpose.msra.mxu0 0
    %430 = vmatprep.subr.bf16.mxu0 0
    %431 = vmatpush1.bf16.xpose.msra.mxu0 0
    %432 = vmatprep.subr.bf16.mxu0 0
    %433 = vmatpush1.bf16.xpose.msra.mxu0 0
    %434 = vmatprep.subr.bf16.mxu0 0
    %435 = vmatpush1.bf16.xpose.msra.mxu0 0
    %436 = vmatprep.subr.bf16.mxu0 0
    %437 = vmatpush1.bf16.xpose.msra.mxu0 0
    %438 = vmatprep.subr.bf16.mxu0 0
    %439 = vmatpush1.bf16.xpose.msra.mxu0 0
    %440 = vmatprep.subr.bf16.mxu0 0
    %441 = vmatpush1.bf16.xpose.msra.mxu0 0
    %442 = vmatprep.subr.bf16.mxu0 0
    %443 = vmatpush1.bf16.xpose.msra.mxu0 0
    %444 = vmatprep.subr.bf16.mxu0 0
    %445 = vmatpush1.bf16.xpose.msra.mxu0 0
    %446 = vmatprep.subr.bf16.mxu0 0
    %447 = vmatpush1.bf16.xpose.msra.mxu0 0
    %448 = vmatprep.mubr.bf16.mxu0 0
    %449 = vmatmul.mubr.bf16.gmra.mrb[0].mxu0 %v411
    %v450 = vpop.f32.mrb[0].mxu0
    %v451 = vadd.f32 0.0, %v450
    %v452 = vpop.f32.mrb[0].mxu0
    %v453 = vpop.f32.mrb[0].mxu0
    %v454 = vpop.f32.mrb[0].mxu0
    %455 = vdwg.mxu0
    %456 = vrot.lane.b32.xlu0 %v183, 120
    %v457 = vpop.permute.xlu0 %456
    %458 = vrot.lane.b32.xlu0 %v183, 88
    %v459 = vpop.permute.xlu0 %458
    %v461 = vsel %vm187, %v457, 0
    %v464 = vsel %vm187, %v459, 0
    %466 = vmatprep.subr.bf16.mxu0 0
    %467 = vmatpush1.bf16.xpose.msra.mxu0 %v464
    %468 = vmatprep.subr.bf16.mxu0 0
    %469 = vmatpush1.bf16.xpose.msra.mxu0 0
    %470 = vmatprep.subr.bf16.mxu0 0
    %471 = vmatpush1.bf16.xpose.msra.mxu0 0
    %472 = vmatprep.subr.bf16.mxu0 0
    %473 = vmatpush1.bf16.xpose.msra.mxu0 0
    %474 = vmatprep.subr.bf16.mxu0 0
    %475 = vmatpush1.bf16.xpose.msra.mxu0 0
    %476 = vmatprep.subr.bf16.mxu0 0
    %477 = vmatpush1.bf16.xpose.msra.mxu0 0
    %478 = vmatprep.subr.bf16.mxu0 0
    %479 = vmatpush1.bf16.xpose.msra.mxu0 0
    %480 = vmatprep.subr.bf16.mxu0 0
    %481 = vmatpush1.bf16.xpose.msra.mxu0 0
    %482 = vmatprep.subr.bf16.mxu0 0
    %483 = vmatpush1.bf16.xpose.msra.mxu0 0
    %484 = vmatprep.subr.bf16.mxu0 0
    %485 = vmatpush1.bf16.xpose.msra.mxu0 0
    %486 = vmatprep.subr.bf16.mxu0 0
    %487 = vmatpush1.bf16.xpose.msra.mxu0 0
    %488 = vmatprep.subr.bf16.mxu0 0
    %489 = vmatpush1.bf16.xpose.msra.mxu0 0
    %490 = vmatprep.subr.bf16.mxu0 0
    %491 = vmatpush1.bf16.xpose.msra.mxu0 0
    %492 = vmatprep.subr.bf16.mxu0 0
    %493 = vmatpush1.bf16.xpose.msra.mxu0 0
    %494 = vmatprep.subr.bf16.mxu0 0
    %495 = vmatpush1.bf16.xpose.msra.mxu0 0
    %496 = vmatprep.subr.bf16.mxu0 0
    %497 = vmatpush1.bf16.xpose.msra.mxu0 0
    %498 = vmatprep.mubr.bf16.mxu0 0
    %499 = vmatmul.mubr.bf16.gmra.mrb[0].mxu0 %v461
    %v500 = vpop.f32.mrb[0].mxu0
    %v501 = vadd.f32 0.0, %v500
    %v502 = vpop.f32.mrb[0].mxu0
    %v503 = vpop.f32.mrb[0].mxu0
    %v504 = vpop.f32.mrb[0].mxu0
    %505 = vdwg.mxu0
    %v506 = vsel %vm180, -1e+09, %v451
    %v507 = vsel %vm181, -1e+09, %v501
    %v508 = vsel %vm187, %v506, -inf
    %509 = vmax.xlane.f32.xlu0 %v508
    %v510 = vpop.xlane.xlu0 %509
    %v511 = vsel %vm187, %v507, -inf
    %512 = vmax.xlane.f32.xlu0 %v511
    %v513 = vpop.xlane.xlu0 %512
    %v514 = vsub.f32 %v506, %v510
    %v515 = vsub.f32 %v507, %v513
    %v516 = vmul.f32 %v514, 1.442695
    %v517 = vpow.pop %v516
    %v518 = vmul.f32 %v515, 1.442695
    %v519 = vpow.pop %v518
    %v520 = vsel %vm187, %v517, 0.0
    %521 = vadd.xlane.f32.xlu0 %v520
    %v522 = vpop.xlane.xlu0 %521
    %v523 = vsel %vm187, %v519, 0.0
    %524 = vadd.xlane.f32.xlu0 %v523
    %v525 = vpop.xlane.xlu0 %524
    %v526 = vrcp.pop %v522
    %v527 = vrcp.pop %v525
    %v528 = vmul.f32 %v517, %v526
    %v529 = vmul.f32 %v519, %v527
    %v530 = vpack.c.bf16 %v528, %v528
    %v531 = vpack.c.bf16 %v529, %v529
    %532 = vrot.lane.b32.xlu0 %v182, 56
    %v533 = vpop.permute.xlu0 %532
    %v535 = vsel %vm187, %v530, 0
    %v538 = vsel %vm314, %v533, 0
    %540 = vmatprep.subr.bf16.mxu0 0
    %541 = vmatpush1.bf16.msra.mxu0 %v538
    %542 = vmatprep.subr.bf16.mxu0 0
    %543 = vmatpush1.bf16.msra.mxu0 0
    %544 = vmatprep.subr.bf16.mxu0 0
    %545 = vmatpush1.bf16.msra.mxu0 0
    %546 = vmatprep.subr.bf16.mxu0 0
    %547 = vmatpush1.bf16.msra.mxu0 0
    %548 = vmatprep.subr.bf16.mxu0 0
    %549 = vmatpush1.bf16.msra.mxu0 0
    %550 = vmatprep.subr.bf16.mxu0 0
    %551 = vmatpush1.bf16.msra.mxu0 0
    %552 = vmatprep.subr.bf16.mxu0 0
    %553 = vmatpush1.bf16.msra.mxu0 0
    %554 = vmatprep.subr.bf16.mxu0 0
    %555 = vmatpush1.bf16.msra.mxu0 0
    %556 = vmatprep.subr.bf16.mxu0 0
    %557 = vmatpush1.bf16.msra.mxu0 0
    %558 = vmatprep.subr.bf16.mxu0 0
    %559 = vmatpush1.bf16.msra.mxu0 0
    %560 = vmatprep.subr.bf16.mxu0 0
    %561 = vmatpush1.bf16.msra.mxu0 0
    %562 = vmatprep.subr.bf16.mxu0 0
    %563 = vmatpush1.bf16.msra.mxu0 0
    %564 = vmatprep.subr.bf16.mxu0 0
    %565 = vmatpush1.bf16.msra.mxu0 0
    %566 = vmatprep.subr.bf16.mxu0 0
    %567 = vmatpush1.bf16.msra.mxu0 0
    %568 = vmatprep.subr.bf16.mxu0 0
    %569 = vmatpush1.bf16.msra.mxu0 0
    %570 = vmatprep.subr.bf16.mxu0 0
    %571 = vmatpush1.bf16.msra.mxu0 0
    %572 = vmatprep.mubr.bf16.mxu0 0
    %573 = vmatmul.mubr.bf16.gmra.mrb[0].mxu0 %v535
    %v574 = vpop.f32.mrb[0].mxu0
    %v575 = vadd.f32 0.0, %v574
    %v576 = vpop.f32.mrb[0].mxu0
    %v577 = vpop.f32.mrb[0].mxu0
    %v578 = vpop.f32.mrb[0].mxu0
    %579 = vdwg.mxu0
    %580 = vrot.lane.b32.xlu0 %v183, 56
    %v581 = vpop.permute.xlu0 %580
    %v583 = vsel %vm187, %v531, 0
    %v586 = vsel %vm314, %v581, 0
    %588 = vmatprep.subr.bf16.mxu0 0
    %589 = vmatpush1.bf16.msra.mxu0 %v586
    %590 = vmatprep.subr.bf16.mxu0 0
    %591 = vmatpush1.bf16.msra.mxu0 0
    %592 = vmatprep.subr.bf16.mxu0 0
    %593 = vmatpush1.bf16.msra.mxu0 0
    %594 = vmatprep.subr.bf16.mxu0 0
    %595 = vmatpush1.bf16.msra.mxu0 0
    %596 = vmatprep.subr.bf16.mxu0 0
    %597 = vmatpush1.bf16.msra.mxu0 0
    %598 = vmatprep.subr.bf16.mxu0 0
    %599 = vmatpush1.bf16.msra.mxu0 0
    %600 = vmatprep.subr.bf16.mxu0 0
    %601 = vmatpush1.bf16.msra.mxu0 0
    %602 = vmatprep.subr.bf16.mxu0 0
    %603 = vmatpush1.bf16.msra.mxu0 0
    %604 = vmatprep.subr.bf16.mxu0 0
    %605 = vmatpush1.bf16.msra.mxu0 0
    %606 = vmatprep.subr.bf16.mxu0 0
    %607 = vmatpush1.bf16.msra.mxu0 0
    %608 = vmatprep.subr.bf16.mxu0 0
    %609 = vmatpush1.bf16.msra.mxu0 0
    %610 = vmatprep.subr.bf16.mxu0 0
    %611 = vmatpush1.bf16.msra.mxu0 0
    %612 = vmatprep.subr.bf16.mxu0 0
    %613 = vmatpush1.bf16.msra.mxu0 0
    %614 = vmatprep.subr.bf16.mxu0 0
    %615 = vmatpush1.bf16.msra.mxu0 0
    %616 = vmatprep.subr.bf16.mxu0 0
    %617 = vmatpush1.bf16.msra.mxu0 0
    %618 = vmatprep.subr.bf16.mxu0 0
    %619 = vmatpush1.bf16.msra.mxu0 0
    %620 = vmatprep.mubr.bf16.mxu0 0
    %621 = vmatmul.mubr.bf16.gmra.mrb[0].mxu0 %v583
    %v622 = vpop.f32.mrb[0].mxu0
    %v623 = vadd.f32 0.0, %v622
    %v624 = vpop.f32.mrb[0].mxu0
    %v625 = vpop.f32.mrb[0].mxu0
    %v626 = vpop.f32.mrb[0].mxu0
    %627 = vdwg.mxu0
    %628 = vrot.lane.b32.xlu0 %v182, 112
    %v629 = vpop.permute.xlu0 %628
    %630 = vrot.lane.b32.xlu0 %v182, 80
    %v631 = vpop.permute.xlu0 %630
    %v633 = vsel %vm187, %v629, 0
    %v636 = vsel %vm187, %v631, 0
    %638 = vmatprep.subr.bf16.mxu0 0
    %639 = vmatpush1.bf16.xpose.msra.mxu0 %v636
    %640 = vmatprep.subr.bf16.mxu0 0
    %641 = vmatpush1.bf16.xpose.msra.mxu0 0
    %642 = vmatprep.subr.bf16.mxu0 0
    %643 = vmatpush1.bf16.xpose.msra.mxu0 0
    %644 = vmatprep.subr.bf16.mxu0 0
    %645 = vmatpush1.bf16.xpose.msra.mxu0 0
    %646 = vmatprep.subr.bf16.mxu0 0
    %647 = vmatpush1.bf16.xpose.msra.mxu0 0
    %648 = vmatprep.subr.bf16.mxu0 0
    %649 = vmatpush1.bf16.xpose.msra.mxu0 0
    %650 = vmatprep.subr.bf16.mxu0 0
    %651 = vmatpush1.bf16.xpose.msra.mxu0 0
    %652 = vmatprep.subr.bf16.mxu0 0
    %653 = vmatpush1.bf16.xpose.msra.mxu0 0
    %654 = vmatprep.subr.bf16.mxu0 0
    %655 = vmatpush1.bf16.xpose.msra.mxu0 0
    %656 = vmatprep.subr.bf16.mxu0 0
    %657 = vmatpush1.bf16.xpose.msra.mxu0 0
    %658 = vmatprep.subr.bf16.mxu0 0
    %659 = vmatpush1.bf16.xpose.msra.mxu0 0
    %660 = vmatprep.subr.bf16.mxu0 0
    %661 = vmatpush1.bf16.xpose.msra.mxu0 0
    %662 = vmatprep.subr.bf16.mxu0 0
    %663 = vmatpush1.bf16.xpose.msra.mxu0 0
    %664 = vmatprep.subr.bf16.mxu0 0
    %665 = vmatpush1.bf16.xpose.msra.mxu0 0
    %666 = vmatprep.subr.bf16.mxu0 0
    %667 = vmatpush1.bf16.xpose.msra.mxu0 0
    %668 = vmatprep.subr.bf16.mxu0 0
    %669 = vmatpush1.bf16.xpose.msra.mxu0 0
    %670 = vmatprep.mubr.bf16.mxu0 0
    %671 = vmatmul.mubr.bf16.gmra.mrb[0].mxu0 %v633
    %v672 = vpop.f32.mrb[0].mxu0
    %v673 = vadd.f32 0.0, %v672
    %v674 = vpop.f32.mrb[0].mxu0
    %v675 = vpop.f32.mrb[0].mxu0
    %v676 = vpop.f32.mrb[0].mxu0
    %677 = vdwg.mxu0
    %678 = vrot.lane.b32.xlu0 %v183, 112
    %v679 = vpop.permute.xlu0 %678
    %680 = vrot.lane.b32.xlu0 %v183, 80
    %v681 = vpop.permute.xlu0 %680
    %v683 = vsel %vm187, %v679, 0
    %v686 = vsel %vm187, %v681, 0
    %688 = vmatprep.subr.bf16.mxu0 0
    %689 = vmatpush1.bf16.xpose.msra.mxu0 %v686
    %690 = vmatprep.subr.bf16.mxu0 0
    %691 = vmatpush1.bf16.xpose.msra.mxu0 0
    %692 = vmatprep.subr.bf16.mxu0 0
    %693 = vmatpush1.bf16.xpose.msra.mxu0 0
    %694 = vmatprep.subr.bf16.mxu0 0
    %695 = vmatpush1.bf16.xpose.msra.mxu0 0
    %696 = vmatprep.subr.bf16.mxu0 0
    %697 = vmatpush1.bf16.xpose.msra.mxu0 0
    %698 = vmatprep.subr.bf16.mxu0 0
    %699 = vmatpush1.bf16.xpose.msra.mxu0 0
    %700 = vmatprep.subr.bf16.mxu0 0
    %701 = vmatpush1.bf16.xpose.msra.mxu0 0
    %702 = vmatprep.subr.bf16.mxu0 0
    %703 = vmatpush1.bf16.xpose.msra.mxu0 0
    %704 = vmatprep.subr.bf16.mxu0 0
    %705 = vmatpush1.bf16.xpose.msra.mxu0 0
    %706 = vmatprep.subr.bf16.mxu0 0
    %707 = vmatpush1.bf16.xpose.msra.mxu0 0
    %708 = vmatprep.subr.bf16.mxu0 0
    %709 = vmatpush1.bf16.xpose.msra.mxu0 0
    %710 = vmatprep.subr.bf16.mxu0 0
    %711 = vmatpush1.bf16.xpose.msra.mxu0 0
    %712 = vmatprep.subr.bf16.mxu0 0
    %713 = vmatpush1.bf16.xpose.msra.mxu0 0
    %714 = vmatprep.subr.bf16.mxu0 0
    %715 = vmatpush1.bf16.xpose.msra.mxu0 0
    %716 = vmatprep.subr.bf16.mxu0 0
    %717 = vmatpush1.bf16.xpose.msra.mxu0 0
    %718 = vmatprep.subr.bf16.mxu0 0
    %719 = vmatpush1.bf16.xpose.msra.mxu0 0
    %720 = vmatprep.mubr.bf16.mxu0 0
    %721 = vmatmul.mubr.bf16.gmra.mrb[0].mxu0 %v683
    %v722 = vpop.f32.mrb[0].mxu0
    %v723 = vadd.f32 0.0, %v722
    %v724 = vpop.f32.mrb[0].mxu0
    %v725 = vpop.f32.mrb[0].mxu0
    %v726 = vpop.f32.mrb[0].mxu0
    %727 = vdwg.mxu0
    %v728 = vsel %vm180, -1e+09, %v673
    %v729 = vsel %vm181, -1e+09, %v723
    %v730 = vsel %vm187, %v728, -inf
    %731 = vmax.xlane.f32.xlu0 %v730
    %v732 = vpop.xlane.xlu0 %731
    %v733 = vsel %vm187, %v729, -inf
    %734 = vmax.xlane.f32.xlu0 %v733
    %v735 = vpop.xlane.xlu0 %734
    %v736 = vsub.f32 %v728, %v732
    %v737 = vsub.f32 %v729, %v735
    %v738 = vmul.f32 %v736, 1.442695
    %v739 = vpow.pop %v738
    %v740 = vmul.f32 %v737, 1.442695
    %v741 = vpow.pop %v740
    %v742 = vsel %vm187, %v739, 0.0
    %743 = vadd.xlane.f32.xlu0 %v742
    %v744 = vpop.xlane.xlu0 %743
    %v745 = vsel %vm187, %v741, 0.0
    %746 = vadd.xlane.f32.xlu0 %v745
    %v747 = vpop.xlane.xlu0 %746
    %v748 = vrcp.pop %v744
    %v749 = vrcp.pop %v747
    %v750 = vmul.f32 %v739, %v748
    %v751 = vmul.f32 %v741, %v749
    %v752 = vpack.c.bf16 %v750, %v750
    %v753 = vpack.c.bf16 %v751, %v751
    %754 = vrot.lane.b32.xlu0 %v182, 48
    %v755 = vpop.permute.xlu0 %754
    %v757 = vsel %vm187, %v752, 0
    %v760 = vsel %vm314, %v755, 0
    %762 = vmatprep.subr.bf16.mxu0 0
    %763 = vmatpush1.bf16.msra.mxu0 %v760
    %764 = vmatprep.subr.bf16.mxu0 0
    %765 = vmatpush1.bf16.msra.mxu0 0
    %766 = vmatprep.subr.bf16.mxu0 0
    %767 = vmatpush1.bf16.msra.mxu0 0
    %768 = vmatprep.subr.bf16.mxu0 0
    %769 = vmatpush1.bf16.msra.mxu0 0
    %770 = vmatprep.subr.bf16.mxu0 0
    %771 = vmatpush1.bf16.msra.mxu0 0
    %772 = vmatprep.subr.bf16.mxu0 0
    %773 = vmatpush1.bf16.msra.mxu0 0
    %774 = vmatprep.subr.bf16.mxu0 0
    %775 = vmatpush1.bf16.msra.mxu0 0
    %776 = vmatprep.subr.bf16.mxu0 0
    %777 = vmatpush1.bf16.msra.mxu0 0
    %778 = vmatprep.subr.bf16.mxu0 0
    %779 = vmatpush1.bf16.msra.mxu0 0
    %780 = vmatprep.subr.bf16.mxu0 0
    %781 = vmatpush1.bf16.msra.mxu0 0
    %782 = vmatprep.subr.bf16.mxu0 0
    %783 = vmatpush1.bf16.msra.mxu0 0
    %784 = vmatprep.subr.bf16.mxu0 0
    %785 = vmatpush1.bf16.msra.mxu0 0
    %786 = vmatprep.subr.bf16.mxu0 0
    %787 = vmatpush1.bf16.msra.mxu0 0
    %788 = vmatprep.subr.bf16.mxu0 0
    %789 = vmatpush1.bf16.msra.mxu0 0
    %790 = vmatprep.subr.bf16.mxu0 0
    %791 = vmatpush1.bf16.msra.mxu0 0
    %792 = vmatprep.subr.bf16.mxu0 0
    %793 = vmatpush1.bf16.msra.mxu0 0
    %794 = vmatprep.mubr.bf16.mxu0 0
    %795 = vmatmul.mubr.bf16.gmra.mrb[0].mxu0 %v757
    %v796 = vpop.f32.mrb[0].mxu0
    %v797 = vadd.f32 0.0, %v796
    %v798 = vpop.f32.mrb[0].mxu0
    %v799 = vpop.f32.mrb[0].mxu0
    %v800 = vpop.f32.mrb[0].mxu0
    %801 = vdwg.mxu0
    %802 = vrot.lane.b32.xlu0 %v183, 48
    %v803 = vpop.permute.xlu0 %802
    %v805 = vsel %vm187, %v753, 0
    %v808 = vsel %vm314, %v803, 0
    %810 = vmatprep.subr.bf16.mxu0 0
    %811 = vmatpush1.bf16.msra.mxu0 %v808
    %812 = vmatprep.subr.bf16.mxu0 0
    %813 = vmatpush1.bf16.msra.mxu0 0
    %814 = vmatprep.subr.bf16.mxu0 0
    %815 = vmatpush1.bf16.msra.mxu0 0
    %816 = vmatprep.subr.bf16.mxu0 0
    %817 = vmatpush1.bf16.msra.mxu0 0
    %818 = vmatprep.subr.bf16.mxu0 0
    %819 = vmatpush1.bf16.msra.mxu0 0
    %820 = vmatprep.subr.bf16.mxu0 0
    %821 = vmatpush1.bf16.msra.mxu0 0
    %822 = vmatprep.subr.bf16.mxu0 0
    %823 = vmatpush1.bf16.msra.mxu0 0
    %824 = vmatprep.subr.bf16.mxu0 0
    %825 = vmatpush1.bf16.msra.mxu0 0
    %826 = vmatprep.subr.bf16.mxu0 0
    %827 = vmatpush1.bf16.msra.mxu0 0
    %828 = vmatprep.subr.bf16.mxu0 0
    %829 = vmatpush1.bf16.msra.mxu0 0
    %830 = vmatprep.subr.bf16.mxu0 0
    %831 = vmatpush1.bf16.msra.mxu0 0
    %832 = vmatprep.subr.bf16.mxu0 0
    %833 = vmatpush1.bf16.msra.mxu0 0
    %834 = vmatprep.subr.bf16.mxu0 0
    %835 = vmatpush1.bf16.msra.mxu0 0
    %836 = vmatprep.subr.bf16.mxu0 0
    %837 = vmatpush1.bf16.msra.mxu0 0
    %838 = vmatprep.subr.bf16.mxu0 0
    %839 = vmatpush1.bf16.msra.mxu0 0
    %840 = vmatprep.subr.bf16.mxu0 0
    %841 = vmatpush1.bf16.msra.mxu0 0
    %842 = vmatprep.mubr.bf16.mxu0 0
    %843 = vmatmul.mubr.bf16.gmra.mrb[0].mxu0 %v805
    %v844 = vpop.f32.mrb[0].mxu0
    %v845 = vadd.f32 0.0, %v844
    %v846 = vpop.f32.mrb[0].mxu0
    %v847 = vpop.f32.mrb[0].mxu0
    %v848 = vpop.f32.mrb[0].mxu0
    %849 = vdwg.mxu0
    %850 = vrot.lane.b32.xlu0 %v182, 104
    %v851 = vpop.permute.xlu0 %850
    %852 = vrot.lane.b32.xlu0 %v182, 72
    %v853 = vpop.permute.xlu0 %852
    %v855 = vsel %vm187, %v851, 0
    %v858 = vsel %vm187, %v853, 0
    %860 = vmatprep.subr.bf16.mxu0 0
    %861 = vmatpush1.bf16.xpose.msra.mxu0 %v858
    %862 = vmatprep.subr.bf16.mxu0 0
    %863 = vmatpush1.bf16.xpose.msra.mxu0 0
    %864 = vmatprep.subr.bf16.mxu0 0
    %865 = vmatpush1.bf16.xpose.msra.mxu0 0
    %866 = vmatprep.subr.bf16.mxu0 0
    %867 = vmatpush1.bf16.xpose.msra.mxu0 0
    %868 = vmatprep.subr.bf16.mxu0 0
    %869 = vmatpush1.bf16.xpose.msra.mxu0 0
    %870 = vmatprep.subr.bf16.mxu0 0
    %871 = vmatpush1.bf16.xpose.msra.mxu0 0
    %872 = vmatprep.subr.bf16.mxu0 0
    %873 = vmatpush1.bf16.xpose.msra.mxu0 0
    %874 = vmatprep.subr.bf16.mxu0 0
    %875 = vmatpush1.bf16.xpose.msra.mxu0 0
    %876 = vmatprep.subr.bf16.mxu0 0
    %877 = vmatpush1.bf16.xpose.msra.mxu0 0
    %878 = vmatprep.subr.bf16.mxu0 0
    %879 = vmatpush1.bf16.xpose.msra.mxu0 0
    %880 = vmatprep.subr.bf16.mxu0 0
    %881 = vmatpush1.bf16.xpose.msra.mxu0 0
    %882 = vmatprep.subr.bf16.mxu0 0
    %883 = vmatpush1.bf16.xpose.msra.mxu0 0
    %884 = vmatprep.subr.bf16.mxu0 0
    %885 = vmatpush1.bf16.xpose.msra.mxu0 0
    %886 = vmatprep.subr.bf16.mxu0 0
    %887 = vmatpush1.bf16.xpose.msra.mxu0 0
    %888 = vmatprep.subr.bf16.mxu0 0
    %889 = vmatpush1.bf16.xpose.msra.mxu0 0
    %890 = vmatprep.subr.bf16.mxu0 0
    %891 = vmatpush1.bf16.xpose.msra.mxu0 0
    %892 = vmatprep.mubr.bf16.mxu0 0
    %893 = vmatmul.mubr.bf16.gmra.mrb[0].mxu0 %v855
    %v894 = vpop.f32.mrb[0].mxu0
    %v895 = vadd.f32 0.0, %v894
    %v896 = vpop.f32.mrb[0].mxu0
    %v897 = vpop.f32.mrb[0].mxu0
    %v898 = vpop.f32.mrb[0].mxu0
    %899 = vdwg.mxu0
    %900 = vrot.lane.b32.xlu0 %v183, 104
    %v901 = vpop.permute.xlu0 %900
    %902 = vrot.lane.b32.xlu0 %v183, 72
    %v903 = vpop.permute.xlu0 %902
    %v905 = vsel %vm187, %v901, 0
    %v908 = vsel %vm187, %v903, 0
    %910 = vmatprep.subr.bf16.mxu0 0
    %911 = vmatpush1.bf16.xpose.msra.mxu0 %v908
    %912 = vmatprep.subr.bf16.mxu0 0
    %913 = vmatpush1.bf16.xpose.msra.mxu0 0
    %914 = vmatprep.subr.bf16.mxu0 0
    %915 = vmatpush1.bf16.xpose.msra.mxu0 0
    %916 = vmatprep.subr.bf16.mxu0 0
    %917 = vmatpush1.bf16.xpose.msra.mxu0 0
    %918 = vmatprep.subr.bf16.mxu0 0
    %919 = vmatpush1.bf16.xpose.msra.mxu0 0
    %920 = vmatprep.subr.bf16.mxu0 0
    %921 = vmatpush1.bf16.xpose.msra.mxu0 0
    %922 = vmatprep.subr.bf16.mxu0 0
    %923 = vmatpush1.bf16.xpose.msra.mxu0 0
    %924 = vmatprep.subr.bf16.mxu0 0
    %925 = vmatpush1.bf16.xpose.msra.mxu0 0
    %926 = vmatprep.subr.bf16.mxu0 0
    %927 = vmatpush1.bf16.xpose.msra.mxu0 0
    %928 = vmatprep.subr.bf16.mxu0 0
    %929 = vmatpush1.bf16.xpose.msra.mxu0 0
    %930 = vmatprep.subr.bf16.mxu0 0
    %931 = vmatpush1.bf16.xpose.msra.mxu0 0
    %932 = vmatprep.subr.bf16.mxu0 0
    %933 = vmatpush1.bf16.xpose.msra.mxu0 0
    %934 = vmatprep.subr.bf16.mxu0 0
    %935 = vmatpush1.bf16.xpose.msra.mxu0 0
    %936 = vmatprep.subr.bf16.mxu0 0
    %937 = vmatpush1.bf16.xpose.msra.mxu0 0
    %938 = vmatprep.subr.bf16.mxu0 0
    %939 = vmatpush1.bf16.xpose.msra.mxu0 0
    %940 = vmatprep.subr.bf16.mxu0 0
    %941 = vmatpush1.bf16.xpose.msra.mxu0 0
    %942 = vmatprep.mubr.bf16.mxu0 0
    %943 = vmatmul.mubr.bf16.gmra.mrb[0].mxu0 %v905
    %v944 = vpop.f32.mrb[0].mxu0
    %v945 = vadd.f32 0.0, %v944
    %v946 = vpop.f32.mrb[0].mxu0
    %v947 = vpop.f32.mrb[0].mxu0
    %v948 = vpop.f32.mrb[0].mxu0
    %949 = vdwg.mxu0
    %v950 = vsel %vm180, -1e+09, %v895
    %v951 = vsel %vm181, -1e+09, %v945
    %v952 = vsel %vm187, %v950, -inf
    %953 = vmax.xlane.f32.xlu0 %v952
    %v954 = vpop.xlane.xlu0 %953
    %v955 = vsel %vm187, %v951, -inf
    %956 = vmax.xlane.f32.xlu0 %v955
    %v957 = vpop.xlane.xlu0 %956
    %v958 = vsub.f32 %v950, %v954
    %v959 = vsub.f32 %v951, %v957
    %v960 = vmul.f32 %v958, 1.442695
    %v961 = vpow.pop %v960
    %v962 = vmul.f32 %v959, 1.442695
    %v963 = vpow.pop %v962
    %v964 = vsel %vm187, %v961, 0.0
    %965 = vadd.xlane.f32.xlu0 %v964
    %v966 = vpop.xlane.xlu0 %965
    %v967 = vsel %vm187, %v963, 0.0
    %968 = vadd.xlane.f32.xlu0 %v967
    %v969 = vpop.xlane.xlu0 %968
    %v970 = vrcp.pop %v966
    %v971 = vrcp.pop %v969
    %v972 = vmul.f32 %v961, %v970
    %v973 = vmul.f32 %v963, %v971
    %v974 = vpack.c.bf16 %v972, %v972
    %v975 = vpack.c.bf16 %v973, %v973
    %976 = vrot.lane.b32.xlu0 %v182, 40
    %v977 = vpop.permute.xlu0 %976
    %v979 = vsel %vm187, %v974, 0
    %v982 = vsel %vm314, %v977, 0
    %984 = vmatprep.subr.bf16.mxu0 0
    %985 = vmatpush1.bf16.msra.mxu0 %v982
    %986 = vmatprep.subr.bf16.mxu0 0
    %987 = vmatpush1.bf16.msra.mxu0 0
    %988 = vmatprep.subr.bf16.mxu0 0
    %989 = vmatpush1.bf16.msra.mxu0 0
    %990 = vmatprep.subr.bf16.mxu0 0
    %991 = vmatpush1.bf16.msra.mxu0 0
    %992 = vmatprep.subr.bf16.mxu0 0
    %993 = vmatpush1.bf16.msra.mxu0 0
    %994 = vmatprep.subr.bf16.mxu0 0
    %995 = vmatpush1.bf16.msra.mxu0 0
    %996 = vmatprep.subr.bf16.mxu0 0
    %997 = vmatpush1.bf16.msra.mxu0 0
    %998 = vmatprep.subr.bf16.mxu0 0
    %999 = vmatpush1.bf16.msra.mxu0 0
    %1000 = vmatprep.subr.bf16.mxu0 0
    %1001 = vmatpush1.bf16.msra.mxu0 0
    %1002 = vmatprep.subr.bf16.mxu0 0
    %1003 = vmatpush1.bf16.msra.mxu0 0
    %1004 = vmatprep.subr.bf16.mxu0 0
    %1005 = vmatpush1.bf16.msra.mxu0 0
    %1006 = vmatprep.subr.bf16.mxu0 0
    %1007 = vmatpush1.bf16.msra.mxu0 0
    %1008 = vmatprep.subr.bf16.mxu0 0
    %1009 = vmatpush1.bf16.msra.mxu0 0
    %1010 = vmatprep.subr.bf16.mxu0 0
    %1011 = vmatpush1.bf16.msra.mxu0 0
    %1012 = vmatprep.subr.bf16.mxu0 0
    %1013 = vmatpush1.bf16.msra.mxu0 0
    %1014 = vmatprep.subr.bf16.mxu0 0
    %1015 = vmatpush1.bf16.msra.mxu0 0
    %1016 = vmatprep.mubr.bf16.mxu0 0
    %1017 = vmatmul.mubr.bf16.gmra.mrb[0].mxu0 %v979
    %v1018 = vpop.f32.mrb[0].mxu0
    %v1019 = vadd.f32 0.0, %v1018
    %v1020 = vpop.f32.mrb[0].mxu0
    %v1021 = vpop.f32.mrb[0].mxu0
    %v1022 = vpop.f32.mrb[0].mxu0
    %1023 = vdwg.mxu0
    %1024 = vrot.lane.b32.xlu0 %v183, 40
    %v1025 = vpop.permute.xlu0 %1024
    %v1027 = vsel %vm187, %v975, 0
    %v1030 = vsel %vm314, %v1025, 0
    %1032 = vmatprep.subr.bf16.mxu0 0
    %1033 = vmatpush1.bf16.msra.mxu0 %v1030
    %1034 = vmatprep.subr.bf16.mxu0 0
    %1035 = vmatpush1.bf16.msra.mxu0 0
    %1036 = vmatprep.subr.bf16.mxu0 0
    %1037 = vmatpush1.bf16.msra.mxu0 0
    %1038 = vmatprep.subr.bf16.mxu0 0
    %1039 = vmatpush1.bf16.msra.mxu0 0
    %1040 = vmatprep.subr.bf16.mxu0 0
    %1041 = vmatpush1.bf16.msra.mxu0 0
    %1042 = vmatprep.subr.bf16.mxu0 0
    %1043 = vmatpush1.bf16.msra.mxu0 0
    %1044 = vmatprep.subr.bf16.mxu0 0
    %1045 = vmatpush1.bf16.msra.mxu0 0
    %1046 = vmatprep.subr.bf16.mxu0 0
    %1047 = vmatpush1.bf16.msra.mxu0 0
    %1048 = vmatprep.subr.bf16.mxu0 0
    %1049 = vmatpush1.bf16.msra.mxu0 0
    %1050 = vmatprep.subr.bf16.mxu0 0
    %1051 = vmatpush1.bf16.msra.mxu0 0
    %1052 = vmatprep.subr.bf16.mxu0 0
    %1053 = vmatpush1.bf16.msra.mxu0 0
    %1054 = vmatprep.subr.bf16.mxu0 0
    %1055 = vmatpush1.bf16.msra.mxu0 0
    %1056 = vmatprep.subr.bf16.mxu0 0
    %1057 = vmatpush1.bf16.msra.mxu0 0
    %1058 = vmatprep.subr.bf16.mxu0 0
    %1059 = vmatpush1.bf16.msra.mxu0 0
    %1060 = vmatprep.subr.bf16.mxu0 0
    %1061 = vmatpush1.bf16.msra.mxu0 0
    %1062 = vmatprep.subr.bf16.mxu0 0
    %1063 = vmatpush1.bf16.msra.mxu0 0
    %1064 = vmatprep.mubr.bf16.mxu0 0
    %1065 = vmatmul.mubr.bf16.gmra.mrb[0].mxu0 %v1027
    %v1066 = vpop.f32.mrb[0].mxu0
    %v1067 = vadd.f32 0.0, %v1066
    %v1068 = vpop.f32.mrb[0].mxu0
    %v1069 = vpop.f32.mrb[0].mxu0
    %v1070 = vpop.f32.mrb[0].mxu0
    %1071 = vdwg.mxu0
    %1074 = vrot.lane.b32.xlu0 %v575, 8
    %v1075 = vpop.permute.xlu0 %1074
    %1076 = vrot.lane.b32.xlu0 %v623, 8
    %v1077 = vpop.permute.xlu0 %1076
    %1082 = vrot.lane.b32.xlu0 %v797, 16
    %v1083 = vpop.permute.xlu0 %1082
    %1084 = vrot.lane.b32.xlu0 %v845, 16
    %v1085 = vpop.permute.xlu0 %1084
    %1090 = vrot.lane.b32.xlu0 %v1019, 24
    %v1091 = vpop.permute.xlu0 %1090
    %1092 = vrot.lane.b32.xlu0 %v1067, 24
    %v1093 = vpop.permute.xlu0 %1092
    %v1096 = vsel %vm187, %v353, %v1075
    %v1097 = vsel %vm187, %v401, %v1077
    %vm1098 = vcmask 130048
    %v1099 = vsel %vm1098, %v1096, %v1083
    %v1100 = vsel %vm1098, %v1097, %v1085
    %vm1101 = vcmask 195584
    %v1102 = vsel %vm1101, %v1099, %v1091
    %v1103 = vsel %vm1101, %v1100, %v1093
    %v1104 = vpack.c.bf16 %v1103, %v1102
    %v1105 = vld [vmem:[%s6] sm:$0xf]
    %v1106 = vld [vmem:[%s6 + $0x4] sm:$0xf]
    %v1107 = vld [vmem:[%s6 + $0x8] sm:$0xf]
    %v1108 = vld [vmem:[%s6 + $0xc] sm:$0xf]
    %v1109 = vlaneseq
    %v1110 = vshrl.u32 %v1109, 7
    %v1111 = vsub.s32 0, %v1110
    %v1112 = vrot.slane %v103, %v1111
    %v1117 = vunpack.c.l.b16 %v1105
    %v1118 = vunpack.c.l.b16 %v1106
    %v1119 = vunpack.c.l.b16 %v1107
    %v1120 = vunpack.c.l.b16 %v1108
    %v1121 = vpack.c.b16 %v1118, %v1117
    %v1122 = vpack.c.b16 %v1120, %v1119
    %v1126 = vsel %vm131, %v1104, 0
    %1128 = vmatprep.subr.bf16.mxu0 0
    %1129 = vmatpush1.bf16.msra.mxu0 %v1121
    %1130 = vmatprep.subr.bf16.mxu0 0
    %1131 = vmatpush1.bf16.msra.mxu0 %v1122
    %1132 = vmatprep.subr.bf16.mxu0 0
    %1133 = vmatpush1.bf16.msra.mxu0 0
    %1134 = vmatprep.subr.bf16.mxu0 0
    %1135 = vmatpush1.bf16.msra.mxu0 0
    %1136 = vmatprep.subr.bf16.mxu0 0
    %1137 = vmatpush1.bf16.msra.mxu0 0
    %1138 = vmatprep.subr.bf16.mxu0 0
    %1139 = vmatpush1.bf16.msra.mxu0 0
    %1140 = vmatprep.subr.bf16.mxu0 0
    %1141 = vmatpush1.bf16.msra.mxu0 0
    %1142 = vmatprep.subr.bf16.mxu0 0
    %1143 = vmatpush1.bf16.msra.mxu0 0
    %1144 = vmatprep.subr.bf16.mxu0 0
    %1145 = vmatpush1.bf16.msra.mxu0 0
    %1146 = vmatprep.subr.bf16.mxu0 0
    %1147 = vmatpush1.bf16.msra.mxu0 0
    %1148 = vmatprep.subr.bf16.mxu0 0
    %1149 = vmatpush1.bf16.msra.mxu0 0
    %1150 = vmatprep.subr.bf16.mxu0 0
    %1151 = vmatpush1.bf16.msra.mxu0 0
    %1152 = vmatprep.subr.bf16.mxu0 0
    %1153 = vmatpush1.bf16.msra.mxu0 0
    %1154 = vmatprep.subr.bf16.mxu0 0
    %1155 = vmatpush1.bf16.msra.mxu0 0
    %1156 = vmatprep.subr.bf16.mxu0 0
    %1157 = vmatpush1.bf16.msra.mxu0 0
    %1158 = vmatprep.subr.bf16.mxu0 0
    %1159 = vmatpush1.bf16.msra.mxu0 0
    %1160 = vmatprep.mubr.bf16.mxu0 0
    %1161 = vmatmul.mubr.bf16.gmra.mrb[0].mxu0 %v1126
    %v1162 = vpop.f32.mrb[0].mxu0
    %v1163 = vadd.f32 %v1112, %v1162
    %v1164 = vpop.f32.mrb[0].mxu0
    %v1165 = vpop.f32.mrb[0].mxu0
    %v1166 = vadd.f32 %v1112, %v1165
    %v1167 = vpop.f32.mrb[0].mxu0
    %1168 = vdwg.mxu0
    %v1169 = vadd.f32 %v105, %v1163
    %v1170 = vadd.f32 %v106, %v1166
    %v1171 = vsel %vm131, %v1169, 0.0
    %1172 = vadd.xlane.f32.xlu0 %v1171
    %v1173 = vpop.xlane.xlu0 %1172
    %v1174 = vsel %vm131, %v1170, 0.0
    %1175 = vadd.xlane.f32.xlu0 %v1174
    %v1176 = vpop.xlane.xlu0 %1175
    %v1177 = vrcp.pop 32.0
    %v1178 = vmul.f32 %v1173, %v1177
    %v1179 = vmul.f32 %v1176, %v1177
    %v1180 = vsub.f32 %v1169, %v1178
    %v1181 = vsub.f32 %v1170, %v1179
    %v1182 = vmul.f32 %v1180, %v1180
    %v1183 = vmul.f32 %v1181, %v1181
    %v1184 = vsel %vm131, %v1182, 0.0
    %1185 = vadd.xlane.f32.xlu0 %v1184
    %v1186 = vpop.xlane.xlu0 %1185
    %v1187 = vsel %vm131, %v1183, 0.0
    %1188 = vadd.xlane.f32.xlu0 %v1187
    %v1189 = vpop.xlane.xlu0 %1188
    %v1190 = vmul.f32 %v1186, %v1177
    %v1191 = vmul.f32 %v1189, %v1177
    %v1192 = vadd.f32 %v1190, 1e-05
    %v1193 = vadd.f32 %v1191, 1e-05
    %v1194 = vrsqrt.pop %v1192
    %v1195 = vrsqrt.pop %v1193
    %v1196 = vmul.f32 %v1180, %v1194
    %v1197 = vmul.f32 %v1181, %v1195
    %v1198 = vlaneseq
    %v1199 = vshrl.u32 %v1198, 7
    %v1200 = vsub.s32 1, %v1199
    %v1201 = vrot.slane %v103, %v1200
    %v1202 = vmul.f32 %v1196, %v1201
    %v1203 = vmul.f32 %v1197, %v1201
    %v1204 = vlaneseq
    %v1205 = vshrl.u32 %v1204, 7
    %v1206 = vsub.s32 2, %v1205
    %v1207 = vrot.slane %v103, %v1206
    %v1208 = vadd.f32 %v1202, %v1207
    %v1209 = vadd.f32 %v1203, %v1207
    %v1210 = vld [vmem:[%s1] sm:$0xff]
    %v1211 = vld [vmem:[%s1 + $0x8] sm:$0xff]
    %v1212 = vpack.c.bf16 %v1209, %v1208
    %v1213 = vld [vmem:[%s7] sm:$0xf]
    %v1214 = vld [vmem:[%s7 + $0x4] sm:$0xf]
    %v1215 = vld [vmem:[%s7 + $0x8] sm:$0xf]
    %v1216 = vld [vmem:[%s7 + $0xc] sm:$0xf]
    %v1217 = vlaneseq
    %v1218 = vshrl.u32 %v1217, 7
    %v1219 = vsub.s32 3, %v1218
    %v1220 = vrot.slane %v103, %v1219
    %v1225 = vunpack.c.l.b16 %v1213
    %v1226 = vunpack.c.l.b16 %v1214
    %v1227 = vunpack.c.l.b16 %v1215
    %v1228 = vunpack.c.l.b16 %v1216
    %v1229 = vpack.c.b16 %v1226, %v1225
    %v1230 = vpack.c.b16 %v1228, %v1227
    %v1234 = vsel %vm131, %v1212, 0
    %1236 = vmatprep.subr.bf16.mxu0 0
    %1237 = vmatpush1.bf16.msra.mxu0 %v1229
    %1238 = vmatprep.subr.bf16.mxu0 0
    %1239 = vmatpush1.bf16.msra.mxu0 %v1230
    %1240 = vmatprep.subr.bf16.mxu0 0
    %1241 = vmatpush1.bf16.msra.mxu0 0
    %1242 = vmatprep.subr.bf16.mxu0 0
    %1243 = vmatpush1.bf16.msra.mxu0 0
    %1244 = vmatprep.subr.bf16.mxu0 0
    %1245 = vmatpush1.bf16.msra.mxu0 0
    %1246 = vmatprep.subr.bf16.mxu0 0
    %1247 = vmatpush1.bf16.msra.mxu0 0
    %1248 = vmatprep.subr.bf16.mxu0 0
    %1249 = vmatpush1.bf16.msra.mxu0 0
    %1250 = vmatprep.subr.bf16.mxu0 0
    %1251 = vmatpush1.bf16.msra.mxu0 0
    %1252 = vmatprep.subr.bf16.mxu0 0
    %1253 = vmatpush1.bf16.msra.mxu0 0
    %1254 = vmatprep.subr.bf16.mxu0 0
    %1255 = vmatpush1.bf16.msra.mxu0 0
    %1256 = vmatprep.subr.bf16.mxu0 0
    %1257 = vmatpush1.bf16.msra.mxu0 0
    %1258 = vmatprep.subr.bf16.mxu0 0
    %1259 = vmatpush1.bf16.msra.mxu0 0
    %1260 = vmatprep.subr.bf16.mxu0 0
    %1261 = vmatpush1.bf16.msra.mxu0 0
    %1262 = vmatprep.subr.bf16.mxu0 0
    %1263 = vmatpush1.bf16.msra.mxu0 0
    %1264 = vmatprep.subr.bf16.mxu0 0
    %1265 = vmatpush1.bf16.msra.mxu0 0
    %1266 = vmatprep.subr.bf16.mxu0 0
    %1267 = vmatpush1.bf16.msra.mxu0 0
    %1268 = vmatprep.mubr.bf16.mxu0 0
    %1269 = vmatmul.mubr.bf16.gmra.mrb[0].mxu0 %v1234
    %v1270 = vpop.f32.mrb[0].mxu0
    %v1271 = vadd.f32 %v1220, %v1270
    %v1272 = vpop.f32.mrb[0].mxu0
    %v1273 = vpop.f32.mrb[0].mxu0
    %v1274 = vadd.f32 %v1220, %v1273
    %v1275 = vpop.f32.mrb[0].mxu0
    %1276 = vdwg.mxu0
    %v1277 = vpack.c.bf16 %v1211, %v1210
    %v1278 = vld [vmem:[#allocation5] sm:$0xf]
    %v1279 = vld [vmem:[#allocation5 + $0x4] sm:$0xf]
    %v1280 = vld [vmem:[%s9] sm:$0x1]
    %v1282 = vlaneseq
    %v1283 = vshrl.u32 %v1282, 7
    %v1284 = vsub.s32 0, %v1283
    %v1285 = vrot.slane %v1280, %v1284
    %v1289 = vunpack.c.l.b16 %v1278
    %v1290 = vunpack.c.l.b16 %v1279
    %v1291 = vpack.c.b16 %v1290, %v1289
    %v1294 = vsel %vm1098, %v1277, 0
    %1296 = vmatprep.subr.bf16.mxu0 0
    %1297 = vmatpush1.bf16.msra.mxu0 %v1291
    %1298 = vmatprep.subr.bf16.mxu0 0
    %1299 = vmatpush1.bf16.msra.mxu0 0
    %1300 = vmatprep.subr.bf16.mxu0 0
    %1301 = vmatpush1.bf16.msra.mxu0 0
    %1302 = vmatprep.subr.bf16.mxu0 0
    %1303 = vmatpush1.bf16.msra.mxu0 0
    %1304 = vmatprep.subr.bf16.mxu0 0
    %1305 = vmatpush1.bf16.msra.mxu0 0
    %1306 = vmatprep.subr.bf16.mxu0 0
    %1307 = vmatpush1.bf16.msra.mxu0 0
    %1308 = vmatprep.subr.bf16.mxu0 0
    %1309 = vmatpush1.bf16.msra.mxu0 0
    %1310 = vmatprep.subr.bf16.mxu0 0
    %1311 = vmatpush1.bf16.msra.mxu0 0
    %1312 = vmatprep.subr.bf16.mxu0 0
    %1313 = vmatpush1.bf16.msra.mxu0 0
    %1314 = vmatprep.subr.bf16.mxu0 0
    %1315 = vmatpush1.bf16.msra.mxu0 0
    %1316 = vmatprep.subr.bf16.mxu0 0
    %1317 = vmatpush1.bf16.msra.mxu0 0
    %1318 = vmatprep.subr.bf16.mxu0 0
    %1319 = vmatpush1.bf16.msra.mxu0 0
    %1320 = vmatprep.subr.bf16.mxu0 0
    %1321 = vmatpush1.bf16.msra.mxu0 0
    %1322 = vmatprep.subr.bf16.mxu0 0
    %1323 = vmatpush1.bf16.msra.mxu0 0
    %1324 = vmatprep.subr.bf16.mxu0 0
    %1325 = vmatpush1.bf16.msra.mxu0 0
    %1326 = vmatprep.subr.bf16.mxu0 0
    %1327 = vmatpush1.bf16.msra.mxu0 0
    %1328 = vmatprep.mubr.bf16.mxu0 0
    %1329 = vmatmul.mubr.bf16.gmra.mrb[0].mxu0 %v1294
    %v1330 = vpop.f32.mrb[0].mxu0
    %v1331 = vadd.f32 %v1285, %v1330
    %v1332 = vpop.f32.mrb[0].mxu0
    %v1333 = vpop.f32.mrb[0].mxu0
    %v1334 = vadd.f32 %v1285, %v1333
    %v1335 = vpop.f32.mrb[0].mxu0
    %1336 = vdwg.mxu0
    %v1337 = vld [vmem:[%s3] sm:$0xf]
    %v1338 = vld [vmem:[%s3 + $0x4] sm:$0xf]
    %v1339 = vunpack.c.l.bf16 %v1337
    %v1340 = vunpack.c.l.bf16 %v1338
    %vm1341 = vcmp.lt.f32.partialorder %v1339, 0.5
    %vm1342 = vcmp.lt.f32.partialorder %v1340, 0.5
    %v1343 = vpack.c.bf16 %v1271, %v1271
    %v1344 = vpack.c.bf16 %v1274, %v1274
    %v1345 = vpack.c.bf16 %v1331, %v1331
    %v1346 = vpack.c.bf16 %v1334, %v1334
    %v1348 = vsel %vm187, %v1343, 0
    %v1351 = vsel %vm187, %v1345, 0
    %1353 = vmatprep.subr.bf16.mxu0 0
    %1354 = vmatpush1.bf16.xpose.msra.mxu0 %v1351
    %1355 = vmatprep.subr.bf16.mxu0 0
    %1356 = vmatpush1.bf16.xpose.msra.mxu0 0
    %1357 = vmatprep.subr.bf16.mxu0 0
    %1358 = vmatpush1.bf16.xpose.msra.mxu0 0
    %1359 = vmatprep.subr.bf16.mxu0 0
    %1360 = vmatpush1.bf16.xpose.msra.mxu0 0
    %1361 = vmatprep.subr.bf16.mxu0 0
    %1362 = vmatpush1.bf16.xpose.msra.mxu0 0
    %1363 = vmatprep.subr.bf16.mxu0 0
    %1364 = vmatpush1.bf16.xpose.msra.mxu0 0
    %1365 = vmatprep.subr.bf16.mxu0 0
    %1366 = vmatpush1.bf16.xpose.msra.mxu0 0
    %1367 = vmatprep.subr.bf16.mxu0 0
    %1368 = vmatpush1.bf16.xpose.msra.mxu0 0
    %1369 = vmatprep.subr.bf16.mxu0 0
    %1370 = vmatpush1.bf16.xpose.msra.mxu0 0
    %1371 = vmatprep.subr.bf16.mxu0 0
    %1372 = vmatpush1.bf16.xpose.msra.mxu0 0
    %1373 = vmatprep.subr.bf16.mxu0 0
    %1374 = vmatpush1.bf16.xpose.msra.mxu0 0
    %1375 = vmatprep.subr.bf16.mxu0 0
    %1376 = vmatpush1.bf16.xpose.msra.mxu0 0
    %1377 = vmatprep.subr.bf16.mxu0 0
    %1378 = vmatpush1.bf16.xpose.msra.mxu0 0
    %1379 = vmatprep.subr.bf16.mxu0 0
    %1380 = vmatpush1.bf16.xpose.msra.mxu0 0
    %1381 = vmatprep.subr.bf16.mxu0 0
    %1382 = vmatpush1.bf16.xpose.msra.mxu0 0
    %1383 = vmatprep.subr.bf16.mxu0 0
    %1384 = vmatpush1.bf16.xpose.msra.mxu0 0
    %1385 = vmatprep.mubr.bf16.mxu0 0
    %1386 = vmatmul.mubr.bf16.gmra.mrb[0].mxu0 %v1348
    %v1387 = vpop.f32.mrb[0].mxu0
    %v1388 = vadd.f32 0.0, %v1387
    %v1389 = vpop.f32.mrb[0].mxu0
    %v1390 = vpop.f32.mrb[0].mxu0
    %v1391 = vpop.f32.mrb[0].mxu0
    %1392 = vdwg.mxu0
    %v1394 = vsel %vm187, %v1344, 0
    %v1397 = vsel %vm187, %v1346, 0
    %1399 = vmatprep.subr.bf16.mxu0 0
    %1400 = vmatpush1.bf16.xpose.msra.mxu0 %v1397
    %1401 = vmatprep.subr.bf16.mxu0 0
    %1402 = vmatpush1.bf16.xpose.msra.mxu0 0
    %1403 = vmatprep.subr.bf16.mxu0 0
    %1404 = vmatpush1.bf16.xpose.msra.mxu0 0
    %1405 = vmatprep.subr.bf16.mxu0 0
    %1406 = vmatpush1.bf16.xpose.msra.mxu0 0
    %1407 = vmatprep.subr.bf16.mxu0 0
    %1408 = vmatpush1.bf16.xpose.msra.mxu0 0
    %1409 = vmatprep.subr.bf16.mxu0 0
    %1410 = vmatpush1.bf16.xpose.msra.mxu0 0
    %1411 = vmatprep.subr.bf16.mxu0 0
    %1412 = vmatpush1.bf16.xpose.msra.mxu0 0
    %1413 = vmatprep.subr.bf16.mxu0 0
    %1414 = vmatpush1.bf16.xpose.msra.mxu0 0
    %1415 = vmatprep.subr.bf16.mxu0 0
    %1416 = vmatpush1.bf16.xpose.msra.mxu0 0
    %1417 = vmatprep.subr.bf16.mxu0 0
    %1418 = vmatpush1.bf16.xpose.msra.mxu0 0
    %1419 = vmatprep.subr.bf16.mxu0 0
    %1420 = vmatpush1.bf16.xpose.msra.mxu0 0
    %1421 = vmatprep.subr.bf16.mxu0 0
    %1422 = vmatpush1.bf16.xpose.msra.mxu0 0
    %1423 = vmatprep.subr.bf16.mxu0 0
    %1424 = vmatpush1.bf16.xpose.msra.mxu0 0
    %1425 = vmatprep.subr.bf16.mxu0 0
    %1426 = vmatpush1.bf16.xpose.msra.mxu0 0
    %1427 = vmatprep.subr.bf16.mxu0 0
    %1428 = vmatpush1.bf16.xpose.msra.mxu0 0
    %1429 = vmatprep.subr.bf16.mxu0 0
    %1430 = vmatpush1.bf16.xpose.msra.mxu0 0
    %1431 = vmatprep.mubr.bf16.mxu0 0
    %1432 = vmatmul.mubr.bf16.gmra.mrb[0].mxu0 %v1394
    %v1433 = vpop.f32.mrb[0].mxu0
    %v1434 = vadd.f32 0.0, %v1433
    %v1435 = vpop.f32.mrb[0].mxu0
    %v1436 = vpop.f32.mrb[0].mxu0
    %v1437 = vpop.f32.mrb[0].mxu0
    %1438 = vdwg.mxu0
    %v1439 = vsel %vm1341, -1e+09, %v1388
    %v1440 = vsel %vm1342, -1e+09, %v1434
    %v1441 = vsel %vm187, %v1439, -inf
    %1442 = vmax.xlane.f32.xlu0 %v1441
    %v1443 = vpop.xlane.xlu0 %1442
    %v1444 = vsel %vm187, %v1440, -inf
    %1445 = vmax.xlane.f32.xlu0 %v1444
    %v1446 = vpop.xlane.xlu0 %1445
    %v1447 = vsub.f32 %v1439, %v1443
    %v1448 = vsub.f32 %v1440, %v1446
    %v1449 = vmul.f32 %v1447, 1.442695
    %v1450 = vpow.pop %v1449
    %v1451 = vmul.f32 %v1448, 1.442695
    %v1452 = vpow.pop %v1451
    %v1453 = vsel %vm187, %v1450, 0.0
    %1454 = vadd.xlane.f32.xlu0 %v1453
    %v1455 = vpop.xlane.xlu0 %1454
    %v1456 = vsel %vm187, %v1452, 0.0
    %1457 = vadd.xlane.f32.xlu0 %v1456
    %v1458 = vpop.xlane.xlu0 %1457
    %v1459 = vrcp.pop %v1455
    %v1460 = vrcp.pop %v1458
    %v1461 = vmul.f32 %v1450, %v1459
    %v1462 = vmul.f32 %v1452, %v1460
    %v1463 = vpack.c.bf16 %v1461, %v1461
    %v1464 = vpack.c.bf16 %v1462, %v1462
    %1466 = vrot.lane.b32.xlu0 %v1345, 96
    %v1467 = vpop.permute.xlu0 %1466
    %v1469 = vsel %vm187, %v1463, 0
    %v1472 = vsel %vm314, %v1467, 0
    %1474 = vmatprep.subr.bf16.mxu0 0
    %1475 = vmatpush1.bf16.msra.mxu0 %v1472
    %1476 = vmatprep.subr.bf16.mxu0 0
    %1477 = vmatpush1.bf16.msra.mxu0 0
    %1478 = vmatprep.subr.bf16.mxu0 0
    %1479 = vmatpush1.bf16.msra.mxu0 0
    %1480 = vmatprep.subr.bf16.mxu0 0
    %1481 = vmatpush1.bf16.msra.mxu0 0
    %1482 = vmatprep.subr.bf16.mxu0 0
    %1483 = vmatpush1.bf16.msra.mxu0 0
    %1484 = vmatprep.subr.bf16.mxu0 0
    %1485 = vmatpush1.bf16.msra.mxu0 0
    %1486 = vmatprep.subr.bf16.mxu0 0
    %1487 = vmatpush1.bf16.msra.mxu0 0
    %1488 = vmatprep.subr.bf16.mxu0 0
    %1489 = vmatpush1.bf16.msra.mxu0 0
    %1490 = vmatprep.subr.bf16.mxu0 0
    %1491 = vmatpush1.bf16.msra.mxu0 0
    %1492 = vmatprep.subr.bf16.mxu0 0
    %1493 = vmatpush1.bf16.msra.mxu0 0
    %1494 = vmatprep.subr.bf16.mxu0 0
    %1495 = vmatpush1.bf16.msra.mxu0 0
    %1496 = vmatprep.subr.bf16.mxu0 0
    %1497 = vmatpush1.bf16.msra.mxu0 0
    %1498 = vmatprep.subr.bf16.mxu0 0
    %1499 = vmatpush1.bf16.msra.mxu0 0
    %1500 = vmatprep.subr.bf16.mxu0 0
    %1501 = vmatpush1.bf16.msra.mxu0 0
    %1502 = vmatprep.subr.bf16.mxu0 0
    %1503 = vmatpush1.bf16.msra.mxu0 0
    %1504 = vmatprep.subr.bf16.mxu0 0
    %1505 = vmatpush1.bf16.msra.mxu0 0
    %1506 = vmatprep.mubr.bf16.mxu0 0
    %1507 = vmatmul.mubr.bf16.gmra.mrb[0].mxu0 %v1469
    %v1508 = vpop.f32.mrb[0].mxu0
    %v1509 = vadd.f32 0.0, %v1508
    %v1510 = vpop.f32.mrb[0].mxu0
    %v1511 = vpop.f32.mrb[0].mxu0
    %v1512 = vpop.f32.mrb[0].mxu0
    %1513 = vdwg.mxu0
    %1515 = vrot.lane.b32.xlu0 %v1346, 96
    %v1516 = vpop.permute.xlu0 %1515
    %v1518 = vsel %vm187, %v1464, 0
    %v1521 = vsel %vm314, %v1516, 0
    %1523 = vmatprep.subr.bf16.mxu0 0
    %1524 = vmatpush1.bf16.msra.mxu0 %v1521
    %1525 = vmatprep.subr.bf16.mxu0 0
    %1526 = vmatpush1.bf16.msra.mxu0 0
    %1527 = vmatprep.subr.bf16.mxu0 0
    %1528 = vmatpush1.bf16.msra.mxu0 0
    %1529 = vmatprep.subr.bf16.mxu0 0
    %1530 = vmatpush1.bf16.msra.mxu0 0
    %1531 = vmatprep.subr.bf16.mxu0 0
    %1532 = vmatpush1.bf16.msra.mxu0 0
    %1533 = vmatprep.subr.bf16.mxu0 0
    %1534 = vmatpush1.bf16.msra.mxu0 0
    %1535 = vmatprep.subr.bf16.mxu0 0
    %1536 = vmatpush1.bf16.msra.mxu0 0
    %1537 = vmatprep.subr.bf16.mxu0 0
    %1538 = vmatpush1.bf16.msra.mxu0 0
    %1539 = vmatprep.subr.bf16.mxu0 0
    %1540 = vmatpush1.bf16.msra.mxu0 0
    %1541 = vmatprep.subr.bf16.mxu0 0
    %1542 = vmatpush1.bf16.msra.mxu0 0
    %1543 = vmatprep.subr.bf16.mxu0 0
    %1544 = vmatpush1.bf16.msra.mxu0 0
    %1545 = vmatprep.subr.bf16.mxu0 0
    %1546 = vmatpush1.bf16.msra.mxu0 0
    %1547 = vmatprep.subr.bf16.mxu0 0
    %1548 = vmatpush1.bf16.msra.mxu0 0
    %1549 = vmatprep.subr.bf16.mxu0 0
    %1550 = vmatpush1.bf16.msra.mxu0 0
    %1551 = vmatprep.subr.bf16.mxu0 0
    %1552 = vmatpush1.bf16.msra.mxu0 0
    %1553 = vmatprep.subr.bf16.mxu0 0
    %1554 = vmatpush1.bf16.msra.mxu0 0
    %1555 = vmatprep.mubr.bf16.mxu0 0
    %1556 = vmatmul.mubr.bf16.gmra.mrb[0].mxu0 %v1518
    %v1557 = vpop.f32.mrb[0].mxu0
    %v1558 = vadd.f32 0.0, %v1557
    %v1559 = vpop.f32.mrb[0].mxu0
    %v1560 = vpop.f32.mrb[0].mxu0
    %v1561 = vpop.f32.mrb[0].mxu0
    %1562 = vdwg.mxu0
    %1564 = vrot.lane.b32.xlu0 %v1343, 120
    %v1565 = vpop.permute.xlu0 %1564
    %1566 = vrot.lane.b32.xlu0 %v1345, 120
    %v1567 = vpop.permute.xlu0 %1566
    %v1569 = vsel %vm187, %v1565, 0
    %v1572 = vsel %vm187, %v1567, 0
    %1574 = vmatprep.subr.bf16.mxu0 0
    %1575 = vmatpush1.bf16.xpose.msra.mxu0 %v1572
    %1576 = vmatprep.subr.bf16.mxu0 0
    %1577 = vmatpush1.bf16.xpose.msra.mxu0 0
    %1578 = vmatprep.subr.bf16.mxu0 0
    %1579 = vmatpush1.bf16.xpose.msra.mxu0 0
    %1580 = vmatprep.subr.bf16.mxu0 0
    %1581 = vmatpush1.bf16.xpose.msra.mxu0 0
    %1582 = vmatprep.subr.bf16.mxu0 0
    %1583 = vmatpush1.bf16.xpose.msra.mxu0 0
    %1584 = vmatprep.subr.bf16.mxu0 0
    %1585 = vmatpush1.bf16.xpose.msra.mxu0 0
    %1586 = vmatprep.subr.bf16.mxu0 0
    %1587 = vmatpush1.bf16.xpose.msra.mxu0 0
    %1588 = vmatprep.subr.bf16.mxu0 0
    %1589 = vmatpush1.bf16.xpose.msra.mxu0 0
    %1590 = vmatprep.subr.bf16.mxu0 0
    %1591 = vmatpush1.bf16.xpose.msra.mxu0 0
    %1592 = vmatprep.subr.bf16.mxu0 0
    %1593 = vmatpush1.bf16.xpose.msra.mxu0 0
    %1594 = vmatprep.subr.bf16.mxu0 0
    %1595 = vmatpush1.bf16.xpose.msra.mxu0 0
    %1596 = vmatprep.subr.bf16.mxu0 0
    %1597 = vmatpush1.bf16.xpose.msra.mxu0 0
    %1598 = vmatprep.subr.bf16.mxu0 0
    %1599 = vmatpush1.bf16.xpose.msra.mxu0 0
    %1600 = vmatprep.subr.bf16.mxu0 0
    %1601 = vmatpush1.bf16.xpose.msra.mxu0 0
    %1602 = vmatprep.subr.bf16.mxu0 0
    %1603 = vmatpush1.bf16.xpose.msra.mxu0 0
    %1604 = vmatprep.subr.bf16.mxu0 0
    %1605 = vmatpush1.bf16.xpose.msra.mxu0 0
    %1606 = vmatprep.mubr.bf16.mxu0 0
    %1607 = vmatmul.mubr.bf16.gmra.mrb[0].mxu0 %v1569
    %v1608 = vpop.f32.mrb[0].mxu0
    %v1609 = vadd.f32 0.0, %v1608
    %v1610 = vpop.f32.mrb[0].mxu0
    %v1611 = vpop.f32.mrb[0].mxu0
    %v1612 = vpop.f32.mrb[0].mxu0
    %1613 = vdwg.mxu0
    %1615 = vrot.lane.b32.xlu0 %v1344, 120
    %v1616 = vpop.permute.xlu0 %1615
    %1617 = vrot.lane.b32.xlu0 %v1346, 120
    %v1618 = vpop.permute.xlu0 %1617
    %v1620 = vsel %vm187, %v1616, 0
    %v1623 = vsel %vm187, %v1618, 0
    %1625 = vmatprep.subr.bf16.mxu0 0
    %1626 = vmatpush1.bf16.xpose.msra.mxu0 %v1623
    %1627 = vmatprep.subr.bf16.mxu0 0
    %1628 = vmatpush1.bf16.xpose.msra.mxu0 0
    %1629 = vmatprep.subr.bf16.mxu0 0
    %1630 = vmatpush1.bf16.xpose.msra.mxu0 0
    %1631 = vmatprep.subr.bf16.mxu0 0
    %1632 = vmatpush1.bf16.xpose.msra.mxu0 0
    %1633 = vmatprep.subr.bf16.mxu0 0
    %1634 = vmatpush1.bf16.xpose.msra.mxu0 0
    %1635 = vmatprep.subr.bf16.mxu0 0
    %1636 = vmatpush1.bf16.xpose.msra.mxu0 0
    %1637 = vmatprep.subr.bf16.mxu0 0
    %1638 = vmatpush1.bf16.xpose.msra.mxu0 0
    %1639 = vmatprep.subr.bf16.mxu0 0
    %1640 = vmatpush1.bf16.xpose.msra.mxu0 0
    %1641 = vmatprep.subr.bf16.mxu0 0
    %1642 = vmatpush1.bf16.xpose.msra.mxu0 0
    %1643 = vmatprep.subr.bf16.mxu0 0
    %1644 = vmatpush1.bf16.xpose.msra.mxu0 0
    %1645 = vmatprep.subr.bf16.mxu0 0
    %1646 = vmatpush1.bf16.xpose.msra.mxu0 0
    %1647 = vmatprep.subr.bf16.mxu0 0
    %1648 = vmatpush1.bf16.xpose.msra.mxu0 0
    %1649 = vmatprep.subr.bf16.mxu0 0
    %1650 = vmatpush1.bf16.xpose.msra.mxu0 0
    %1651 = vmatprep.subr.bf16.mxu0 0
    %1652 = vmatpush1.bf16.xpose.msra.mxu0 0
    %1653 = vmatprep.subr.bf16.mxu0 0
    %1654 = vmatpush1.bf16.xpose.msra.mxu0 0
    %1655 = vmatprep.subr.bf16.mxu0 0
    %1656 = vmatpush1.bf16.xpose.msra.mxu0 0
    %1657 = vmatprep.mubr.bf16.mxu0 0
    %1658 = vmatmul.mubr.bf16.gmra.mrb[0].mxu0 %v1620
    %v1659 = vpop.f32.mrb[0].mxu0
    %v1660 = vadd.f32 0.0, %v1659
    %v1661 = vpop.f32.mrb[0].mxu0
    %v1662 = vpop.f32.mrb[0].mxu0
    %v1663 = vpop.f32.mrb[0].mxu0
    %1664 = vdwg.mxu0
    %v1665 = vsel %vm1341, -1e+09, %v1609
    %v1666 = vsel %vm1342, -1e+09, %v1660
    %v1667 = vsel %vm187, %v1665, -inf
    %1668 = vmax.xlane.f32.xlu0 %v1667
    %v1669 = vpop.xlane.xlu0 %1668
    %v1670 = vsel %vm187, %v1666, -inf
    %1671 = vmax.xlane.f32.xlu0 %v1670
    %v1672 = vpop.xlane.xlu0 %1671
    %v1673 = vsub.f32 %v1665, %v1669
    %v1674 = vsub.f32 %v1666, %v1672
    %v1675 = vmul.f32 %v1673, 1.442695
    %v1676 = vpow.pop %v1675
    %v1677 = vmul.f32 %v1674, 1.442695
    %v1678 = vpow.pop %v1677
    %v1679 = vsel %vm187, %v1676, 0.0
    %1680 = vadd.xlane.f32.xlu0 %v1679
    %v1681 = vpop.xlane.xlu0 %1680
    %v1682 = vsel %vm187, %v1678, 0.0
    %1683 = vadd.xlane.f32.xlu0 %v1682
    %v1684 = vpop.xlane.xlu0 %1683
    %v1685 = vrcp.pop %v1681
    %v1686 = vrcp.pop %v1684
    %v1687 = vmul.f32 %v1676, %v1685
    %v1688 = vmul.f32 %v1678, %v1686
    %v1689 = vpack.c.bf16 %v1687, %v1687
    %v1690 = vpack.c.bf16 %v1688, %v1688
    %1691 = vrot.lane.b32.xlu0 %v1345, 88
    %v1692 = vpop.permute.xlu0 %1691
    %v1694 = vsel %vm187, %v1689, 0
    %v1697 = vsel %vm314, %v1692, 0
    %1699 = vmatprep.subr.bf16.mxu0 0
    %1700 = vmatpush1.bf16.msra.mxu0 %v1697
    %1701 = vmatprep.subr.bf16.mxu0 0
    %1702 = vmatpush1.bf16.msra.mxu0 0
    %1703 = vmatprep.subr.bf16.mxu0 0
    %1704 = vmatpush1.bf16.msra.mxu0 0
    %1705 = vmatprep.subr.bf16.mxu0 0
    %1706 = vmatpush1.bf16.msra.mxu0 0
    %1707 = vmatprep.subr.bf16.mxu0 0
    %1708 = vmatpush1.bf16.msra.mxu0 0
    %1709 = vmatprep.subr.bf16.mxu0 0
    %1710 = vmatpush1.bf16.msra.mxu0 0
    %1711 = vmatprep.subr.bf16.mxu0 0
    %1712 = vmatpush1.bf16.msra.mxu0 0
    %1713 = vmatprep.subr.bf16.mxu0 0
    %1714 = vmatpush1.bf16.msra.mxu0 0
    %1715 = vmatprep.subr.bf16.mxu0 0
    %1716 = vmatpush1.bf16.msra.mxu0 0
    %1717 = vmatprep.subr.bf16.mxu0 0
    %1718 = vmatpush1.bf16.msra.mxu0 0
    %1719 = vmatprep.subr.bf16.mxu0 0
    %1720 = vmatpush1.bf16.msra.mxu0 0
    %1721 = vmatprep.subr.bf16.mxu0 0
    %1722 = vmatpush1.bf16.msra.mxu0 0
    %1723 = vmatprep.subr.bf16.mxu0 0
    %1724 = vmatpush1.bf16.msra.mxu0 0
    %1725 = vmatprep.subr.bf16.mxu0 0
    %1726 = vmatpush1.bf16.msra.mxu0 0
    %1727 = vmatprep.subr.bf16.mxu0 0
    %1728 = vmatpush1.bf16.msra.mxu0 0
    %1729 = vmatprep.subr.bf16.mxu0 0
    %1730 = vmatpush1.bf16.msra.mxu0 0
    %1731 = vmatprep.mubr.bf16.mxu0 0
    %1732 = vmatmul.mubr.bf16.gmra.mrb[0].mxu0 %v1694
    %v1733 = vpop.f32.mrb[0].mxu0
    %v1734 = vadd.f32 0.0, %v1733
    %v1735 = vpop.f32.mrb[0].mxu0
    %v1736 = vpop.f32.mrb[0].mxu0
    %v1737 = vpop.f32.mrb[0].mxu0
    %1738 = vdwg.mxu0
    %1739 = vrot.lane.b32.xlu0 %v1346, 88
    %v1740 = vpop.permute.xlu0 %1739
    %v1742 = vsel %vm187, %v1690, 0
    %v1745 = vsel %vm314, %v1740, 0
    %1747 = vmatprep.subr.bf16.mxu0 0
    %1748 = vmatpush1.bf16.msra.mxu0 %v1745
    %1749 = vmatprep.subr.bf16.mxu0 0
    %1750 = vmatpush1.bf16.msra.mxu0 0
    %1751 = vmatprep.subr.bf16.mxu0 0
    %1752 = vmatpush1.bf16.msra.mxu0 0
    %1753 = vmatprep.subr.bf16.mxu0 0
    %1754 = vmatpush1.bf16.msra.mxu0 0
    %1755 = vmatprep.subr.bf16.mxu0 0
    %1756 = vmatpush1.bf16.msra.mxu0 0
    %1757 = vmatprep.subr.bf16.mxu0 0
    %1758 = vmatpush1.bf16.msra.mxu0 0
    %1759 = vmatprep.subr.bf16.mxu0 0
    %1760 = vmatpush1.bf16.msra.mxu0 0
    %1761 = vmatprep.subr.bf16.mxu0 0
    %1762 = vmatpush1.bf16.msra.mxu0 0
    %1763 = vmatprep.subr.bf16.mxu0 0
    %1764 = vmatpush1.bf16.msra.mxu0 0
    %1765 = vmatprep.subr.bf16.mxu0 0
    %1766 = vmatpush1.bf16.msra.mxu0 0
    %1767 = vmatprep.subr.bf16.mxu0 0
    %1768 = vmatpush1.bf16.msra.mxu0 0
    %1769 = vmatprep.subr.bf16.mxu0 0
    %1770 = vmatpush1.bf16.msra.mxu0 0
    %1771 = vmatprep.subr.bf16.mxu0 0
    %1772 = vmatpush1.bf16.msra.mxu0 0
    %1773 = vmatprep.subr.bf16.mxu0 0
    %1774 = vmatpush1.bf16.msra.mxu0 0
    %1775 = vmatprep.subr.bf16.mxu0 0
    %1776 = vmatpush1.bf16.msra.mxu0 0
    %1777 = vmatprep.subr.bf16.mxu0 0
    %1778 = vmatpush1.bf16.msra.mxu0 0
    %1779 = vmatprep.mubr.bf16.mxu0 0
    %1780 = vmatmul.mubr.bf16.gmra.mrb[0].mxu0 %v1742
    %v1781 = vpop.f32.mrb[0].mxu0
    %v1782 = vadd.f32 0.0, %v1781
    %v1783 = vpop.f32.mrb[0].mxu0
    %v1784 = vpop.f32.mrb[0].mxu0
    %v1785 = vpop.f32.mrb[0].mxu0
    %1786 = vdwg.mxu0
    %1787 = vrot.lane.b32.xlu0 %v1343, 112
    %v1788 = vpop.permute.xlu0 %1787
    %1789 = vrot.lane.b32.xlu0 %v1345, 112
    %v1790 = vpop.permute.xlu0 %1789
    %v1792 = vsel %vm187, %v1788, 0
    %v1795 = vsel %vm187, %v1790, 0
    %1797 = vmatprep.subr.bf16.mxu0 0
    %1798 = vmatpush1.bf16.xpose.msra.mxu0 %v1795
    %1799 = vmatprep.subr.bf16.mxu0 0
    %1800 = vmatpush1.bf16.xpose.msra.mxu0 0
    %1801 = vmatprep.subr.bf16.mxu0 0
    %1802 = vmatpush1.bf16.xpose.msra.mxu0 0
    %1803 = vmatprep.subr.bf16.mxu0 0
    %1804 = vmatpush1.bf16.xpose.msra.mxu0 0
    %1805 = vmatprep.subr.bf16.mxu0 0
    %1806 = vmatpush1.bf16.xpose.msra.mxu0 0
    %1807 = vmatprep.subr.bf16.mxu0 0
    %1808 = vmatpush1.bf16.xpose.msra.mxu0 0
    %1809 = vmatprep.subr.bf16.mxu0 0
    %1810 = vmatpush1.bf16.xpose.msra.mxu0 0
    %1811 = vmatprep.subr.bf16.mxu0 0
    %1812 = vmatpush1.bf16.xpose.msra.mxu0 0
    %1813 = vmatprep.subr.bf16.mxu0 0
    %1814 = vmatpush1.bf16.xpose.msra.mxu0 0
    %1815 = vmatprep.subr.bf16.mxu0 0
    %1816 = vmatpush1.bf16.xpose.msra.mxu0 0
    %1817 = vmatprep.subr.bf16.mxu0 0
    %1818 = vmatpush1.bf16.xpose.msra.mxu0 0
    %1819 = vmatprep.subr.bf16.mxu0 0
    %1820 = vmatpush1.bf16.xpose.msra.mxu0 0
    %1821 = vmatprep.subr.bf16.mxu0 0
    %1822 = vmatpush1.bf16.xpose.msra.mxu0 0
    %1823 = vmatprep.subr.bf16.mxu0 0
    %1824 = vmatpush1.bf16.xpose.msra.mxu0 0
    %1825 = vmatprep.subr.bf16.mxu0 0
    %1826 = vmatpush1.bf16.xpose.msra.mxu0 0
    %1827 = vmatprep.subr.bf16.mxu0 0
    %1828 = vmatpush1.bf16.xpose.msra.mxu0 0
    %1829 = vmatprep.mubr.bf16.mxu0 0
    %1830 = vmatmul.mubr.bf16.gmra.mrb[0].mxu0 %v1792
    %v1831 = vpop.f32.mrb[0].mxu0
    %v1832 = vadd.f32 0.0, %v1831
    %v1833 = vpop.f32.mrb[0].mxu0
    %v1834 = vpop.f32.mrb[0].mxu0
    %v1835 = vpop.f32.mrb[0].mxu0
    %1836 = vdwg.mxu0
    %1837 = vrot.lane.b32.xlu0 %v1344, 112
    %v1838 = vpop.permute.xlu0 %1837
    %1839 = vrot.lane.b32.xlu0 %v1346, 112
    %v1840 = vpop.permute.xlu0 %1839
    %v1842 = vsel %vm187, %v1838, 0
    %v1845 = vsel %vm187, %v1840, 0
    %1847 = vmatprep.subr.bf16.mxu0 0
    %1848 = vmatpush1.bf16.xpose.msra.mxu0 %v1845
    %1849 = vmatprep.subr.bf16.mxu0 0
    %1850 = vmatpush1.bf16.xpose.msra.mxu0 0
    %1851 = vmatprep.subr.bf16.mxu0 0
    %1852 = vmatpush1.bf16.xpose.msra.mxu0 0
    %1853 = vmatprep.subr.bf16.mxu0 0
    %1854 = vmatpush1.bf16.xpose.msra.mxu0 0
    %1855 = vmatprep.subr.bf16.mxu0 0
    %1856 = vmatpush1.bf16.xpose.msra.mxu0 0
    %1857 = vmatprep.subr.bf16.mxu0 0
    %1858 = vmatpush1.bf16.xpose.msra.mxu0 0
    %1859 = vmatprep.subr.bf16.mxu0 0
    %1860 = vmatpush1.bf16.xpose.msra.mxu0 0
    %1861 = vmatprep.subr.bf16.mxu0 0
    %1862 = vmatpush1.bf16.xpose.msra.mxu0 0
    %1863 = vmatprep.subr.bf16.mxu0 0
    %1864 = vmatpush1.bf16.xpose.msra.mxu0 0
    %1865 = vmatprep.subr.bf16.mxu0 0
    %1866 = vmatpush1.bf16.xpose.msra.mxu0 0
    %1867 = vmatprep.subr.bf16.mxu0 0
    %1868 = vmatpush1.bf16.xpose.msra.mxu0 0
    %1869 = vmatprep.subr.bf16.mxu0 0
    %1870 = vmatpush1.bf16.xpose.msra.mxu0 0
    %1871 = vmatprep.subr.bf16.mxu0 0
    %1872 = vmatpush1.bf16.xpose.msra.mxu0 0
    %1873 = vmatprep.subr.bf16.mxu0 0
    %1874 = vmatpush1.bf16.xpose.msra.mxu0 0
    %1875 = vmatprep.subr.bf16.mxu0 0
    %1876 = vmatpush1.bf16.xpose.msra.mxu0 0
    %1877 = vmatprep.subr.bf16.mxu0 0
    %1878 = vmatpush1.bf16.xpose.msra.mxu0 0
    %1879 = vmatprep.mubr.bf16.mxu0 0
    %1880 = vmatmul.mubr.bf16.gmra.mrb[0].mxu0 %v1842
    %v1881 = vpop.f32.mrb[0].mxu0
    %v1882 = vadd.f32 0.0, %v1881
    %v1883 = vpop.f32.mrb[0].mxu0
    %v1884 = vpop.f32.mrb[0].mxu0
    %v1885 = vpop.f32.mrb[0].mxu0
    %1886 = vdwg.mxu0
    %v1887 = vsel %vm1341, -1e+09, %v1832
    %v1888 = vsel %vm1342, -1e+09, %v1882
    %v1889 = vsel %vm187, %v1887, -inf
    %1890 = vmax.xlane.f32.xlu0 %v1889
    %v1891 = vpop.xlane.xlu0 %1890
    %v1892 = vsel %vm187, %v1888, -inf
    %1893 = vmax.xlane.f32.xlu0 %v1892
    %v1894 = vpop.xlane.xlu0 %1893
    %v1895 = vsub.f32 %v1887, %v1891
    %v1896 = vsub.f32 %v1888, %v1894
    %v1897 = vmul.f32 %v1895, 1.442695
    %v1898 = vpow.pop %v1897
    %v1899 = vmul.f32 %v1896, 1.442695
    %v1900 = vpow.pop %v1899
    %v1901 = vsel %vm187, %v1898, 0.0
    %1902 = vadd.xlane.f32.xlu0 %v1901
    %v1903 = vpop.xlane.xlu0 %1902
    %v1904 = vsel %vm187, %v1900, 0.0
    %1905 = vadd.xlane.f32.xlu0 %v1904
    %v1906 = vpop.xlane.xlu0 %1905
    %v1907 = vrcp.pop %v1903
    %v1908 = vrcp.pop %v1906
    %v1909 = vmul.f32 %v1898, %v1907
    %v1910 = vmul.f32 %v1900, %v1908
    %v1911 = vpack.c.bf16 %v1909, %v1909
    %v1912 = vpack.c.bf16 %v1910, %v1910
    %1913 = vrot.lane.b32.xlu0 %v1345, 80
    %v1914 = vpop.permute.xlu0 %1913
    %v1916 = vsel %vm187, %v1911, 0
    %v1919 = vsel %vm314, %v1914, 0
    %1921 = vmatprep.subr.bf16.mxu0 0
    %1922 = vmatpush1.bf16.msra.mxu0 %v1919
    %1923 = vmatprep.subr.bf16.mxu0 0
    %1924 = vmatpush1.bf16.msra.mxu0 0
    %1925 = vmatprep.subr.bf16.mxu0 0
    %1926 = vmatpush1.bf16.msra.mxu0 0
    %1927 = vmatprep.subr.bf16.mxu0 0
    %1928 = vmatpush1.bf16.msra.mxu0 0
    %1929 = vmatprep.subr.bf16.mxu0 0
    %1930 = vmatpush1.bf16.msra.mxu0 0
    %1931 = vmatprep.subr.bf16.mxu0 0
    %1932 = vmatpush1.bf16.msra.mxu0 0
    %1933 = vmatprep.subr.bf16.mxu0 0
    %1934 = vmatpush1.bf16.msra.mxu0 0
    %1935 = vmatprep.subr.bf16.mxu0 0
    %1936 = vmatpush1.bf16.msra.mxu0 0
    %1937 = vmatprep.subr.bf16.mxu0 0
    %1938 = vmatpush1.bf16.msra.mxu0 0
    %1939 = vmatprep.subr.bf16.mxu0 0
    %1940 = vmatpush1.bf16.msra.mxu0 0
    %1941 = vmatprep.subr.bf16.mxu0 0
    %1942 = vmatpush1.bf16.msra.mxu0 0
    %1943 = vmatprep.subr.bf16.mxu0 0
    %1944 = vmatpush1.bf16.msra.mxu0 0
    %1945 = vmatprep.subr.bf16.mxu0 0
    %1946 = vmatpush1.bf16.msra.mxu0 0
    %1947 = vmatprep.subr.bf16.mxu0 0
    %1948 = vmatpush1.bf16.msra.mxu0 0
    %1949 = vmatprep.subr.bf16.mxu0 0
    %1950 = vmatpush1.bf16.msra.mxu0 0
    %1951 = vmatprep.subr.bf16.mxu0 0
    %1952 = vmatpush1.bf16.msra.mxu0 0
    %1953 = vmatprep.mubr.bf16.mxu0 0
    %1954 = vmatmul.mubr.bf16.gmra.mrb[0].mxu0 %v1916
    %v1955 = vpop.f32.mrb[0].mxu0
    %v1956 = vadd.f32 0.0, %v1955
    %v1957 = vpop.f32.mrb[0].mxu0
    %v1958 = vpop.f32.mrb[0].mxu0
    %v1959 = vpop.f32.mrb[0].mxu0
    %1960 = vdwg.mxu0
    %1961 = vrot.lane.b32.xlu0 %v1346, 80
    %v1962 = vpop.permute.xlu0 %1961
    %v1964 = vsel %vm187, %v1912, 0
    %v1967 = vsel %vm314, %v1962, 0
    %1969 = vmatprep.subr.bf16.mxu0 0
    %1970 = vmatpush1.bf16.msra.mxu0 %v1967
    %1971 = vmatprep.subr.bf16.mxu0 0
    %1972 = vmatpush1.bf16.msra.mxu0 0
    %1973 = vmatprep.subr.bf16.mxu0 0
    %1974 = vmatpush1.bf16.msra.mxu0 0
    %1975 = vmatprep.subr.bf16.mxu0 0
    %1976 = vmatpush1.bf16.msra.mxu0 0
    %1977 = vmatprep.subr.bf16.mxu0 0
    %1978 = vmatpush1.bf16.msra.mxu0 0
    %1979 = vmatprep.subr.bf16.mxu0 0
    %1980 = vmatpush1.bf16.msra.mxu0 0
    %1981 = vmatprep.subr.bf16.mxu0 0
    %1982 = vmatpush1.bf16.msra.mxu0 0
    %1983 = vmatprep.subr.bf16.mxu0 0
    %1984 = vmatpush1.bf16.msra.mxu0 0
    %1985 = vmatprep.subr.bf16.mxu0 0
    %1986 = vmatpush1.bf16.msra.mxu0 0
    %1987 = vmatprep.subr.bf16.mxu0 0
    %1988 = vmatpush1.bf16.msra.mxu0 0
    %1989 = vmatprep.subr.bf16.mxu0 0
    %1990 = vmatpush1.bf16.msra.mxu0 0
    %1991 = vmatprep.subr.bf16.mxu0 0
    %1992 = vmatpush1.bf16.msra.mxu0 0
    %1993 = vmatprep.subr.bf16.mxu0 0
    %1994 = vmatpush1.bf16.msra.mxu0 0
    %1995 = vmatprep.subr.bf16.mxu0 0
    %1996 = vmatpush1.bf16.msra.mxu0 0
    %1997 = vmatprep.subr.bf16.mxu0 0
    %1998 = vmatpush1.bf16.msra.mxu0 0
    %1999 = vmatprep.subr.bf16.mxu0 0
    %2000 = vmatpush1.bf16.msra.mxu0 0
    %2001 = vmatprep.mubr.bf16.mxu0 0
    %2002 = vmatmul.mubr.bf16.gmra.mrb[0].mxu0 %v1964
    %v2003 = vpop.f32.mrb[0].mxu0
    %v2004 = vadd.f32 0.0, %v2003
    %v2005 = vpop.f32.mrb[0].mxu0
    %v2006 = vpop.f32.mrb[0].mxu0
    %v2007 = vpop.f32.mrb[0].mxu0
    %2008 = vdwg.mxu0
    %2009 = vrot.lane.b32.xlu0 %v1343, 104
    %v2010 = vpop.permute.xlu0 %2009
    %2011 = vrot.lane.b32.xlu0 %v1345, 104
    %v2012 = vpop.permute.xlu0 %2011
    %v2014 = vsel %vm187, %v2010, 0
    %v2017 = vsel %vm187, %v2012, 0
    %2019 = vmatprep.subr.bf16.mxu0 0
    %2020 = vmatpush1.bf16.xpose.msra.mxu0 %v2017
    %2021 = vmatprep.subr.bf16.mxu0 0
    %2022 = vmatpush1.bf16.xpose.msra.mxu0 0
    %2023 = vmatprep.subr.bf16.mxu0 0
    %2024 = vmatpush1.bf16.xpose.msra.mxu0 0
    %2025 = vmatprep.subr.bf16.mxu0 0
    %2026 = vmatpush1.bf16.xpose.msra.mxu0 0
    %2027 = vmatprep.subr.bf16.mxu0 0
    %2028 = vmatpush1.bf16.xpose.msra.mxu0 0
    %2029 = vmatprep.subr.bf16.mxu0 0
    %2030 = vmatpush1.bf16.xpose.msra.mxu0 0
    %2031 = vmatprep.subr.bf16.mxu0 0
    %2032 = vmatpush1.bf16.xpose.msra.mxu0 0
    %2033 = vmatprep.subr.bf16.mxu0 0
    %2034 = vmatpush1.bf16.xpose.msra.mxu0 0
    %2035 = vmatprep.subr.bf16.mxu0 0
    %2036 = vmatpush1.bf16.xpose.msra.mxu0 0
    %2037 = vmatprep.subr.bf16.mxu0 0
    %2038 = vmatpush1.bf16.xpose.msra.mxu0 0
    %2039 = vmatprep.subr.bf16.mxu0 0
    %2040 = vmatpush1.bf16.xpose.msra.mxu0 0
    %2041 = vmatprep.subr.bf16.mxu0 0
    %2042 = vmatpush1.bf16.xpose.msra.mxu0 0
    %2043 = vmatprep.subr.bf16.mxu0 0
    %2044 = vmatpush1.bf16.xpose.msra.mxu0 0
    %2045 = vmatprep.subr.bf16.mxu0 0
    %2046 = vmatpush1.bf16.xpose.msra.mxu0 0
    %2047 = vmatprep.subr.bf16.mxu0 0
    %2048 = vmatpush1.bf16.xpose.msra.mxu0 0
    %2049 = vmatprep.subr.bf16.mxu0 0
    %2050 = vmatpush1.bf16.xpose.msra.mxu0 0
    %2051 = vmatprep.mubr.bf16.mxu0 0
    %2052 = vmatmul.mubr.bf16.gmra.mrb[0].mxu0 %v2014
    %v2053 = vpop.f32.mrb[0].mxu0
    %v2054 = vadd.f32 0.0, %v2053
    %v2055 = vpop.f32.mrb[0].mxu0
    %v2056 = vpop.f32.mrb[0].mxu0
    %v2057 = vpop.f32.mrb[0].mxu0
    %2058 = vdwg.mxu0
    %2059 = vrot.lane.b32.xlu0 %v1344, 104
    %v2060 = vpop.permute.xlu0 %2059
    %2061 = vrot.lane.b32.xlu0 %v1346, 104
    %v2062 = vpop.permute.xlu0 %2061
    %v2064 = vsel %vm187, %v2060, 0
    %v2067 = vsel %vm187, %v2062, 0
    %2069 = vmatprep.subr.bf16.mxu0 0
    %2070 = vmatpush1.bf16.xpose.msra.mxu0 %v2067
    %2071 = vmatprep.subr.bf16.mxu0 0
    %2072 = vmatpush1.bf16.xpose.msra.mxu0 0
    %2073 = vmatprep.subr.bf16.mxu0 0
    %2074 = vmatpush1.bf16.xpose.msra.mxu0 0
    %2075 = vmatprep.subr.bf16.mxu0 0
    %2076 = vmatpush1.bf16.xpose.msra.mxu0 0
    %2077 = vmatprep.subr.bf16.mxu0 0
    %2078 = vmatpush1.bf16.xpose.msra.mxu0 0
    %2079 = vmatprep.subr.bf16.mxu0 0
    %2080 = vmatpush1.bf16.xpose.msra.mxu0 0
    %2081 = vmatprep.subr.bf16.mxu0 0
    %2082 = vmatpush1.bf16.xpose.msra.mxu0 0
    %2083 = vmatprep.subr.bf16.mxu0 0
    %2084 = vmatpush1.bf16.xpose.msra.mxu0 0
    %2085 = vmatprep.subr.bf16.mxu0 0
    %2086 = vmatpush1.bf16.xpose.msra.mxu0 0
    %2087 = vmatprep.subr.bf16.mxu0 0
    %2088 = vmatpush1.bf16.xpose.msra.mxu0 0
    %2089 = vmatprep.subr.bf16.mxu0 0
    %2090 = vmatpush1.bf16.xpose.msra.mxu0 0
    %2091 = vmatprep.subr.bf16.mxu0 0
    %2092 = vmatpush1.bf16.xpose.msra.mxu0 0
    %2093 = vmatprep.subr.bf16.mxu0 0
    %2094 = vmatpush1.bf16.xpose.msra.mxu0 0
    %2095 = vmatprep.subr.bf16.mxu0 0
    %2096 = vmatpush1.bf16.xpose.msra.mxu0 0
    %2097 = vmatprep.subr.bf16.mxu0 0
    %2098 = vmatpush1.bf16.xpose.msra.mxu0 0
    %2099 = vmatprep.subr.bf16.mxu0 0
    %2100 = vmatpush1.bf16.xpose.msra.mxu0 0
    %2101 = vmatprep.mubr.bf16.mxu0 0
    %2102 = vmatmul.mubr.bf16.gmra.mrb[0].mxu0 %v2064
    %v2103 = vpop.f32.mrb[0].mxu0
    %v2104 = vadd.f32 0.0, %v2103
    %v2105 = vpop.f32.mrb[0].mxu0
    %v2106 = vpop.f32.mrb[0].mxu0
    %v2107 = vpop.f32.mrb[0].mxu0
    %2108 = vdwg.mxu0
    %v2109 = vsel %vm1341, -1e+09, %v2054
    %v2110 = vsel %vm1342, -1e+09, %v2104
    %v2111 = vsel %vm187, %v2109, -inf
    %2112 = vmax.xlane.f32.xlu0 %v2111
    %v2113 = vpop.xlane.xlu0 %2112
    %v2114 = vsel %vm187, %v2110, -inf
    %2115 = vmax.xlane.f32.xlu0 %v2114
    %v2116 = vpop.xlane.xlu0 %2115
    %v2117 = vsub.f32 %v2109, %v2113
    %v2118 = vsub.f32 %v2110, %v2116
    %v2119 = vmul.f32 %v2117, 1.442695
    %v2120 = vpow.pop %v2119
    %v2121 = vmul.f32 %v2118, 1.442695
    %v2122 = vpow.pop %v2121
    %v2123 = vsel %vm187, %v2120, 0.0
    %2124 = vadd.xlane.f32.xlu0 %v2123
    %v2125 = vpop.xlane.xlu0 %2124
    %v2126 = vsel %vm187, %v2122, 0.0
    %2127 = vadd.xlane.f32.xlu0 %v2126
    %v2128 = vpop.xlane.xlu0 %2127
    %v2129 = vrcp.pop %v2125
    %v2130 = vrcp.pop %v2128
    %v2131 = vmul.f32 %v2120, %v2129
    %v2132 = vmul.f32 %v2122, %v2130
    %v2133 = vpack.c.bf16 %v2131, %v2131
    %v2134 = vpack.c.bf16 %v2132, %v2132
    %2135 = vrot.lane.b32.xlu0 %v1345, 72
    %v2136 = vpop.permute.xlu0 %2135
    %v2138 = vsel %vm187, %v2133, 0
    %v2141 = vsel %vm314, %v2136, 0
    %2143 = vmatprep.subr.bf16.mxu0 0
    %2144 = vmatpush1.bf16.msra.mxu0 %v2141
    %2145 = vmatprep.subr.bf16.mxu0 0
    %2146 = vmatpush1.bf16.msra.mxu0 0
    %2147 = vmatprep.subr.bf16.mxu0 0
    %2148 = vmatpush1.bf16.msra.mxu0 0
    %2149 = vmatprep.subr.bf16.mxu0 0
    %2150 = vmatpush1.bf16.msra.mxu0 0
    %2151 = vmatprep.subr.bf16.mxu0 0
    %2152 = vmatpush1.bf16.msra.mxu0 0
    %2153 = vmatprep.subr.bf16.mxu0 0
    %2154 = vmatpush1.bf16.msra.mxu0 0
    %2155 = vmatprep.subr.bf16.mxu0 0
    %2156 = vmatpush1.bf16.msra.mxu0 0
    %2157 = vmatprep.subr.bf16.mxu0 0
    %2158 = vmatpush1.bf16.msra.mxu0 0
    %2159 = vmatprep.subr.bf16.mxu0 0
    %2160 = vmatpush1.bf16.msra.mxu0 0
    %2161 = vmatprep.subr.bf16.mxu0 0
    %2162 = vmatpush1.bf16.msra.mxu0 0
    %2163 = vmatprep.subr.bf16.mxu0 0
    %2164 = vmatpush1.bf16.msra.mxu0 0
    %2165 = vmatprep.subr.bf16.mxu0 0
    %2166 = vmatpush1.bf16.msra.mxu0 0
    %2167 = vmatprep.subr.bf16.mxu0 0
    %2168 = vmatpush1.bf16.msra.mxu0 0
    %2169 = vmatprep.subr.bf16.mxu0 0
    %2170 = vmatpush1.bf16.msra.mxu0 0
    %2171 = vmatprep.subr.bf16.mxu0 0
    %2172 = vmatpush1.bf16.msra.mxu0 0
    %2173 = vmatprep.subr.bf16.mxu0 0
    %2174 = vmatpush1.bf16.msra.mxu0 0
    %2175 = vmatprep.mubr.bf16.mxu0 0
    %2176 = vmatmul.mubr.bf16.gmra.mrb[0].mxu0 %v2138
    %v2177 = vpop.f32.mrb[0].mxu0
    %v2178 = vadd.f32 0.0, %v2177
    %v2179 = vpop.f32.mrb[0].mxu0
    %v2180 = vpop.f32.mrb[0].mxu0
    %v2181 = vpop.f32.mrb[0].mxu0
    %2182 = vdwg.mxu0
    %2183 = vrot.lane.b32.xlu0 %v1346, 72
    %v2184 = vpop.permute.xlu0 %2183
    %v2186 = vsel %vm187, %v2134, 0
    %v2189 = vsel %vm314, %v2184, 0
    %2191 = vmatprep.subr.bf16.mxu0 0
    %2192 = vmatpush1.bf16.msra.mxu0 %v2189
    %2193 = vmatprep.subr.bf16.mxu0 0
    %2194 = vmatpush1.bf16.msra.mxu0 0
    %2195 = vmatprep.subr.bf16.mxu0 0
    %2196 = vmatpush1.bf16.msra.mxu0 0
    %2197 = vmatprep.subr.bf16.mxu0 0
    %2198 = vmatpush1.bf16.msra.mxu0 0
    %2199 = vmatprep.subr.bf16.mxu0 0
    %2200 = vmatpush1.bf16.msra.mxu0 0
    %2201 = vmatprep.subr.bf16.mxu0 0
    %2202 = vmatpush1.bf16.msra.mxu0 0
    %2203 = vmatprep.subr.bf16.mxu0 0
    %2204 = vmatpush1.bf16.msra.mxu0 0
    %2205 = vmatprep.subr.bf16.mxu0 0
    %2206 = vmatpush1.bf16.msra.mxu0 0
    %2207 = vmatprep.subr.bf16.mxu0 0
    %2208 = vmatpush1.bf16.msra.mxu0 0
    %2209 = vmatprep.subr.bf16.mxu0 0
    %2210 = vmatpush1.bf16.msra.mxu0 0
    %2211 = vmatprep.subr.bf16.mxu0 0
    %2212 = vmatpush1.bf16.msra.mxu0 0
    %2213 = vmatprep.subr.bf16.mxu0 0
    %2214 = vmatpush1.bf16.msra.mxu0 0
    %2215 = vmatprep.subr.bf16.mxu0 0
    %2216 = vmatpush1.bf16.msra.mxu0 0
    %2217 = vmatprep.subr.bf16.mxu0 0
    %2218 = vmatpush1.bf16.msra.mxu0 0
    %2219 = vmatprep.subr.bf16.mxu0 0
    %2220 = vmatpush1.bf16.msra.mxu0 0
    %2221 = vmatprep.subr.bf16.mxu0 0
    %2222 = vmatpush1.bf16.msra.mxu0 0
    %2223 = vmatprep.mubr.bf16.mxu0 0
    %2224 = vmatmul.mubr.bf16.gmra.mrb[0].mxu0 %v2186
    %v2225 = vpop.f32.mrb[0].mxu0
    %v2226 = vadd.f32 0.0, %v2225
    %v2227 = vpop.f32.mrb[0].mxu0
    %v2228 = vpop.f32.mrb[0].mxu0
    %v2229 = vpop.f32.mrb[0].mxu0
    %2230 = vdwg.mxu0
    %2233 = vrot.lane.b32.xlu0 %v1734, 8
    %v2234 = vpop.permute.xlu0 %2233
    %2235 = vrot.lane.b32.xlu0 %v1782, 8
    %v2236 = vpop.permute.xlu0 %2235
    %2241 = vrot.lane.b32.xlu0 %v1956, 16
    %v2242 = vpop.permute.xlu0 %2241
    %2243 = vrot.lane.b32.xlu0 %v2004, 16
    %v2244 = vpop.permute.xlu0 %2243
    %2249 = vrot.lane.b32.xlu0 %v2178, 24
    %v2250 = vpop.permute.xlu0 %2249
    %2251 = vrot.lane.b32.xlu0 %v2226, 24
    %v2252 = vpop.permute.xlu0 %2251
    %v2255 = vsel %vm187, %v1509, %v2234
    %v2256 = vsel %vm187, %v1558, %v2236
    %v2257 = vsel %vm1098, %v2255, %v2242
    %v2258 = vsel %vm1098, %v2256, %v2244
    %v2259 = vsel %vm1101, %v2257, %v2250
    %v2260 = vsel %vm1101, %v2258, %v2252
    %v2261 = vpack.c.bf16 %v2260, %v2259
    %v2262 = vld [vmem:[#allocation7] sm:$0xf]
    %v2263 = vld [vmem:[#allocation7 + $0x4] sm:$0xf]
    %v2264 = vld [vmem:[#allocation7 + $0x8] sm:$0xf]
    %v2265 = vld [vmem:[#allocation7 + $0xc] sm:$0xf]
    %v2266 = vlaneseq
    %v2267 = vshrl.u32 %v2266, 7
    %v2268 = vsub.s32 4, %v2267
    %v2269 = vrot.slane %v103, %v2268
    %v2274 = vunpack.c.l.b16 %v2262
    %v2275 = vunpack.c.l.b16 %v2263
    %v2276 = vunpack.c.l.b16 %v2264
    %v2277 = vunpack.c.l.b16 %v2265
    %v2278 = vpack.c.b16 %v2275, %v2274
    %v2279 = vpack.c.b16 %v2277, %v2276
    %v2283 = vsel %vm131, %v2261, 0
    %2285 = vmatprep.subr.bf16.mxu0 0
    %2286 = vmatpush1.bf16.msra.mxu0 %v2278
    %2287 = vmatprep.subr.bf16.mxu0 0
    %2288 = vmatpush1.bf16.msra.mxu0 %v2279
    %2289 = vmatprep.subr.bf16.mxu0 0
    %2290 = vmatpush1.bf16.msra.mxu0 0
    %2291 = vmatprep.subr.bf16.mxu0 0
    %2292 = vmatpush1.bf16.msra.mxu0 0
    %2293 = vmatprep.subr.bf16.mxu0 0
    %2294 = vmatpush1.bf16.msra.mxu0 0
    %2295 = vmatprep.subr.bf16.mxu0 0
    %2296 = vmatpush1.bf16.msra.mxu0 0
    %2297 = vmatprep.subr.bf16.mxu0 0
    %2298 = vmatpush1.bf16.msra.mxu0 0
    %2299 = vmatprep.subr.bf16.mxu0 0
    %2300 = vmatpush1.bf16.msra.mxu0 0
    %2301 = vmatprep.subr.bf16.mxu0 0
    %2302 = vmatpush1.bf16.msra.mxu0 0
    %2303 = vmatprep.subr.bf16.mxu0 0
    %2304 = vmatpush1.bf16.msra.mxu0 0
    %2305 = vmatprep.subr.bf16.mxu0 0
    %2306 = vmatpush1.bf16.msra.mxu0 0
    %2307 = vmatprep.subr.bf16.mxu0 0
    %2308 = vmatpush1.bf16.msra.mxu0 0
    %2309 = vmatprep.subr.bf16.mxu0 0
    %2310 = vmatpush1.bf16.msra.mxu0 0
    %2311 = vmatprep.subr.bf16.mxu0 0
    %2312 = vmatpush1.bf16.msra.mxu0 0
    %2313 = vmatprep.subr.bf16.mxu0 0
    %2314 = vmatpush1.bf16.msra.mxu0 0
    %2315 = vmatprep.subr.bf16.mxu0 0
    %2316 = vmatpush1.bf16.msra.mxu0 0
    %2317 = vmatprep.mubr.bf16.mxu0 0
    %2318 = vmatmul.mubr.bf16.gmra.mrb[0].mxu0 %v2283
    %v2319 = vpop.f32.mrb[0].mxu0
    %v2320 = vadd.f32 %v2269, %v2319
    %v2321 = vpop.f32.mrb[0].mxu0
    %v2322 = vpop.f32.mrb[0].mxu0
    %v2323 = vadd.f32 %v2269, %v2322
    %v2324 = vpop.f32.mrb[0].mxu0
    %2325 = vdwg.mxu0
    %v2326 = vadd.f32 %v1208, %v2320
    %v2327 = vadd.f32 %v1209, %v2323
    %v2328 = vsel %vm131, %v2326, 0.0
    %2329 = vadd.xlane.f32.xlu0 %v2328
    %v2330 = vpop.xlane.xlu0 %2329
    %v2331 = vsel %vm131, %v2327, 0.0
    %2332 = vadd.xlane.f32.xlu0 %v2331
    %v2333 = vpop.xlane.xlu0 %2332
    %v2334 = vmul.f32 %v2330, %v1177
    %v2335 = vmul.f32 %v2333, %v1177
    %v2336 = vsub.f32 %v2326, %v2334
    %v2337 = vsub.f32 %v2327, %v2335
    %v2338 = vmul.f32 %v2336, %v2336
    %v2339 = vmul.f32 %v2337, %v2337
    %v2340 = vsel %vm131, %v2338, 0.0
    %2341 = vadd.xlane.f32.xlu0 %v2340
    %v2342 = vpop.xlane.xlu0 %2341
    %v2343 = vsel %vm131, %v2339, 0.0
    %2344 = vadd.xlane.f32.xlu0 %v2343
    %v2345 = vpop.xlane.xlu0 %2344
    %v2346 = vmul.f32 %v2342, %v1177
    %v2347 = vmul.f32 %v2345, %v1177
    %v2348 = vadd.f32 %v2346, 1e-05
    %v2349 = vadd.f32 %v2347, 1e-05
    %v2350 = vrsqrt.pop %v2348
    %v2351 = vrsqrt.pop %v2349
    %v2352 = vmul.f32 %v2336, %v2350
    %v2353 = vmul.f32 %v2337, %v2351
    %v2354 = vlaneseq
    %v2355 = vshrl.u32 %v2354, 7
    %v2356 = vsub.s32 5, %v2355
    %v2357 = vrot.slane %v103, %v2356
    %v2358 = vmul.f32 %v2352, %v2357
    %v2359 = vmul.f32 %v2353, %v2357
    %v2360 = vlaneseq
    %v2361 = vshrl.u32 %v2360, 7
    %v2362 = vsub.s32 6, %v2361
    %v2363 = vrot.slane %v103, %v2362
    %v2364 = vadd.f32 %v2358, %v2363
    %v2365 = vadd.f32 %v2359, %v2363
    %v2366 = vpack.c.bf16 %v2365, %v2364
    %v2367 = vld [vmem:[%s11] sm:$0xf]
    %v2368 = vld [vmem:[%s11 + $0x4] sm:$0xf]
    %v2369 = vld [vmem:[%s11 + $0x8] sm:$0xf]
    %v2370 = vld [vmem:[%s11 + $0xc] sm:$0xf]
    %v2371 = vld [vmem:[#allocation8] sm:$0x1]
    %v2373 = vlaneseq
    %v2374 = vshrl.u32 %v2373, 7
    %v2375 = vsub.s32 0, %v2374
    %v2376 = vrot.slane %v2371, %v2375
    %v2382 = vunpack.c.l.b16 %v2367
    %v2383 = vunpack.c.l.b16 %v2368
    %v2384 = vunpack.c.l.b16 %v2369
    %v2385 = vunpack.c.l.b16 %v2370
    %v2386 = vpack.c.b16 %v2383, %v2382
    %v2387 = vpack.c.b16 %v2385, %v2384
    %v2391 = vsel %vm131, %v2366, 0
    %2393 = vmatprep.subr.bf16.mxu0 0
    %2394 = vmatpush1.bf16.msra.mxu0 %v2386
    %2395 = vmatprep.subr.bf16.mxu0 0
    %2396 = vmatpush1.bf16.msra.mxu0 %v2387
    %2397 = vmatprep.subr.bf16.mxu0 0
    %2398 = vmatpush1.bf16.msra.mxu0 0
    %2399 = vmatprep.subr.bf16.mxu0 0
    %2400 = vmatpush1.bf16.msra.mxu0 0
    %2401 = vmatprep.subr.bf16.mxu0 0
    %2402 = vmatpush1.bf16.msra.mxu0 0
    %2403 = vmatprep.subr.bf16.mxu0 0
    %2404 = vmatpush1.bf16.msra.mxu0 0
    %2405 = vmatprep.subr.bf16.mxu0 0
    %2406 = vmatpush1.bf16.msra.mxu0 0
    %2407 = vmatprep.subr.bf16.mxu0 0
    %2408 = vmatpush1.bf16.msra.mxu0 0
    %2409 = vmatprep.subr.bf16.mxu0 0
    %2410 = vmatpush1.bf16.msra.mxu0 0
    %2411 = vmatprep.subr.bf16.mxu0 0
    %2412 = vmatpush1.bf16.msra.mxu0 0
    %2413 = vmatprep.subr.bf16.mxu0 0
    %2414 = vmatpush1.bf16.msra.mxu0 0
    %2415 = vmatprep.subr.bf16.mxu0 0
    %2416 = vmatpush1.bf16.msra.mxu0 0
    %2417 = vmatprep.subr.bf16.mxu0 0
    %2418 = vmatpush1.bf16.msra.mxu0 0
    %2419 = vmatprep.subr.bf16.mxu0 0
    %2420 = vmatpush1.bf16.msra.mxu0 0
    %2421 = vmatprep.subr.bf16.mxu0 0
    %2422 = vmatpush1.bf16.msra.mxu0 0
    %2423 = vmatprep.subr.bf16.mxu0 0
    %2424 = vmatpush1.bf16.msra.mxu0 0
    %2425 = vmatprep.mubr.bf16.mxu0 0
    %2426 = vmatmul.mubr.bf16.gmra.mrb[0].mxu0 %v2391
    %v2427 = vpop.f32.mrb[0].mxu0
    %v2428 = vadd.f32 %v2376, %v2427
    %v2429 = vpop.f32.mrb[0].mxu0
    %v2430 = vpop.f32.mrb[0].mxu0
    %v2431 = vadd.f32 %v2376, %v2430
    %v2432 = vpop.f32.mrb[0].mxu0
    %2433 = vdwg.mxu0
    %v2434 = vmax.f32 %v2428, 0.0
    %v2435 = vmax.f32 %v2431, 0.0
    %v2436 = vpack.c.bf16 %v2435, %v2434
    %v2437 = vld [vmem:[%s13] sm:$0xf]
    %v2438 = vld [vmem:[%s13 + $0x4] sm:$0xf]
    %v2439 = vld [vmem:[%s13 + $0x8] sm:$0xf]
    %v2440 = vld [vmem:[%s13 + $0xc] sm:$0xf]
    %v2441 = vld [vmem:[%s13 + $0x10] sm:$0xf]
    %v2442 = vld [vmem:[%s13 + $0x14] sm:$0xf]
    %v2443 = vld [vmem:[%s13 + $0x18] sm:$0xf]
    %v2444 = vld [vmem:[%s13 + $0x1c] sm:$0xf]
    %v2445 = vlaneseq
    %v2446 = vshrl.u32 %v2445, 7
    %v2447 = vsub.s32 7, %v2446
    %v2448 = vrot.slane %v103, %v2447
    %v2457 = vunpack.c.l.b16 %v2437
    %v2458 = vunpack.c.l.b16 %v2438
    %v2459 = vunpack.c.l.b16 %v2439
    %v2460 = vunpack.c.l.b16 %v2440
    %v2461 = vunpack.c.l.b16 %v2441
    %v2462 = vunpack.c.l.b16 %v2442
    %v2463 = vunpack.c.l.b16 %v2443
    %v2464 = vunpack.c.l.b16 %v2444
    %v2465 = vpack.c.b16 %v2458, %v2457
    %v2466 = vpack.c.b16 %v2460, %v2459
    %v2467 = vpack.c.b16 %v2462, %v2461
    %v2468 = vpack.c.b16 %v2464, %v2463
    %vm2473 = vcmask 523264
    %v2475 = vsel %vm2473, %v2436, 0
    %2477 = vmatprep.subr.bf16.mxu0 0
    %2478 = vmatpush1.bf16.msra.mxu0 %v2465
    %2479 = vmatprep.subr.bf16.mxu0 0
    %2480 = vmatpush1.bf16.msra.mxu0 %v2466
    %2481 = vmatprep.subr.bf16.mxu0 0
    %2482 = vmatpush1.bf16.msra.mxu0 %v2467
    %2483 = vmatprep.subr.bf16.mxu0 0
    %2484 = vmatpush1.bf16.msra.mxu0 %v2468
    %2485 = vmatprep.subr.bf16.mxu0 0
    %2486 = vmatpush1.bf16.msra.mxu0 0
    %2487 = vmatprep.subr.bf16.mxu0 0
    %2488 = vmatpush1.bf16.msra.mxu0 0
    %2489 = vmatprep.subr.bf16.mxu0 0
    %2490 = vmatpush1.bf16.msra.mxu0 0
    %2491 = vmatprep.subr.bf16.mxu0 0
    %2492 = vmatpush1.bf16.msra.mxu0 0
    %2493 = vmatprep.subr.bf16.mxu0 0
    %2494 = vmatpush1.bf16.msra.mxu0 0
    %2495 = vmatprep.subr.bf16.mxu0 0
    %2496 = vmatpush1.bf16.msra.mxu0 0
    %2497 = vmatprep.subr.bf16.mxu0 0
    %2498 = vmatpush1.bf16.msra.mxu0 0
    %2499 = vmatprep.subr.bf16.mxu0 0
    %2500 = vmatpush1.bf16.msra.mxu0 0
    %2501 = vmatprep.subr.bf16.mxu0 0
    %2502 = vmatpush1.bf16.msra.mxu0 0
    %2503 = vmatprep.subr.bf16.mxu0 0
    %2504 = vmatpush1.bf16.msra.mxu0 0
    %2505 = vmatprep.subr.bf16.mxu0 0
    %2506 = vmatpush1.bf16.msra.mxu0 0
    %2507 = vmatprep.subr.bf16.mxu0 0
    %2508 = vmatpush1.bf16.msra.mxu0 0
    %2509 = vmatprep.mubr.bf16.mxu0 0
    %2510 = vmatmul.mubr.bf16.gmra.mrb[0].mxu0 %v2475
    %v2511 = vpop.f32.mrb[0].mxu0
    %v2512 = vadd.f32 %v2448, %v2511
    %v2513 = vpop.f32.mrb[0].mxu0
    %v2514 = vpop.f32.mrb[0].mxu0
    %v2515 = vadd.f32 %v2448, %v2514
    %v2516 = vpop.f32.mrb[0].mxu0
    %2517 = vdwg.mxu0
    %v2518 = vadd.f32 %v2364, %v2512
    %v2519 = vadd.f32 %v2365, %v2515
    %v2520 = vsel %vm131, %v2518, 0.0
    %2521 = vadd.xlane.f32.xlu0 %v2520
    %v2522 = vpop.xlane.xlu0 %2521
    %v2523 = vsel %vm131, %v2519, 0.0
    %2524 = vadd.xlane.f32.xlu0 %v2523
    %v2525 = vpop.xlane.xlu0 %2524
    %v2526 = vmul.f32 %v2522, %v1177
    %v2527 = vmul.f32 %v2525, %v1177
    %v2528 = vsub.f32 %v2518, %v2526
    %v2529 = vsub.f32 %v2519, %v2527
    %v2530 = vmul.f32 %v2528, %v2528
    %v2531 = vmul.f32 %v2529, %v2529
    %v2532 = vsel %vm131, %v2530, 0.0
    %2533 = vadd.xlane.f32.xlu0 %v2532
    %v2534 = vpop.xlane.xlu0 %2533
    %v2535 = vsel %vm131, %v2531, 0.0
    %2536 = vadd.xlane.f32.xlu0 %v2535
    %v2537 = vpop.xlane.xlu0 %2536
    %v2538 = vmul.f32 %v2534, %v1177
    %v2539 = vmul.f32 %v2537, %v1177
    %v2540 = vadd.f32 %v2538, 1e-05
    %v2541 = vadd.f32 %v2539, 1e-05
    %v2542 = vrsqrt.pop %v2540
    %v2543 = vrsqrt.pop %v2541
    %v2544 = vmul.f32 %v2528, %v2542
    %v2545 = vmul.f32 %v2529, %v2543
    %v2546 = vlaneseq
    %v2547 = vshrl.u32 %v2546, 7
    %v2548 = vsub.s32 0, %v2547
    %v2549 = vrot.slane %v104, %v2548
    %v2550 = vmul.f32 %v2544, %v2549
    %v2551 = vmul.f32 %v2545, %v2549
    %v2552 = vlaneseq
    %v2553 = vshrl.u32 %v2552, 7
    %v2554 = vsub.s32 1, %v2553
    %v2555 = vrot.slane %v104, %v2554
    %v2556 = vadd.f32 %v2550, %v2555
    %v2557 = vadd.f32 %v2551, %v2555
    %2558 = vst.msk [vmem:[#allocation10] sm:$0xff] %vm131, %v2556
    %2559 = vst.msk [vmem:[#allocation10 + $0x8] sm:$0xff] %vm131, %v2557
    // Predicated region
    $region78: #{_lambda_.1} parent=1 // pred_check
      _
    $region79: #{_lambda_.1} parent=1 // pred_check_branch
      %2561 = sbr.rel (0) target = $region81
    $region80: #{_lambda_.1} parent=1 // pred_region
      %s2563 = ssub.s32 256, 256
      %2564 = vsyncadd [#allocation4], %s2563
      %s2565 = sshll.u32 [#allocation10], 4
      %s2566 = int_to_ptr.vmem [resolvable:$true] %s2565
      %2571 = dma.vmem_to_hbm [thread:$0]  %s2566, 256, %s15, [#allocation4], 128, 128, 8
    $region81: #{_lambda_.1} parent=1 // pred_fallthru
      _
    // Predicated region
    $region82: #{_lambda_.1} parent=1 // pred_check
      _
    $region83: #{_lambda_.1} parent=1 // pred_check_branch
      %2573 = sbr.rel (0) target = $region85
    $region84: #{_lambda_.1} parent=1 // pred_region
      %2574 = dma.done [#allocation4], 256
    $region85: #{_lambda_.1} parent=1 // pred_fallthru
      _
    %2575 = vsyncpa [#allocation3], 1
    %2576 = vsyncpa [#allocation6], 1
    %2577 = vsyncpa [#allocation9], 1
    %2578 = vsyncpa [#allocation4], 1

</llo_original>
